<compile_context>
chip_gen: v7x
topology: tpu7x:2x2x1
jax: 0.10.0
libtpu: 0.0.40
codegen_flags: <defaults>
</compile_context>

<pallas_src>
import functools

import jax
import jax.numpy as jnp
from jax.experimental import pallas as pl
from jax.experimental.pallas import tpu as pltpu


def _self_attention_kernel(x_ref, gamma_ref, beta_ref,
                           wqkv_ref, bqkv_ref, wout_ref, bout_ref,
                           o_ref, y_ref,
                           *, n_head, eps, compute_dtype, approx_recip):
    """One grid step processes a (B_tile, S, C) batch tile; heads fused inside.

    Blocks:
      x_ref      : (B, S, C)  f32
      gamma/beta : (1, C)     f32            (resident: constant index_map)
      wqkv_ref   : (C, 3C)    compute_dtype  q/k columns pre-scaled by d**-0.25
      bqkv_ref   : (1, 3C)    f32            q/k entries pre-scaled
      wout_ref   : (C, C)     compute_dtype
      bout_ref   : (1, C)     f32
      o_ref      : (B, S, C)  f32
      y_ref      : (S, C)     f32 VMEM scratch (per-head attention outputs)
    """
    bsz, _, cin = x_ref.shape
    d = cin // n_head

    gamma = gamma_ref[...]
    beta = beta_ref[...]
    wqkv = wqkv_ref[...]
    bqkv = bqkv_ref[...]
    wout = wout_ref[...]
    bout = bout_ref[...]

    def one_sample(b, carry):
        x = x_ref[b]                                          # (S, C) f32
        # GroupNorm(1, C): stats over the whole sample.  The full sample is in
        # this block, so statistics are exact; S-tiling would need a two-pass
        # (or Welford) reduction instead.
        mean = jnp.mean(x)
        var = jnp.mean(jnp.square(x - mean))                  # biased variance
        xn = (x - mean) * jax.lax.rsqrt(var + eps)
        xn = (xn * gamma + beta).astype(compute_dtype)

        # Fused qkv projection: one C-deep MXU pass (1x1 conv == linear).
        qkv = jax.lax.dot_general(xn, wqkv, (((1,), (0,)), ((), ())),
                                  preferred_element_type=jnp.float32)
        qkv = qkv + bqkv                                      # (S, 3C) f32

        # Per-head attention.  Channel layout of qkv: [q_h0..q_hH | k_.. | v_..]
        # (matches the PyTorch view([n, 3*H, d, s]) + chunk(3, dim=1)).
        for h in range(n_head):
            q = qkv[:, h * d:(h + 1) * d].astype(compute_dtype)
            k = qkv[:, cin + h * d:cin + (h + 1) * d].astype(compute_dtype)
            v = qkv[:, 2 * cin + h * d:2 * cin + (h + 1) * d].astype(compute_dtype)
            # scores via rhs-transposed dot (MXU native, no explicit transpose)
            s = jax.lax.dot_general(q, k, (((1,), (1,)), ((), ())),
                                    preferred_element_type=jnp.float32)  # (S,S)
            s = s - jnp.max(s, axis=-1, keepdims=True)
            p = jnp.exp(s)
            p = p * pl.reciprocal(jnp.sum(p, axis=-1, keepdims=True),
                                  approx=approx_recip)
            y_ref[:, h * d:(h + 1) * d] = jax.lax.dot_general(
                p.astype(compute_dtype), v, (((1,), (0,)), ((), ())),
                preferred_element_type=jnp.float32)           # (S, d) f32

        # Fused output projection: one C-deep MXU pass, single output store.
        y = y_ref[...].astype(compute_dtype)                  # (S, C)
        out = jax.lax.dot_general(y, wout, (((1,), (0,)), ((), ())),
                                  preferred_element_type=jnp.float32)
        o_ref[b] = (x + out + bout).astype(o_ref.dtype)       # residual + bias
        return carry

    jax.lax.fori_loop(0, bsz, one_sample, 0, unroll=True)


def _pick_batch_tile(n, c, s, budget_bytes=2 << 20, max_tile=8):
    """Largest divisor of n (<= max_tile) whose x+out f32 blocks fit budget."""
    per_sample = 2 * c * s * 4
    bt = max(1, min(n, max_tile, budget_bytes // max(per_sample, 1)))
    while n % bt:
        bt -= 1
    return bt


def _vmem_limit_bytes(b_tile, s, c, compute_dtype):
    """Per-step VMEM budget: double-buffered IO + resident weights + temps."""
    cb = jnp.dtype(compute_dtype).itemsize
    f32b = 4
    io = 2 * 2 * b_tile * s * c * f32b                 # x + out, double-buffered
    weights = 2 * (4 * c * c * cb + 6 * c * f32b)      # Wqkv^T, Wout^T, biases
    scratch = s * c * f32b                             # y buffer
    temps = (s * 3 * c) * (f32b + cb) + 2 * s * s * f32b + s * s * cb \
            + 3 * s * c * cb + 2 * s * c * f32b
    est = io + weights + scratch + temps + (4 << 20)
    try:
        cap = int(pltpu.get_tpu_info().vmem_capacity_bytes) * 3 // 4
    except Exception:
        cap = 48 << 20
    return int(min(max(est, 8 << 20), cap))


def self_attention_1d(x_ncs, gamma, beta, wqkv, bqkv, wout, bout,
                      *, n_head, eps=1e-5, compute_dtype=jnp.bfloat16):
    """SelfAttention1d forward.

    x_ncs : (N, C, S) f32      (PyTorch NCW layout)
    gamma, beta : (C,)         GroupNorm(1, C) affine
    wqkv : (3C, C), bqkv : (3C,)   (qkv_proj Conv1d weight[..., 0] / bias)
    wout : (C, C),  bout : (C,)    (out_proj Conv1d weight[..., 0] / bias)
    Returns (N, C, S) f32.
    """
    N, C, S = x_ncs.shape
    assert C % n_head == 0
    d = C // n_head
    f32 = jnp.float32
    compute_dtype = jnp.dtype(compute_dtype)
    scale = float(d) ** -0.25

    # --- one-time parameter prep (hoist to module init at production scale) --
    # Conv weights transposed to (in, out) for the x @ W form; the d**-0.25
    # softmax scale is folded into the q/k columns and bias entries.
    colscale = jnp.concatenate(
        [jnp.full((2 * C,), scale, f32), jnp.ones((C,), f32)])
    wqkv_t = (wqkv.astype(f32).T * colscale[None, :]).astype(compute_dtype)
    bqkv_s = (bqkv.astype(f32) * colscale).reshape(1, 3 * C)
    wout_t = wout.astype(f32).T.astype(compute_dtype)
    bout_r = bout.astype(f32).reshape(1, C)
    gamma_r = gamma.astype(f32).reshape(1, C)
    beta_r = beta.astype(f32).reshape(1, C)

    # Channels-last inside the kernel (all contractions on the lhs minor dim).
    # TODO(synk): NCW-native kernel would drop these two wrapper transposes.
    x_nsc = jnp.transpose(x_ncs.astype(f32), (0, 2, 1))       # (N, S, C)

    b_tile = _pick_batch_tile(N, C, S)

    kernel = functools.partial(
        _self_attention_kernel, n_head=n_head, eps=float(eps),
        compute_dtype=compute_dtype,
        approx_recip=bool(compute_dtype != jnp.dtype(jnp.float32)))

    io_spec = pl.BlockSpec((b_tile, S, C), lambda i: (i, 0, 0))
    whole = lambda shape: pl.BlockSpec(shape, lambda i: (0,) * len(shape))

    out_nsc = pl.pallas_call(
        kernel,
        out_shape=jax.ShapeDtypeStruct((N, S, C), f32),
        grid_spec=pltpu.PrefetchScalarGridSpec(
            num_scalar_prefetch=0,
            grid=(N // b_tile,),                 # one axis: batch tiles only
            in_specs=[
                io_spec,                         # x tile
                whole((1, C)),                   # gamma   (resident)
                whole((1, C)),                   # beta
                whole((C, 3 * C)),               # Wqkv^T  (resident, pre-scaled)
                whole((1, 3 * C)),               # bqkv    (pre-scaled)
                whole((C, C)),                   # Wout^T  (resident)
                whole((1, C)),                   # bout
            ],
            out_specs=io_spec,
            scratch_shapes=[pltpu.VMEM((S, C), f32)],   # per-head y buffer
        ),
        compiler_params=pltpu.CompilerParams(
            dimension_semantics=("parallel",),   # batch tiles: megacore/2-TC
            vmem_limit_bytes=_vmem_limit_bytes(b_tile, S, C, compute_dtype)),
    )(x_nsc, gamma_r, beta_r, wqkv_t, bqkv_s, wout_t, bout_r)

    return jnp.transpose(out_nsc, (0, 2, 1))                  # back to (N, C, S)


def _reference(x, gamma, beta, wqkv, bqkv, wout, bout, *, n_head, eps=1e-5):
    """Plain-JAX reference mirroring the PyTorch forward (NCW layout)."""
    N, C, S = x.shape
    d = C // n_head
    mean = jnp.mean(x, axis=(1, 2), keepdims=True)
    var = jnp.mean((x - mean) ** 2, axis=(1, 2), keepdims=True)
    xn = (x - mean) / jnp.sqrt(var + eps)
    xn = xn * gamma[None, :, None] + beta[None, :, None]
    qkv = jnp.einsum('oc,ncs->nos', wqkv, xn) + bqkv[None, :, None]   # (N,3C,S)
    qkv = qkv.reshape(N, 3 * n_head, d, S).transpose(0, 1, 3, 2)      # (N,3H,S,d)
    q, k, v = jnp.split(qkv, 3, axis=1)
    scale = d ** (-0.25)
    att = jax.nn.softmax((q * scale) @ (jnp.swapaxes(k, 2, 3) * scale), axis=3)
    y = (att @ v).transpose(0, 1, 3, 2).reshape(N, C, S)
    out = jnp.einsum('oc,ncs->nos', wout, y) + bout[None, :, None]
    return x + out


if __name__ == "__main__":
    N, C, S = 2, 32, 64
    n_head = 4

    key = jax.random.PRNGKey(0)
    k1, k2, k3, k4, k5, k6, k7 = jax.random.split(key, 7)
    x = jax.random.normal(k1, (N, C, S), jnp.float32)
    gamma = 1.0 + 0.1 * jax.random.normal(k2, (C,), jnp.float32)
    beta = 0.1 * jax.random.normal(k3, (C,), jnp.float32)
    wqkv = 0.2 * jax.random.normal(k4, (3 * C, C), jnp.float32)
    bqkv = 0.1 * jax.random.normal(k5, (3 * C,), jnp.float32)
    wout = 0.2 * jax.random.normal(k6, (C, C), jnp.float32)
    bout = 0.1 * jax.random.normal(k7, (C,), jnp.float32)

    ref = _reference(x, gamma, beta, wqkv, bqkv, wout, bout, n_head=n_head)

    # Exact-precision path (f32 everywhere): tight tolerance.
    out_f32 = jax.block_until_ready(
        self_attention_1d(x, gamma, beta, wqkv, bqkv, wout, bout,
                          n_head=n_head, compute_dtype=jnp.float32))
    assert out_f32.shape == (N, C, S)
    err32 = float(jnp.max(jnp.abs(out_f32 - ref)))
    assert jnp.allclose(out_f32, ref, atol=1e-4, rtol=1e-4), err32

    # Default fast path: bf16 MXU operands, f32 statistics / accumulation.
    out_bf16 = jax.block_until_ready(
        self_attention_1d(x, gamma, beta, wqkv, bqkv, wout, bout, n_head=n_head))
    errbf = float(jnp.max(jnp.abs(out_bf16 - ref)))
    assert jnp.allclose(out_bf16, ref, atol=1e-1, rtol=1e-1), errbf

    print("KERNEL_OK")
</pallas_src>

<mosaic_0001>
module attributes {stable_mosaic.version = 11 : i64} {
  func.func @_self_attention_kernel(%arg0: i32, %arg1: memref<2x64x32xf32, #tpu.memory_space<vmem>>, %arg2: memref<1x32xf32, #tpu.memory_space<vmem>>, %arg3: memref<1x32xf32, #tpu.memory_space<vmem>>, %arg4: memref<32x96xf32, #tpu.memory_space<vmem>>, %arg5: memref<1x96xf32, #tpu.memory_space<vmem>>, %arg6: memref<32x32xf32, #tpu.memory_space<vmem>>, %arg7: memref<1x32xf32, #tpu.memory_space<vmem>>, %arg8: memref<2x64x32xf32, #tpu.memory_space<vmem>>, %arg9: memref<64x32xf32, #tpu.memory_space<vmem>>) attributes {dimension_semantics = [#tpu.dimension_semantics<parallel>], iteration_bounds = array<i64: 1>, scalar_prefetch = 0 : i64, scratch_operands = 1 : i64, tpu.core_type = #tpu.core_type<tc>, window_params = [{transform_indices = @transform_0, window_bounds = array<i64: 2, 64, 32>}, {pipeline_mode = #tpu.pipeline_mode<synchronous>, transform_indices = @transform_1, window_bounds = array<i64: 1, 32>}, {pipeline_mode = #tpu.pipeline_mode<synchronous>, transform_indices = @transform_2, window_bounds = array<i64: 1, 32>}, {pipeline_mode = #tpu.pipeline_mode<synchronous>, transform_indices = @transform_3, window_bounds = array<i64: 32, 96>}, {pipeline_mode = #tpu.pipeline_mode<synchronous>, transform_indices = @transform_4, window_bounds = array<i64: 1, 96>}, {pipeline_mode = #tpu.pipeline_mode<synchronous>, transform_indices = @transform_5, window_bounds = array<i64: 32, 32>}, {pipeline_mode = #tpu.pipeline_mode<synchronous>, transform_indices = @transform_6, window_bounds = array<i64: 1, 32>}, {transform_indices = @transform_7, window_bounds = array<i64: 2, 64, 32>}]} {
    %c0 = arith.constant 0 : index
    %c0_0 = arith.constant 0 : index
    %0 = vector.load %arg2[%c0, %c0_0] : memref<1x32xf32, #tpu.memory_space<vmem>>, vector<1x32xf32>
    %c0_1 = arith.constant 0 : index
    %c0_2 = arith.constant 0 : index
    %1 = vector.load %arg3[%c0_1, %c0_2] : memref<1x32xf32, #tpu.memory_space<vmem>>, vector<1x32xf32>
    %c0_3 = arith.constant 0 : index
    %c0_4 = arith.constant 0 : index
    %2 = vector.load %arg4[%c0_3, %c0_4] : memref<32x96xf32, #tpu.memory_space<vmem>>, vector<32x96xf32>
    %c0_5 = arith.constant 0 : index
    %c0_6 = arith.constant 0 : index
    %3 = vector.load %arg5[%c0_5, %c0_6] : memref<1x96xf32, #tpu.memory_space<vmem>>, vector<1x96xf32>
    %c0_7 = arith.constant 0 : index
    %c0_8 = arith.constant 0 : index
    %4 = vector.load %arg6[%c0_7, %c0_8] : memref<32x32xf32, #tpu.memory_space<vmem>>, vector<32x32xf32>
    %c0_9 = arith.constant 0 : index
    %c0_10 = arith.constant 0 : index
    %5 = vector.load %arg7[%c0_9, %c0_10] : memref<1x32xf32, #tpu.memory_space<vmem>>, vector<1x32xf32>
    %c0_i32 = arith.constant 0 : i32
    %6 = arith.index_cast %c0_i32 : i32 to index
    %c0_11 = arith.constant 0 : index
    %c0_12 = arith.constant 0 : index
    %7 = vector.load %arg1[%6, %c0_11, %c0_12] : memref<2x64x32xf32, #tpu.memory_space<vmem>>, vector<1x64x32xf32>
    %8 = vector.shape_cast %7 : vector<1x64x32xf32> to vector<64x32xf32>
    %9 = vector.shape_cast %8 : vector<64x32xf32> to vector<1x64x32xf32>
    %cst = arith.constant dense<0.000000e+00> : vector<1xf32>
    %10 = vector.multi_reduction <add>, %9, %cst [1, 2] : vector<1x64x32xf32> to vector<1xf32>
    %11 = vector.shape_cast %10 : vector<1xf32> to vector<1x1x1xf32>
    %12 = vector.extract %11[0, 0, 0] : f32 from vector<1x1x1xf32>
    %cst_13 = arith.constant 2.048000e+03 : f32
    %13 = arith.divf %12, %cst_13 : f32
    %14 = vector.broadcast %13 : f32 to vector<64x32xf32>
    %15 = arith.subf %8, %14 : vector<64x32xf32>
    %16 = arith.mulf %15, %15 : vector<64x32xf32>
    %17 = vector.shape_cast %16 : vector<64x32xf32> to vector<1x64x32xf32>
    %cst_14 = arith.constant dense<0.000000e+00> : vector<1xf32>
    %18 = vector.multi_reduction <add>, %17, %cst_14 [1, 2] : vector<1x64x32xf32> to vector<1xf32>
    %19 = vector.shape_cast %18 : vector<1xf32> to vector<1x1x1xf32>
    %20 = vector.extract %19[0, 0, 0] : f32 from vector<1x1x1xf32>
    %cst_15 = arith.constant 2.048000e+03 : f32
    %21 = arith.divf %20, %cst_15 : f32
    %22 = vector.broadcast %13 : f32 to vector<64x32xf32>
    %23 = arith.subf %8, %22 : vector<64x32xf32>
    %cst_16 = arith.constant 9.99999974E-6 : f32
    %24 = arith.addf %21, %cst_16 : f32
    %25 = math.rsqrt %24 : f32
    %26 = vector.broadcast %25 : f32 to vector<64x32xf32>
    %27 = arith.mulf %23, %26 : vector<64x32xf32>
    %28 = vector.broadcast %0 : vector<1x32xf32> to vector<64x32xf32>
    %29 = arith.mulf %27, %28 : vector<64x32xf32>
    %30 = vector.broadcast %1 : vector<1x32xf32> to vector<64x32xf32>
    %31 = arith.addf %29, %30 : vector<64x32xf32>
    %cst_17 = arith.constant dense<0.000000e+00> : vector<64x96xf32>
    %32 = tpu.matmul %31, %2, %cst_17 {dimension_numbers = #tpu.dot_dimension_numbers<[1], [0], [0], [1], [0, 0, 1, 1], [], []>} : vector<64x32xf32>, vector<32x96xf32>, vector<64x96xf32> -> vector<64x96xf32>
    %33 = vector.broadcast %3 : vector<1x96xf32> to vector<64x96xf32>
    %34 = arith.addf %32, %33 : vector<64x96xf32>
    %35 = vector.extract_strided_slice %34 {offsets = [0, 0], sizes = [64, 8], strides = [1, 1]} : vector<64x96xf32> to vector<64x8xf32>
    %36 = vector.extract_strided_slice %34 {offsets = [0, 32], sizes = [64, 8], strides = [1, 1]} : vector<64x96xf32> to vector<64x8xf32>
    %37 = vector.extract_strided_slice %34 {offsets = [0, 64], sizes = [64, 8], strides = [1, 1]} : vector<64x96xf32> to vector<64x8xf32>
    %cst_18 = arith.constant dense<0.000000e+00> : vector<64x64xf32>
    %38 = tpu.matmul %35, %36, %cst_18 {dimension_numbers = #tpu.dot_dimension_numbers<[1], [1], [0], [0], [0, 0, 1, 0], [], []>} : vector<64x8xf32>, vector<64x8xf32>, vector<64x64xf32> -> vector<64x64xf32>
    %cst_19 = arith.constant dense<0xFF800000> : vector<64xf32>
    %39 = vector.multi_reduction <maximumf>, %38, %cst_19 [1] : vector<64x64xf32> to vector<64xf32>
    %40 = vector.shape_cast %39 : vector<64xf32> to vector<64x1xf32>
    %41 = vector.broadcast %40 : vector<64x1xf32> to vector<64x64xf32>
    %42 = arith.subf %38, %41 : vector<64x64xf32>
    %43 = math.exp %42 : vector<64x64xf32>
    %cst_20 = arith.constant dense<0.000000e+00> : vector<64xf32>
    %44 = vector.multi_reduction <add>, %43, %cst_20 [1] : vector<64x64xf32> to vector<64xf32>
    %45 = vector.shape_cast %44 : vector<64xf32> to vector<64x1xf32>
    %46 = tpu.reciprocal %45 : vector<64x1xf32> -> vector<64x1xf32>
    %47 = vector.broadcast %46 : vector<64x1xf32> to vector<64x64xf32>
    %48 = arith.mulf %43, %47 : vector<64x64xf32>
    %cst_21 = arith.constant dense<0.000000e+00> : vector<64x8xf32>
    %49 = tpu.matmul %48, %37, %cst_21 {dimension_numbers = #tpu.dot_dimension_numbers<[1], [0], [0], [1], [0, 0, 1, 1], [], []>} : vector<64x64xf32>, vector<64x8xf32>, vector<64x8xf32> -> vector<64x8xf32>
    %c0_22 = arith.constant 0 : index
    %c0_23 = arith.constant 0 : index
    %50 = vector.load %arg9[%c0_22, %c0_23] : memref<64x32xf32, #tpu.memory_space<vmem>>, vector<64x8xf32>
    tpu.vector_store %arg9[%c0_22, %c0_23], %49 {strides = array<i32>} : memref<64x32xf32, #tpu.memory_space<vmem>>, vector<64x8xf32>,
    %51 = vector.extract_strided_slice %34 {offsets = [0, 8], sizes = [64, 8], strides = [1, 1]} : vector<64x96xf32> to vector<64x8xf32>
    %52 = vector.extract_strided_slice %34 {offsets = [0, 40], sizes = [64, 8], strides = [1, 1]} : vector<64x96xf32> to vector<64x8xf32>
    %53 = vector.extract_strided_slice %34 {offsets = [0, 72], sizes = [64, 8], strides = [1, 1]} : vector<64x96xf32> to vector<64x8xf32>
    %cst_24 = arith.constant dense<0.000000e+00> : vector<64x64xf32>
    %54 = tpu.matmul %51, %52, %cst_24 {dimension_numbers = #tpu.dot_dimension_numbers<[1], [1], [0], [0], [0, 0, 1, 0], [], []>} : vector<64x8xf32>, vector<64x8xf32>, vector<64x64xf32> -> vector<64x64xf32>
    %cst_25 = arith.constant dense<0xFF800000> : vector<64xf32>
    %55 = vector.multi_reduction <maximumf>, %54, %cst_25 [1] : vector<64x64xf32> to vector<64xf32>
    %56 = vector.shape_cast %55 : vector<64xf32> to vector<64x1xf32>
    %57 = vector.broadcast %56 : vector<64x1xf32> to vector<64x64xf32>
    %58 = arith.subf %54, %57 : vector<64x64xf32>
    %59 = math.exp %58 : vector<64x64xf32>
    %cst_26 = arith.constant dense<0.000000e+00> : vector<64xf32>
    %60 = vector.multi_reduction <add>, %59, %cst_26 [1] : vector<64x64xf32> to vector<64xf32>
    %61 = vector.shape_cast %60 : vector<64xf32> to vector<64x1xf32>
    %62 = tpu.reciprocal %61 : vector<64x1xf32> -> vector<64x1xf32>
    %63 = vector.broadcast %62 : vector<64x1xf32> to vector<64x64xf32>
    %64 = arith.mulf %59, %63 : vector<64x64xf32>
    %cst_27 = arith.constant dense<0.000000e+00> : vector<64x8xf32>
    %65 = tpu.matmul %64, %53, %cst_27 {dimension_numbers = #tpu.dot_dimension_numbers<[1], [0], [0], [1], [0, 0, 1, 1], [], []>} : vector<64x64xf32>, vector<64x8xf32>, vector<64x8xf32> -> vector<64x8xf32>
    %c0_28 = arith.constant 0 : index
    %c8 = arith.constant 8 : index
    %66 = vector.load %arg9[%c0_28, %c8] : memref<64x32xf32, #tpu.memory_space<vmem>>, vector<64x8xf32>
    tpu.vector_store %arg9[%c0_28, %c8], %65 {strides = array<i32>} : memref<64x32xf32, #tpu.memory_space<vmem>>, vector<64x8xf32>,
    %67 = vector.extract_strided_slice %34 {offsets = [0, 16], sizes = [64, 8], strides = [1, 1]} : vector<64x96xf32> to vector<64x8xf32>
    %68 = vector.extract_strided_slice %34 {offsets = [0, 48], sizes = [64, 8], strides = [1, 1]} : vector<64x96xf32> to vector<64x8xf32>
    %69 = vector.extract_strided_slice %34 {offsets = [0, 80], sizes = [64, 8], strides = [1, 1]} : vector<64x96xf32> to vector<64x8xf32>
    %cst_29 = arith.constant dense<0.000000e+00> : vector<64x64xf32>
    %70 = tpu.matmul %67, %68, %cst_29 {dimension_numbers = #tpu.dot_dimension_numbers<[1], [1], [0], [0], [0, 0, 1, 0], [], []>} : vector<64x8xf32>, vector<64x8xf32>, vector<64x64xf32> -> vector<64x64xf32>
    %cst_30 = arith.constant dense<0xFF800000> : vector<64xf32>
    %71 = vector.multi_reduction <maximumf>, %70, %cst_30 [1] : vector<64x64xf32> to vector<64xf32>
    %72 = vector.shape_cast %71 : vector<64xf32> to vector<64x1xf32>
    %73 = vector.broadcast %72 : vector<64x1xf32> to vector<64x64xf32>
    %74 = arith.subf %70, %73 : vector<64x64xf32>
    %75 = math.exp %74 : vector<64x64xf32>
    %cst_31 = arith.constant dense<0.000000e+00> : vector<64xf32>
    %76 = vector.multi_reduction <add>, %75, %cst_31 [1] : vector<64x64xf32> to vector<64xf32>
    %77 = vector.shape_cast %76 : vector<64xf32> to vector<64x1xf32>
    %78 = tpu.reciprocal %77 : vector<64x1xf32> -> vector<64x1xf32>
    %79 = vector.broadcast %78 : vector<64x1xf32> to vector<64x64xf32>
    %80 = arith.mulf %75, %79 : vector<64x64xf32>
    %cst_32 = arith.constant dense<0.000000e+00> : vector<64x8xf32>
    %81 = tpu.matmul %80, %69, %cst_32 {dimension_numbers = #tpu.dot_dimension_numbers<[1], [0], [0], [1], [0, 0, 1, 1], [], []>} : vector<64x64xf32>, vector<64x8xf32>, vector<64x8xf32> -> vector<64x8xf32>
    %c0_33 = arith.constant 0 : index
    %c16 = arith.constant 16 : index
    %82 = vector.load %arg9[%c0_33, %c16] : memref<64x32xf32, #tpu.memory_space<vmem>>, vector<64x8xf32>
    tpu.vector_store %arg9[%c0_33, %c16], %81 {strides = array<i32>} : memref<64x32xf32, #tpu.memory_space<vmem>>, vector<64x8xf32>,
    %83 = vector.extract_strided_slice %34 {offsets = [0, 24], sizes = [64, 8], strides = [1, 1]} : vector<64x96xf32> to vector<64x8xf32>
    %84 = vector.extract_strided_slice %34 {offsets = [0, 56], sizes = [64, 8], strides = [1, 1]} : vector<64x96xf32> to vector<64x8xf32>
    %85 = vector.extract_strided_slice %34 {offsets = [0, 88], sizes = [64, 8], strides = [1, 1]} : vector<64x96xf32> to vector<64x8xf32>
    %cst_34 = arith.constant dense<0.000000e+00> : vector<64x64xf32>
    %86 = tpu.matmul %83, %84, %cst_34 {dimension_numbers = #tpu.dot_dimension_numbers<[1], [1], [0], [0], [0, 0, 1, 0], [], []>} : vector<64x8xf32>, vector<64x8xf32>, vector<64x64xf32> -> vector<64x64xf32>
    %cst_35 = arith.constant dense<0xFF800000> : vector<64xf32>
    %87 = vector.multi_reduction <maximumf>, %86, %cst_35 [1] : vector<64x64xf32> to vector<64xf32>
    %88 = vector.shape_cast %87 : vector<64xf32> to vector<64x1xf32>
    %89 = vector.broadcast %88 : vector<64x1xf32> to vector<64x64xf32>
    %90 = arith.subf %86, %89 : vector<64x64xf32>
    %91 = math.exp %90 : vector<64x64xf32>
    %cst_36 = arith.constant dense<0.000000e+00> : vector<64xf32>
    %92 = vector.multi_reduction <add>, %91, %cst_36 [1] : vector<64x64xf32> to vector<64xf32>
    %93 = vector.shape_cast %92 : vector<64xf32> to vector<64x1xf32>
    %94 = tpu.reciprocal %93 : vector<64x1xf32> -> vector<64x1xf32>
    %95 = vector.broadcast %94 : vector<64x1xf32> to vector<64x64xf32>
    %96 = arith.mulf %91, %95 : vector<64x64xf32>
    %cst_37 = arith.constant dense<0.000000e+00> : vector<64x8xf32>
    %97 = tpu.matmul %96, %85, %cst_37 {dimension_numbers = #tpu.dot_dimension_numbers<[1], [0], [0], [1], [0, 0, 1, 1], [], []>} : vector<64x64xf32>, vector<64x8xf32>, vector<64x8xf32> -> vector<64x8xf32>
    %c0_38 = arith.constant 0 : index
    %c24 = arith.constant 24 : index
    %98 = vector.load %arg9[%c0_38, %c24] : memref<64x32xf32, #tpu.memory_space<vmem>>, vector<64x8xf32>
    tpu.vector_store %arg9[%c0_38, %c24], %97 {strides = array<i32>} : memref<64x32xf32, #tpu.memory_space<vmem>>, vector<64x8xf32>,
    %c0_39 = arith.constant 0 : index
    %c0_40 = arith.constant 0 : index
    %99 = vector.load %arg9[%c0_39, %c0_40] : memref<64x32xf32, #tpu.memory_space<vmem>>, vector<64x32xf32>
    %cst_41 = arith.constant dense<0.000000e+00> : vector<64x32xf32>
    %100 = tpu.matmul %99, %4, %cst_41 {dimension_numbers = #tpu.dot_dimension_numbers<[1], [0], [0], [1], [0, 0, 1, 1], [], []>} : vector<64x32xf32>, vector<32x32xf32>, vector<64x32xf32> -> vector<64x32xf32>
    %101 = arith.addf %8, %100 : vector<64x32xf32>
    %102 = vector.broadcast %5 : vector<1x32xf32> to vector<64x32xf32>
    %103 = arith.addf %101, %102 : vector<64x32xf32>
    %104 = arith.index_cast %c0_i32 : i32 to index
    %c0_42 = arith.constant 0 : index
    %c0_43 = arith.constant 0 : index
    %105 = vector.load %arg8[%104, %c0_42, %c0_43] : memref<2x64x32xf32, #tpu.memory_space<vmem>>, vector<1x64x32xf32>
    %106 = vector.shape_cast %105 : vector<1x64x32xf32> to vector<64x32xf32>
    %107 = vector.shape_cast %103 : vector<64x32xf32> to vector<1x64x32xf32>
    tpu.vector_store %arg8[%104, %c0_42, %c0_43], %107 {strides = array<i32>} : memref<2x64x32xf32, #tpu.memory_space<vmem>>, vector<1x64x32xf32>,
    %c1_i32 = arith.constant 1 : i32
    %108 = arith.index_cast %c1_i32 : i32 to index
    %c0_44 = arith.constant 0 : index
    %c0_45 = arith.constant 0 : index
    %109 = vector.load %arg1[%108, %c0_44, %c0_45] : memref<2x64x32xf32, #tpu.memory_space<vmem>>, vector<1x64x32xf32>
    %110 = vector.shape_cast %109 : vector<1x64x32xf32> to vector<64x32xf32>
    %111 = vector.shape_cast %110 : vector<64x32xf32> to vector<1x64x32xf32>
    %cst_46 = arith.constant dense<0.000000e+00> : vector<1xf32>
    %112 = vector.multi_reduction <add>, %111, %cst_46 [1, 2] : vector<1x64x32xf32> to vector<1xf32>
    %113 = vector.shape_cast %112 : vector<1xf32> to vector<1x1x1xf32>
    %114 = vector.extract %113[0, 0, 0] : f32 from vector<1x1x1xf32>
    %cst_47 = arith.constant 2.048000e+03 : f32
    %115 = arith.divf %114, %cst_47 : f32
    %116 = vector.broadcast %115 : f32 to vector<64x32xf32>
    %117 = arith.subf %110, %116 : vector<64x32xf32>
    %118 = arith.mulf %117, %117 : vector<64x32xf32>
    %119 = vector.shape_cast %118 : vector<64x32xf32> to vector<1x64x32xf32>
    %cst_48 = arith.constant dense<0.000000e+00> : vector<1xf32>
    %120 = vector.multi_reduction <add>, %119, %cst_48 [1, 2] : vector<1x64x32xf32> to vector<1xf32>
    %121 = vector.shape_cast %120 : vector<1xf32> to vector<1x1x1xf32>
    %122 = vector.extract %121[0, 0, 0] : f32 from vector<1x1x1xf32>
    %cst_49 = arith.constant 2.048000e+03 : f32
    %123 = arith.divf %122, %cst_49 : f32
    %124 = vector.broadcast %115 : f32 to vector<64x32xf32>
    %125 = arith.subf %110, %124 : vector<64x32xf32>
    %cst_50 = arith.constant 9.99999974E-6 : f32
    %126 = arith.addf %123, %cst_50 : f32
    %127 = math.rsqrt %126 : f32
    %128 = vector.broadcast %127 : f32 to vector<64x32xf32>
    %129 = arith.mulf %125, %128 : vector<64x32xf32>
    %130 = vector.broadcast %0 : vector<1x32xf32> to vector<64x32xf32>
    %131 = arith.mulf %129, %130 : vector<64x32xf32>
    %132 = vector.broadcast %1 : vector<1x32xf32> to vector<64x32xf32>
    %133 = arith.addf %131, %132 : vector<64x32xf32>
    %cst_51 = arith.constant dense<0.000000e+00> : vector<64x96xf32>
    %134 = tpu.matmul %133, %2, %cst_51 {dimension_numbers = #tpu.dot_dimension_numbers<[1], [0], [0], [1], [0, 0, 1, 1], [], []>} : vector<64x32xf32>, vector<32x96xf32>, vector<64x96xf32> -> vector<64x96xf32>
    %135 = vector.broadcast %3 : vector<1x96xf32> to vector<64x96xf32>
    %136 = arith.addf %134, %135 : vector<64x96xf32>
    %137 = vector.extract_strided_slice %136 {offsets = [0, 0], sizes = [64, 8], strides = [1, 1]} : vector<64x96xf32> to vector<64x8xf32>
    %138 = vector.extract_strided_slice %136 {offsets = [0, 32], sizes = [64, 8], strides = [1, 1]} : vector<64x96xf32> to vector<64x8xf32>
    %139 = vector.extract_strided_slice %136 {offsets = [0, 64], sizes = [64, 8], strides = [1, 1]} : vector<64x96xf32> to vector<64x8xf32>
    %cst_52 = arith.constant dense<0.000000e+00> : vector<64x64xf32>
    %140 = tpu.matmul %137, %138, %cst_52 {dimension_numbers = #tpu.dot_dimension_numbers<[1], [1], [0], [0], [0, 0, 1, 0], [], []>} : vector<64x8xf32>, vector<64x8xf32>, vector<64x64xf32> -> vector<64x64xf32>
    %cst_53 = arith.constant dense<0xFF800000> : vector<64xf32>
    %141 = vector.multi_reduction <maximumf>, %140, %cst_53 [1] : vector<64x64xf32> to vector<64xf32>
    %142 = vector.shape_cast %141 : vector<64xf32> to vector<64x1xf32>
    %143 = vector.broadcast %142 : vector<64x1xf32> to vector<64x64xf32>
    %144 = arith.subf %140, %143 : vector<64x64xf32>
    %145 = math.exp %144 : vector<64x64xf32>
    %cst_54 = arith.constant dense<0.000000e+00> : vector<64xf32>
    %146 = vector.multi_reduction <add>, %145, %cst_54 [1] : vector<64x64xf32> to vector<64xf32>
    %147 = vector.shape_cast %146 : vector<64xf32> to vector<64x1xf32>
    %148 = tpu.reciprocal %147 : vector<64x1xf32> -> vector<64x1xf32>
    %149 = vector.broadcast %148 : vector<64x1xf32> to vector<64x64xf32>
    %150 = arith.mulf %145, %149 : vector<64x64xf32>
    %cst_55 = arith.constant dense<0.000000e+00> : vector<64x8xf32>
    %151 = tpu.matmul %150, %139, %cst_55 {dimension_numbers = #tpu.dot_dimension_numbers<[1], [0], [0], [1], [0, 0, 1, 1], [], []>} : vector<64x64xf32>, vector<64x8xf32>, vector<64x8xf32> -> vector<64x8xf32>
    %c0_56 = arith.constant 0 : index
    %c0_57 = arith.constant 0 : index
    %152 = vector.load %arg9[%c0_56, %c0_57] : memref<64x32xf32, #tpu.memory_space<vmem>>, vector<64x8xf32>
    tpu.vector_store %arg9[%c0_56, %c0_57], %151 {strides = array<i32>} : memref<64x32xf32, #tpu.memory_space<vmem>>, vector<64x8xf32>,
    %153 = vector.extract_strided_slice %136 {offsets = [0, 8], sizes = [64, 8], strides = [1, 1]} : vector<64x96xf32> to vector<64x8xf32>
    %154 = vector.extract_strided_slice %136 {offsets = [0, 40], sizes = [64, 8], strides = [1, 1]} : vector<64x96xf32> to vector<64x8xf32>
    %155 = vector.extract_strided_slice %136 {offsets = [0, 72], sizes = [64, 8], strides = [1, 1]} : vector<64x96xf32> to vector<64x8xf32>
    %cst_58 = arith.constant dense<0.000000e+00> : vector<64x64xf32>
    %156 = tpu.matmul %153, %154, %cst_58 {dimension_numbers = #tpu.dot_dimension_numbers<[1], [1], [0], [0], [0, 0, 1, 0], [], []>} : vector<64x8xf32>, vector<64x8xf32>, vector<64x64xf32> -> vector<64x64xf32>
    %cst_59 = arith.constant dense<0xFF800000> : vector<64xf32>
    %157 = vector.multi_reduction <maximumf>, %156, %cst_59 [1] : vector<64x64xf32> to vector<64xf32>
    %158 = vector.shape_cast %157 : vector<64xf32> to vector<64x1xf32>
    %159 = vector.broadcast %158 : vector<64x1xf32> to vector<64x64xf32>
    %160 = arith.subf %156, %159 : vector<64x64xf32>
    %161 = math.exp %160 : vector<64x64xf32>
    %cst_60 = arith.constant dense<0.000000e+00> : vector<64xf32>
    %162 = vector.multi_reduction <add>, %161, %cst_60 [1] : vector<64x64xf32> to vector<64xf32>
    %163 = vector.shape_cast %162 : vector<64xf32> to vector<64x1xf32>
    %164 = tpu.reciprocal %163 : vector<64x1xf32> -> vector<64x1xf32>
    %165 = vector.broadcast %164 : vector<64x1xf32> to vector<64x64xf32>
    %166 = arith.mulf %161, %165 : vector<64x64xf32>
    %cst_61 = arith.constant dense<0.000000e+00> : vector<64x8xf32>
    %167 = tpu.matmul %166, %155, %cst_61 {dimension_numbers = #tpu.dot_dimension_numbers<[1], [0], [0], [1], [0, 0, 1, 1], [], []>} : vector<64x64xf32>, vector<64x8xf32>, vector<64x8xf32> -> vector<64x8xf32>
    %c0_62 = arith.constant 0 : index
    %c8_63 = arith.constant 8 : index
    %168 = vector.load %arg9[%c0_62, %c8_63] : memref<64x32xf32, #tpu.memory_space<vmem>>, vector<64x8xf32>
    tpu.vector_store %arg9[%c0_62, %c8_63], %167 {strides = array<i32>} : memref<64x32xf32, #tpu.memory_space<vmem>>, vector<64x8xf32>,
    %169 = vector.extract_strided_slice %136 {offsets = [0, 16], sizes = [64, 8], strides = [1, 1]} : vector<64x96xf32> to vector<64x8xf32>
    %170 = vector.extract_strided_slice %136 {offsets = [0, 48], sizes = [64, 8], strides = [1, 1]} : vector<64x96xf32> to vector<64x8xf32>
    %171 = vector.extract_strided_slice %136 {offsets = [0, 80], sizes = [64, 8], strides = [1, 1]} : vector<64x96xf32> to vector<64x8xf32>
    %cst_64 = arith.constant dense<0.000000e+00> : vector<64x64xf32>
    %172 = tpu.matmul %169, %170, %cst_64 {dimension_numbers = #tpu.dot_dimension_numbers<[1], [1], [0], [0], [0, 0, 1, 0], [], []>} : vector<64x8xf32>, vector<64x8xf32>, vector<64x64xf32> -> vector<64x64xf32>
    %cst_65 = arith.constant dense<0xFF800000> : vector<64xf32>
    %173 = vector.multi_reduction <maximumf>, %172, %cst_65 [1] : vector<64x64xf32> to vector<64xf32>
    %174 = vector.shape_cast %173 : vector<64xf32> to vector<64x1xf32>
    %175 = vector.broadcast %174 : vector<64x1xf32> to vector<64x64xf32>
    %176 = arith.subf %172, %175 : vector<64x64xf32>
    %177 = math.exp %176 : vector<64x64xf32>
    %cst_66 = arith.constant dense<0.000000e+00> : vector<64xf32>
    %178 = vector.multi_reduction <add>, %177, %cst_66 [1] : vector<64x64xf32> to vector<64xf32>
    %179 = vector.shape_cast %178 : vector<64xf32> to vector<64x1xf32>
    %180 = tpu.reciprocal %179 : vector<64x1xf32> -> vector<64x1xf32>
    %181 = vector.broadcast %180 : vector<64x1xf32> to vector<64x64xf32>
    %182 = arith.mulf %177, %181 : vector<64x64xf32>
    %cst_67 = arith.constant dense<0.000000e+00> : vector<64x8xf32>
    %183 = tpu.matmul %182, %171, %cst_67 {dimension_numbers = #tpu.dot_dimension_numbers<[1], [0], [0], [1], [0, 0, 1, 1], [], []>} : vector<64x64xf32>, vector<64x8xf32>, vector<64x8xf32> -> vector<64x8xf32>
    %c0_68 = arith.constant 0 : index
    %c16_69 = arith.constant 16 : index
    %184 = vector.load %arg9[%c0_68, %c16_69] : memref<64x32xf32, #tpu.memory_space<vmem>>, vector<64x8xf32>
    tpu.vector_store %arg9[%c0_68, %c16_69], %183 {strides = array<i32>} : memref<64x32xf32, #tpu.memory_space<vmem>>, vector<64x8xf32>,
    %185 = vector.extract_strided_slice %136 {offsets = [0, 24], sizes = [64, 8], strides = [1, 1]} : vector<64x96xf32> to vector<64x8xf32>
    %186 = vector.extract_strided_slice %136 {offsets = [0, 56], sizes = [64, 8], strides = [1, 1]} : vector<64x96xf32> to vector<64x8xf32>
    %187 = vector.extract_strided_slice %136 {offsets = [0, 88], sizes = [64, 8], strides = [1, 1]} : vector<64x96xf32> to vector<64x8xf32>
    %cst_70 = arith.constant dense<0.000000e+00> : vector<64x64xf32>
    %188 = tpu.matmul %185, %186, %cst_70 {dimension_numbers = #tpu.dot_dimension_numbers<[1], [1], [0], [0], [0, 0, 1, 0], [], []>} : vector<64x8xf32>, vector<64x8xf32>, vector<64x64xf32> -> vector<64x64xf32>
    %cst_71 = arith.constant dense<0xFF800000> : vector<64xf32>
    %189 = vector.multi_reduction <maximumf>, %188, %cst_71 [1] : vector<64x64xf32> to vector<64xf32>
    %190 = vector.shape_cast %189 : vector<64xf32> to vector<64x1xf32>
    %191 = vector.broadcast %190 : vector<64x1xf32> to vector<64x64xf32>
    %192 = arith.subf %188, %191 : vector<64x64xf32>
    %193 = math.exp %192 : vector<64x64xf32>
    %cst_72 = arith.constant dense<0.000000e+00> : vector<64xf32>
    %194 = vector.multi_reduction <add>, %193, %cst_72 [1] : vector<64x64xf32> to vector<64xf32>
    %195 = vector.shape_cast %194 : vector<64xf32> to vector<64x1xf32>
    %196 = tpu.reciprocal %195 : vector<64x1xf32> -> vector<64x1xf32>
    %197 = vector.broadcast %196 : vector<64x1xf32> to vector<64x64xf32>
    %198 = arith.mulf %193, %197 : vector<64x64xf32>
    %cst_73 = arith.constant dense<0.000000e+00> : vector<64x8xf32>
    %199 = tpu.matmul %198, %187, %cst_73 {dimension_numbers = #tpu.dot_dimension_numbers<[1], [0], [0], [1], [0, 0, 1, 1], [], []>} : vector<64x64xf32>, vector<64x8xf32>, vector<64x8xf32> -> vector<64x8xf32>
    %c0_74 = arith.constant 0 : index
    %c24_75 = arith.constant 24 : index
    %200 = vector.load %arg9[%c0_74, %c24_75] : memref<64x32xf32, #tpu.memory_space<vmem>>, vector<64x8xf32>
    tpu.vector_store %arg9[%c0_74, %c24_75], %199 {strides = array<i32>} : memref<64x32xf32, #tpu.memory_space<vmem>>, vector<64x8xf32>,
    %c0_76 = arith.constant 0 : index
    %c0_77 = arith.constant 0 : index
    %201 = vector.load %arg9[%c0_76, %c0_77] : memref<64x32xf32, #tpu.memory_space<vmem>>, vector<64x32xf32>
    %cst_78 = arith.constant dense<0.000000e+00> : vector<64x32xf32>
    %202 = tpu.matmul %201, %4, %cst_78 {dimension_numbers = #tpu.dot_dimension_numbers<[1], [0], [0], [1], [0, 0, 1, 1], [], []>} : vector<64x32xf32>, vector<32x32xf32>, vector<64x32xf32> -> vector<64x32xf32>
    %203 = arith.addf %110, %202 : vector<64x32xf32>
    %204 = vector.broadcast %5 : vector<1x32xf32> to vector<64x32xf32>
    %205 = arith.addf %203, %204 : vector<64x32xf32>
    %206 = arith.index_cast %c1_i32 : i32 to index
    %c0_79 = arith.constant 0 : index
    %c0_80 = arith.constant 0 : index
    %207 = vector.load %arg8[%206, %c0_79, %c0_80] : memref<2x64x32xf32, #tpu.memory_space<vmem>>, vector<1x64x32xf32>
    %208 = vector.shape_cast %207 : vector<1x64x32xf32> to vector<64x32xf32>
    %209 = vector.shape_cast %205 : vector<64x32xf32> to vector<1x64x32xf32>
    tpu.vector_store %arg8[%206, %c0_79, %c0_80], %209 {strides = array<i32>} : memref<2x64x32xf32, #tpu.memory_space<vmem>>, vector<1x64x32xf32>,
    %c2_i32 = arith.constant 2 : i32
    return
  }
  func.func @transform_0(%arg0: i32) -> (i32, i32, i32) {
    %c0_i32 = arith.constant 0 : i32
    %c0_i32_0 = arith.constant 0 : i32
    %c0_i32_1 = arith.constant 0 : i32
    return %arg0, %c0_i32, %c0_i32_0 : i32, i32, i32
  }
  func.func @transform_1(%arg0: i32) -> (i32, i32) {
    %c0_i32 = arith.constant 0 : i32
    %c0_i32_0 = arith.constant 0 : i32
    %c0_i32_1 = arith.constant 0 : i32
    return %c0_i32, %c0_i32_0 : i32, i32
  }
  func.func @transform_2(%arg0: i32) -> (i32, i32) {
    %c0_i32 = arith.constant 0 : i32
    %c0_i32_0 = arith.constant 0 : i32
    %c0_i32_1 = arith.constant 0 : i32
    return %c0_i32, %c0_i32_0 : i32, i32
  }
  func.func @transform_3(%arg0: i32) -> (i32, i32) {
    %c0_i32 = arith.constant 0 : i32
    %c0_i32_0 = arith.constant 0 : i32
    %c0_i32_1 = arith.constant 0 : i32
    return %c0_i32, %c0_i32_0 : i32, i32
  }
  func.func @transform_4(%arg0: i32) -> (i32, i32) {
    %c0_i32 = arith.constant 0 : i32
    %c0_i32_0 = arith.constant 0 : i32
    %c0_i32_1 = arith.constant 0 : i32
    return %c0_i32, %c0_i32_0 : i32, i32
  }
  func.func @transform_5(%arg0: i32) -> (i32, i32) {
    %c0_i32 = arith.constant 0 : i32
    %c0_i32_0 = arith.constant 0 : i32
    %c0_i32_1 = arith.constant 0 : i32
    return %c0_i32, %c0_i32_0 : i32, i32
  }
  func.func @transform_6(%arg0: i32) -> (i32, i32) {
    %c0_i32 = arith.constant 0 : i32
    %c0_i32_0 = arith.constant 0 : i32
    %c0_i32_1 = arith.constant 0 : i32
    return %c0_i32, %c0_i32_0 : i32, i32
  }
  func.func @transform_7(%arg0: i32) -> (i32, i32, i32) {
    %c0_i32 = arith.constant 0 : i32
    %c0_i32_0 = arith.constant 0 : i32
    %c0_i32_1 = arith.constant 0 : i32
    return %arg0, %c0_i32, %c0_i32_0 : i32, i32, i32
  }
}

</mosaic_0001>

<llo_original>
// kernel: tpu_custom_call.1
$region0: #{tpu_custom_call.1}
  #allocation0 [shape = 'u32[]', space=smem, size = 0x4, offset = 0x4, fixed_abs, tag = 'smem constant byte address 0x4 - core index']
  #allocation1 [shape = 'u32[144,128]{1,0:T(1,128)}', space=vmem, size = 0x12000, scoped, tag = 'internal scratch']
  #allocation2 [shape = 'f32[64,32]{1,0:T(8,128)}', space=vmem, size = 0x8000, scoped, tag = 'scratch operand']
  %s0 = inlined_call_operand.vmem [shape: f32[2,64,32], index: 0, kind: input, shape index: {}]
  %s1 = inlined_call_operand.vmem [shape: f32[1,32], index: 1, kind: input, shape index: {}]
  %s2 = inlined_call_operand.vmem [shape: f32[1,32], index: 2, kind: input, shape index: {}]
  %s3 = inlined_call_operand.vmem [shape: f32[32,96], index: 3, kind: input, shape index: {}]
  %s4 = inlined_call_operand.vmem [shape: f32[1,96], index: 4, kind: input, shape index: {}]
  %s5 = inlined_call_operand.vmem [shape: f32[32,32], index: 5, kind: input, shape index: {}]
  %s6 = inlined_call_operand.vmem [shape: f32[1,32], index: 6, kind: input, shape index: {}]
  %s7 = inlined_call_operand.vmem [shape: f32[2,64,32], index: 7, kind: output, shape index: {}]
  %s8 = sld [smem:[#allocation0]]
  $region38: #{tpu_custom_call.1} parent=0
    _
  %s10 = ssub.s32 1, %s8
  %s11 = scalar_select 0, %s10, %s8
  // Predicated region
  $region2: #{tpu_custom_call.1} parent=0 // pred_check
    _
  $region3: #{tpu_custom_call.1} parent=0 // pred_check_branch
    %13 = sbr.rel (0) target = $region5
  $region4: #{tpu_custom_call.1} parent=0 // pred_region
    _
  $region5: #{tpu_custom_call.1} parent=0 // pred_fallthru
    _
  // Predicated region
  $region6: #{tpu_custom_call.1} parent=0 // pred_check
    _
  $region7: #{tpu_custom_call.1} parent=0 // pred_check_branch
    %15 = sbr.rel (0) target = $region9
  $region8: #{tpu_custom_call.1} parent=0 // pred_region
    _
  $region9: #{tpu_custom_call.1} parent=0 // pred_fallthru
    _
  // Predicated region
  $region10: #{tpu_custom_call.1} parent=0 // pred_check
    _
  $region11: #{tpu_custom_call.1} parent=0 // pred_check_branch
    %17 = sbr.rel (0) target = $region13
  $region12: #{tpu_custom_call.1} parent=0 // pred_region
    _
  $region13: #{tpu_custom_call.1} parent=0 // pred_fallthru
    _
  // Predicated region
  $region14: #{tpu_custom_call.1} parent=0 // pred_check
    _
  $region15: #{tpu_custom_call.1} parent=0 // pred_check_branch
    %19 = sbr.rel (0) target = $region17
  $region16: #{tpu_custom_call.1} parent=0 // pred_region
    _
  $region17: #{tpu_custom_call.1} parent=0 // pred_fallthru
    _
  // Predicated region
  $region18: #{tpu_custom_call.1} parent=0 // pred_check
    _
  $region19: #{tpu_custom_call.1} parent=0 // pred_check_branch
    %21 = sbr.rel (0) target = $region21
  $region20: #{tpu_custom_call.1} parent=0 // pred_region
    _
  $region21: #{tpu_custom_call.1} parent=0 // pred_fallthru
    _
  // Predicated region
  $region22: #{tpu_custom_call.1} parent=0 // pred_check
    _
  $region23: #{tpu_custom_call.1} parent=0 // pred_check_branch
    %23 = sbr.rel (0) target = $region25
  $region24: #{tpu_custom_call.1} parent=0 // pred_region
    _
  $region25: #{tpu_custom_call.1} parent=0 // pred_fallthru
    _
  // Predicated region
  $region26: #{tpu_custom_call.1} parent=0 // pred_check
    _
  $region27: #{tpu_custom_call.1} parent=0 // pred_check_branch
    %25 = sbr.rel (0) target = $region29
  $region28: #{tpu_custom_call.1} parent=0 // pred_region
    _
  $region29: #{tpu_custom_call.1} parent=0 // pred_fallthru
    _
  %v26 = vld [vmem:[%s1] sm:$0x1]
  %v27 = vld [vmem:[%s2] sm:$0x1]
  %v28 = vld [vmem:[%s3] sm:$0xff]
  %v29 = vld [vmem:[%s3 + $0x8] sm:$0xff]
  %v30 = vld [vmem:[%s3 + $0x10] sm:$0xff]
  %v31 = vld [vmem:[%s3 + $0x18] sm:$0xff]
  %v32 = vld [vmem:[%s4] sm:$0x1]
  %v33 = vld [vmem:[%s5] sm:$0xff]
  %v34 = vld [vmem:[%s5 + $0x8] sm:$0xff]
  %v35 = vld [vmem:[%s5 + $0x10] sm:$0xff]
  %v36 = vld [vmem:[%s5 + $0x18] sm:$0xff]
  %v37 = vld [vmem:[%s6] sm:$0x1]
  %v38 = vld [vmem:[%s0] sm:$0xff]
  %v39 = vld [vmem:[%s0 + $0x8] sm:$0xff]
  %v40 = vld [vmem:[%s0 + $0x10] sm:$0xff]
  %v41 = vld [vmem:[%s0 + $0x18] sm:$0xff]
  %v42 = vld [vmem:[%s0 + $0x20] sm:$0xff]
  %v43 = vld [vmem:[%s0 + $0x28] sm:$0xff]
  %v44 = vld [vmem:[%s0 + $0x30] sm:$0xff]
  %v45 = vld [vmem:[%s0 + $0x38] sm:$0xff]
  %vm46 = vcmask 261120
  %v47 = vsel %vm46, %v38, 0.0
  %v48 = vsel %vm46, %v39, 0.0
  %v49 = vadd.f32 %v47, %v48
  %v50 = vsel %vm46, %v40, 0.0
  %v51 = vadd.f32 %v49, %v50
  %v52 = vsel %vm46, %v41, 0.0
  %v53 = vadd.f32 %v51, %v52
  %v54 = vsel %vm46, %v42, 0.0
  %v55 = vadd.f32 %v53, %v54
  %v56 = vsel %vm46, %v43, 0.0
  %v57 = vadd.f32 %v55, %v56
  %v58 = vsel %vm46, %v44, 0.0
  %v59 = vadd.f32 %v57, %v58
  %v60 = vsel %vm46, %v45, 0.0
  %v61 = vadd.f32 %v59, %v60
  %62 = vadd.xlane.f32.xlu0 %v61
  %v63 = vpop.xlane.xlu0 %62
  %v64 = vrot.slane %v63, 4
  %v65 = vadd.f32 %v63, %v64
  %v66 = vrot.slane %v65, 2
  %v67 = vadd.f32 %v65, %v66
  %v68 = vrot.slane %v67, 1
  %v69 = vadd.f32 %v67, %v68
  %s70 = vtos %v69
  %v71 = vrcp.pop 2048.0
  %s72 = vtos %v71
  %s73 = smul.f32 %s70, %s72
  %v74 = vstv %s73
  %v75 = vsub.f32 %v38, %v74
  %v76 = vsub.f32 %v39, %v74
  %v77 = vsub.f32 %v40, %v74
  %v78 = vsub.f32 %v41, %v74
  %v79 = vsub.f32 %v42, %v74
  %v80 = vsub.f32 %v43, %v74
  %v81 = vsub.f32 %v44, %v74
  %v82 = vsub.f32 %v45, %v74
  %v83 = vmul.f32 %v75, %v75
  %v84 = vmul.f32 %v76, %v76
  %v85 = vmul.f32 %v77, %v77
  %v86 = vmul.f32 %v78, %v78
  %v87 = vmul.f32 %v79, %v79
  %v88 = vmul.f32 %v80, %v80
  %v89 = vmul.f32 %v81, %v81
  %v90 = vmul.f32 %v82, %v82
  %v91 = vsel %vm46, %v83, 0.0
  %v92 = vsel %vm46, %v84, 0.0
  %v93 = vadd.f32 %v91, %v92
  %v94 = vsel %vm46, %v85, 0.0
  %v95 = vadd.f32 %v93, %v94
  %v96 = vsel %vm46, %v86, 0.0
  %v97 = vadd.f32 %v95, %v96
  %v98 = vsel %vm46, %v87, 0.0
  %v99 = vadd.f32 %v97, %v98
  %v100 = vsel %vm46, %v88, 0.0
  %v101 = vadd.f32 %v99, %v100
  %v102 = vsel %vm46, %v89, 0.0
  %v103 = vadd.f32 %v101, %v102
  %v104 = vsel %vm46, %v90, 0.0
  %v105 = vadd.f32 %v103, %v104
  %106 = vadd.xlane.f32.xlu0 %v105
  %v107 = vpop.xlane.xlu0 %106
  %v108 = vrot.slane %v107, 4
  %v109 = vadd.f32 %v107, %v108
  %v110 = vrot.slane %v109, 2
  %v111 = vadd.f32 %v109, %v110
  %v112 = vrot.slane %v111, 1
  %v113 = vadd.f32 %v111, %v112
  %s114 = vtos %v113
  %v115 = vrcp.pop 2048.0
  %s116 = vtos %v115
  %s117 = smul.f32 %s114, %s116
  %s118 = sadd.f32 %s117, 1e-05
  %v119 = vstv %s118
  %v120 = vrsqrt.pop %v119
  %s121 = vtos %v120
  %v122 = vstv %s121
  %v123 = vmul.f32 %v75, %v122
  %v124 = vmul.f32 %v76, %v122
  %v125 = vmul.f32 %v77, %v122
  %v126 = vmul.f32 %v78, %v122
  %v127 = vmul.f32 %v79, %v122
  %v128 = vmul.f32 %v80, %v122
  %v129 = vmul.f32 %v81, %v122
  %v130 = vmul.f32 %v82, %v122
  %v132 = vlaneseq
  %v133 = vshrl.u32 %v132, 7
  %v134 = vsub.s32 0, %v133
  %v135 = vrot.slane %v26, %v134
  %v137 = vmul.f32 %v123, %v135
  %v138 = vmul.f32 %v124, %v135
  %v139 = vmul.f32 %v125, %v135
  %v140 = vmul.f32 %v126, %v135
  %v141 = vmul.f32 %v127, %v135
  %v142 = vmul.f32 %v128, %v135
  %v143 = vmul.f32 %v129, %v135
  %v144 = vmul.f32 %v130, %v135
  %v146 = vlaneseq
  %v147 = vshrl.u32 %v146, 7
  %v148 = vsub.s32 0, %v147
  %v149 = vrot.slane %v27, %v148
  %v151 = vadd.f32 %v137, %v149
  %v152 = vadd.f32 %v138, %v149
  %v153 = vadd.f32 %v139, %v149
  %v154 = vadd.f32 %v140, %v149
  %v155 = vadd.f32 %v141, %v149
  %v156 = vadd.f32 %v142, %v149
  %v157 = vadd.f32 %v143, %v149
  %v158 = vadd.f32 %v144, %v149
  %v160 = vlaneseq
  %v161 = vshrl.u32 %v160, 7
  %v162 = vsub.s32 0, %v161
  %v163 = vrot.slane %v32, %v162
  %v166 = vsel %vm46, %v151, 0
  %v169 = vsel %vm46, %v152, 0
  %v172 = vsel %vm46, %v153, 0
  %v175 = vsel %vm46, %v154, 0
  %v178 = vsel %vm46, %v155, 0
  %v181 = vsel %vm46, %v156, 0
  %v184 = vsel %vm46, %v157, 0
  %v187 = vsel %vm46, %v158, 0
  %189 = vmatprep.subr.mxu0 0.0
  %190 = vmatpush1.msra.mxu0 %v28
  %191 = vmatprep.subr.mxu0 0.0
  %192 = vmatpush1.msra.mxu0 %v29
  %193 = vmatprep.subr.mxu0 0.0
  %194 = vmatpush1.msra.mxu0 %v30
  %195 = vmatprep.subr.mxu0 0.0
  %196 = vmatpush1.msra.mxu0 %v31
  %197 = vmatprep.subr.mxu0 0.0
  %198 = vmatpush1.msra.mxu0 0.0
  %199 = vmatprep.subr.mxu0 0.0
  %200 = vmatpush1.msra.mxu0 0.0
  %201 = vmatprep.subr.mxu0 0.0
  %202 = vmatpush1.msra.mxu0 0.0
  %203 = vmatprep.subr.mxu0 0.0
  %204 = vmatpush1.msra.mxu0 0.0
  %205 = vmatprep.subr.mxu0 0.0
  %206 = vmatpush1.msra.mxu0 0.0
  %207 = vmatprep.subr.mxu0 0.0
  %208 = vmatpush1.msra.mxu0 0.0
  %209 = vmatprep.subr.mxu0 0.0
  %210 = vmatpush1.msra.mxu0 0.0
  %211 = vmatprep.subr.mxu0 0.0
  %212 = vmatpush1.msra.mxu0 0.0
  %213 = vmatprep.subr.mxu0 0.0
  %214 = vmatpush1.msra.mxu0 0.0
  %215 = vmatprep.subr.mxu0 0.0
  %216 = vmatpush1.msra.mxu0 0.0
  %217 = vmatprep.subr.mxu0 0.0
  %218 = vmatpush1.msra.mxu0 0.0
  %219 = vmatprep.subr.mxu0 0.0
  %220 = vmatpush1.msra.mxu0 0.0
  %221 = vmatprep.subr.mxu0 0.0
  %222 = vmatpush1.msra.mxu0 0.0
  %223 = vmatprep.subr.mxu0 0.0
  %224 = vmatpush1.msra.mxu0 0.0
  %225 = vmatprep.subr.mxu0 0.0
  %226 = vmatpush1.msra.mxu0 0.0
  %227 = vmatprep.subr.mxu0 0.0
  %228 = vmatpush1.msra.mxu0 0.0
  %229 = vmatprep.subr.mxu0 0.0
  %230 = vmatpush1.msra.mxu0 0.0
  %231 = vmatprep.subr.mxu0 0.0
  %232 = vmatpush1.msra.mxu0 0.0
  %233 = vmatprep.subr.mxu0 0.0
  %234 = vmatpush1.msra.mxu0 0.0
  %235 = vmatprep.subr.mxu0 0.0
  %236 = vmatpush1.msra.mxu0 0.0
  %237 = vmatprep.subr.mxu0 0.0
  %238 = vmatpush1.msra.mxu0 0.0
  %239 = vmatprep.subr.mxu0 0.0
  %240 = vmatpush1.msra.mxu0 0.0
  %241 = vmatprep.subr.mxu0 0.0
  %242 = vmatpush1.msra.mxu0 0.0
  %243 = vmatprep.subr.mxu0 0.0
  %244 = vmatpush1.msra.mxu0 0.0
  %245 = vmatprep.subr.mxu0 0.0
  %246 = vmatpush1.msra.mxu0 0.0
  %247 = vmatprep.subr.mxu0 0.0
  %248 = vmatpush1.msra.mxu0 0.0
  %249 = vmatprep.subr.mxu0 0.0
  %250 = vmatpush1.msra.mxu0 0.0
  %251 = vmatprep.subr.mxu0 0.0
  %252 = vmatpush1.msra.mxu0 0.0
  %253 = vmatprep.mubr.f32.mxu0 0.0
  %254 = vmatmul.mubr.f32.gmra.mrb[0].mxu0 %v166
  %v255 = vpop.f32.mrb[0].mxu0
  %v256 = vadd.f32 %v163, %v255
  %v257 = vpop.f32.mrb[0].mxu0
  %258 = vmatprep.mubr.f32.mxu0 0.0
  %259 = vmatmul.mubr.f32.gmra.mrb[0].mxu0 %v169
  %v260 = vpop.f32.mrb[0].mxu0
  %v261 = vadd.f32 %v163, %v260
  %v262 = vpop.f32.mrb[0].mxu0
  %263 = vmatprep.mubr.f32.mxu0 0.0
  %264 = vmatmul.mubr.f32.gmra.mrb[0].mxu0 %v172
  %v265 = vpop.f32.mrb[0].mxu0
  %v266 = vadd.f32 %v163, %v265
  %v267 = vpop.f32.mrb[0].mxu0
  %268 = vmatprep.mubr.f32.mxu0 0.0
  %269 = vmatmul.mubr.f32.gmra.mrb[0].mxu0 %v175
  %v270 = vpop.f32.mrb[0].mxu0
  %v271 = vadd.f32 %v163, %v270
  %v272 = vpop.f32.mrb[0].mxu0
  %273 = vmatprep.mubr.f32.mxu0 0.0
  %274 = vmatmul.mubr.f32.gmra.mrb[0].mxu0 %v178
  %v275 = vpop.f32.mrb[0].mxu0
  %v276 = vadd.f32 %v163, %v275
  %v277 = vpop.f32.mrb[0].mxu0
  %278 = vmatprep.mubr.f32.mxu0 0.0
  %279 = vmatmul.mubr.f32.gmra.mrb[0].mxu0 %v181
  %v280 = vpop.f32.mrb[0].mxu0
  %v281 = vadd.f32 %v163, %v280
  %v282 = vpop.f32.mrb[0].mxu0
  %283 = vmatprep.mubr.f32.mxu0 0.0
  %284 = vmatmul.mubr.f32.gmra.mrb[0].mxu0 %v184
  %v285 = vpop.f32.mrb[0].mxu0
  %v286 = vadd.f32 %v163, %v285
  %v287 = vpop.f32.mrb[0].mxu0
  %288 = vmatprep.mubr.f32.mxu0 0.0
  %289 = vmatmul.mubr.f32.gmra.mrb[0].mxu0 %v187
  %v290 = vpop.f32.mrb[0].mxu0
  %v291 = vadd.f32 %v163, %v290
  %v292 = vpop.f32.mrb[0].mxu0
  %293 = vdwg.mxu0
  %302 = vrot.lane.b32.xlu0 %v256, 96
  %v303 = vpop.permute.xlu0 %302
  %304 = vrot.lane.b32.xlu0 %v261, 96
  %v305 = vpop.permute.xlu0 %304
  %306 = vrot.lane.b32.xlu0 %v266, 96
  %v307 = vpop.permute.xlu0 %306
  %308 = vrot.lane.b32.xlu0 %v271, 96
  %v309 = vpop.permute.xlu0 %308
  %310 = vrot.lane.b32.xlu0 %v276, 96
  %v311 = vpop.permute.xlu0 %310
  %312 = vrot.lane.b32.xlu0 %v281, 96
  %v313 = vpop.permute.xlu0 %312
  %314 = vrot.lane.b32.xlu0 %v286, 96
  %v315 = vpop.permute.xlu0 %314
  %316 = vrot.lane.b32.xlu0 %v291, 96
  %v317 = vpop.permute.xlu0 %316
  %vm318 = vcmask 64512
  %v319 = vsel %vm318, %v256, 0
  %v321 = vsel %vm318, %v261, 0
  %v323 = vsel %vm318, %v266, 0
  %v325 = vsel %vm318, %v271, 0
  %v327 = vsel %vm318, %v276, 0
  %v329 = vsel %vm318, %v281, 0
  %v331 = vsel %vm318, %v286, 0
  %v333 = vsel %vm318, %v291, 0
  %v335 = vsel %vm318, %v303, 0
  %v337 = vsel %vm318, %v305, 0
  %v339 = vsel %vm318, %v307, 0
  %v341 = vsel %vm318, %v309, 0
  %v343 = vsel %vm318, %v311, 0
  %v345 = vsel %vm318, %v313, 0
  %v347 = vsel %vm318, %v315, 0
  %v349 = vsel %vm318, %v317, 0
  %351 = vmatprep.subr.mxu0 0.0
  %352 = vmatpush1.xpose.msra.mxu0 %v335
  %353 = vmatprep.subr.mxu0 0.0
  %354 = vmatpush1.xpose.msra.mxu0 %v337
  %355 = vmatprep.subr.mxu0 0.0
  %356 = vmatpush1.xpose.msra.mxu0 %v339
  %357 = vmatprep.subr.mxu0 0.0
  %358 = vmatpush1.xpose.msra.mxu0 %v341
  %359 = vmatprep.subr.mxu0 0.0
  %360 = vmatpush1.xpose.msra.mxu0 %v343
  %361 = vmatprep.subr.mxu0 0.0
  %362 = vmatpush1.xpose.msra.mxu0 %v345
  %363 = vmatprep.subr.mxu0 0.0
  %364 = vmatpush1.xpose.msra.mxu0 %v347
  %365 = vmatprep.subr.mxu0 0.0
  %366 = vmatpush1.xpose.msra.mxu0 %v349
  %367 = vmatprep.subr.mxu0 0.0
  %368 = vmatpush1.xpose.msra.mxu0 0.0
  %369 = vmatprep.subr.mxu0 0.0
  %370 = vmatpush1.xpose.msra.mxu0 0.0
  %371 = vmatprep.subr.mxu0 0.0
  %372 = vmatpush1.xpose.msra.mxu0 0.0
  %373 = vmatprep.subr.mxu0 0.0
  %374 = vmatpush1.xpose.msra.mxu0 0.0
  %375 = vmatprep.subr.mxu0 0.0
  %376 = vmatpush1.xpose.msra.mxu0 0.0
  %377 = vmatprep.subr.mxu0 0.0
  %378 = vmatpush1.xpose.msra.mxu0 0.0
  %379 = vmatprep.subr.mxu0 0.0
  %380 = vmatpush1.xpose.msra.mxu0 0.0
  %381 = vmatprep.subr.mxu0 0.0
  %382 = vmatpush1.xpose.msra.mxu0 0.0
  %383 = vmatprep.subr.mxu0 0.0
  %384 = vmatpush1.xpose.msra.mxu0 0.0
  %385 = vmatprep.subr.mxu0 0.0
  %386 = vmatpush1.xpose.msra.mxu0 0.0
  %387 = vmatprep.subr.mxu0 0.0
  %388 = vmatpush1.xpose.msra.mxu0 0.0
  %389 = vmatprep.subr.mxu0 0.0
  %390 = vmatpush1.xpose.msra.mxu0 0.0
  %391 = vmatprep.subr.mxu0 0.0
  %392 = vmatpush1.xpose.msra.mxu0 0.0
  %393 = vmatprep.subr.mxu0 0.0
  %394 = vmatpush1.xpose.msra.mxu0 0.0
  %395 = vmatprep.subr.mxu0 0.0
  %396 = vmatpush1.xpose.msra.mxu0 0.0
  %397 = vmatprep.subr.mxu0 0.0
  %398 = vmatpush1.xpose.msra.mxu0 0.0
  %399 = vmatprep.subr.mxu0 0.0
  %400 = vmatpush1.xpose.msra.mxu0 0.0
  %401 = vmatprep.subr.mxu0 0.0
  %402 = vmatpush1.xpose.msra.mxu0 0.0
  %403 = vmatprep.subr.mxu0 0.0
  %404 = vmatpush1.xpose.msra.mxu0 0.0
  %405 = vmatprep.subr.mxu0 0.0
  %406 = vmatpush1.xpose.msra.mxu0 0.0
  %407 = vmatprep.subr.mxu0 0.0
  %408 = vmatpush1.xpose.msra.mxu0 0.0
  %409 = vmatprep.subr.mxu0 0.0
  %410 = vmatpush1.xpose.msra.mxu0 0.0
  %411 = vmatprep.subr.mxu0 0.0
  %412 = vmatpush1.xpose.msra.mxu0 0.0
  %413 = vmatprep.subr.mxu0 0.0
  %414 = vmatpush1.xpose.msra.mxu0 0.0
  %415 = vmatprep.mubr.f32.mxu0 0.0
  %416 = vmatmul.mubr.f32.gmra.mrb[0].mxu0 %v319
  %v417 = vpop.f32.mrb[0].mxu0
  %v418 = vadd.f32 0.0, %v417
  %v419 = vpop.f32.mrb[0].mxu0
  %420 = vmatprep.mubr.f32.mxu0 0.0
  %421 = vmatmul.mubr.f32.gmra.mrb[0].mxu0 %v321
  %v422 = vpop.f32.mrb[0].mxu0
  %v423 = vadd.f32 0.0, %v422
  %v424 = vpop.f32.mrb[0].mxu0
  %425 = vmatprep.mubr.f32.mxu0 0.0
  %426 = vmatmul.mubr.f32.gmra.mrb[0].mxu0 %v323
  %v427 = vpop.f32.mrb[0].mxu0
  %v428 = vadd.f32 0.0, %v427
  %v429 = vpop.f32.mrb[0].mxu0
  %430 = vmatprep.mubr.f32.mxu0 0.0
  %431 = vmatmul.mubr.f32.gmra.mrb[0].mxu0 %v325
  %v432 = vpop.f32.mrb[0].mxu0
  %v433 = vadd.f32 0.0, %v432
  %v434 = vpop.f32.mrb[0].mxu0
  %435 = vmatprep.mubr.f32.mxu0 0.0
  %436 = vmatmul.mubr.f32.gmra.mrb[0].mxu0 %v327
  %v437 = vpop.f32.mrb[0].mxu0
  %v438 = vadd.f32 0.0, %v437
  %v439 = vpop.f32.mrb[0].mxu0
  %440 = vmatprep.mubr.f32.mxu0 0.0
  %441 = vmatmul.mubr.f32.gmra.mrb[0].mxu0 %v329
  %v442 = vpop.f32.mrb[0].mxu0
  %v443 = vadd.f32 0.0, %v442
  %v444 = vpop.f32.mrb[0].mxu0
  %445 = vmatprep.mubr.f32.mxu0 0.0
  %446 = vmatmul.mubr.f32.gmra.mrb[0].mxu0 %v331
  %v447 = vpop.f32.mrb[0].mxu0
  %v448 = vadd.f32 0.0, %v447
  %v449 = vpop.f32.mrb[0].mxu0
  %450 = vmatprep.mubr.f32.mxu0 0.0
  %451 = vmatmul.mubr.f32.gmra.mrb[0].mxu0 %v333
  %v452 = vpop.f32.mrb[0].mxu0
  %v453 = vadd.f32 0.0, %v452
  %v454 = vpop.f32.mrb[0].mxu0
  %455 = vdwg.mxu0
  %vm456 = vcmask 523264
  %v457 = vsel %vm456, %v418, -inf
  %458 = vmax.xlane.f32.xlu0 %v457
  %v459 = vpop.xlane.xlu0 %458
  %v460 = vsel %vm456, %v423, -inf
  %461 = vmax.xlane.f32.xlu0 %v460
  %v462 = vpop.xlane.xlu0 %461
  %v463 = vsel %vm456, %v428, -inf
  %464 = vmax.xlane.f32.xlu0 %v463
  %v465 = vpop.xlane.xlu0 %464
  %v466 = vsel %vm456, %v433, -inf
  %467 = vmax.xlane.f32.xlu0 %v466
  %v468 = vpop.xlane.xlu0 %467
  %v469 = vsel %vm456, %v438, -inf
  %470 = vmax.xlane.f32.xlu0 %v469
  %v471 = vpop.xlane.xlu0 %470
  %v472 = vsel %vm456, %v443, -inf
  %473 = vmax.xlane.f32.xlu0 %v472
  %v474 = vpop.xlane.xlu0 %473
  %v475 = vsel %vm456, %v448, -inf
  %476 = vmax.xlane.f32.xlu0 %v475
  %v477 = vpop.xlane.xlu0 %476
  %v478 = vsel %vm456, %v453, -inf
  %479 = vmax.xlane.f32.xlu0 %v478
  %v480 = vpop.xlane.xlu0 %479
  %v481 = vsub.f32 %v418, %v459
  %v482 = vsub.f32 %v423, %v462
  %v483 = vsub.f32 %v428, %v465
  %v484 = vsub.f32 %v433, %v468
  %v485 = vsub.f32 %v438, %v471
  %v486 = vsub.f32 %v443, %v474
  %v487 = vsub.f32 %v448, %v477
  %v488 = vsub.f32 %v453, %v480
  %v489 = vmul.f32 %v481, 1.442695
  %v490 = vpow.pop %v489
  %v491 = vmul.f32 %v482, 1.442695
  %v492 = vpow.pop %v491
  %v493 = vmul.f32 %v483, 1.442695
  %v494 = vpow.pop %v493
  %v495 = vmul.f32 %v484, 1.442695
  %v496 = vpow.pop %v495
  %v497 = vmul.f32 %v485, 1.442695
  %v498 = vpow.pop %v497
  %v499 = vmul.f32 %v486, 1.442695
  %v500 = vpow.pop %v499
  %v501 = vmul.f32 %v487, 1.442695
  %v502 = vpow.pop %v501
  %v503 = vmul.f32 %v488, 1.442695
  %v504 = vpow.pop %v503
  %v505 = vsel %vm456, %v490, 0.0
  %506 = vadd.xlane.f32.xlu0 %v505
  %v507 = vpop.xlane.xlu0 %506
  %v508 = vsel %vm456, %v492, 0.0
  %509 = vadd.xlane.f32.xlu0 %v508
  %v510 = vpop.xlane.xlu0 %509
  %v511 = vsel %vm456, %v494, 0.0
  %512 = vadd.xlane.f32.xlu0 %v511
  %v513 = vpop.xlane.xlu0 %512
  %v514 = vsel %vm456, %v496, 0.0
  %515 = vadd.xlane.f32.xlu0 %v514
  %v516 = vpop.xlane.xlu0 %515
  %v517 = vsel %vm456, %v498, 0.0
  %518 = vadd.xlane.f32.xlu0 %v517
  %v519 = vpop.xlane.xlu0 %518
  %v520 = vsel %vm456, %v500, 0.0
  %521 = vadd.xlane.f32.xlu0 %v520
  %v522 = vpop.xlane.xlu0 %521
  %v523 = vsel %vm456, %v502, 0.0
  %524 = vadd.xlane.f32.xlu0 %v523
  %v525 = vpop.xlane.xlu0 %524
  %v526 = vsel %vm456, %v504, 0.0
  %527 = vadd.xlane.f32.xlu0 %v526
  %v528 = vpop.xlane.xlu0 %527
  %v529 = vrcp.pop %v507
  %v530 = vrcp.pop %v510
  %v531 = vrcp.pop %v513
  %v532 = vrcp.pop %v516
  %v533 = vrcp.pop %v519
  %v534 = vrcp.pop %v522
  %v535 = vrcp.pop %v525
  %v536 = vrcp.pop %v528
  %v537 = vmul.f32 %v490, %v529
  %v538 = vmul.f32 %v492, %v530
  %v539 = vmul.f32 %v494, %v531
  %v540 = vmul.f32 %v496, %v532
  %v541 = vmul.f32 %v498, %v533
  %v542 = vmul.f32 %v500, %v534
  %v543 = vmul.f32 %v502, %v535
  %v544 = vmul.f32 %v504, %v536
  %545 = vrot.lane.b32.xlu0 %v256, 64
  %v546 = vpop.permute.xlu0 %545
  %547 = vrot.lane.b32.xlu0 %v261, 64
  %v548 = vpop.permute.xlu0 %547
  %549 = vrot.lane.b32.xlu0 %v266, 64
  %v550 = vpop.permute.xlu0 %549
  %551 = vrot.lane.b32.xlu0 %v271, 64
  %v552 = vpop.permute.xlu0 %551
  %553 = vrot.lane.b32.xlu0 %v276, 64
  %v554 = vpop.permute.xlu0 %553
  %555 = vrot.lane.b32.xlu0 %v281, 64
  %v556 = vpop.permute.xlu0 %555
  %557 = vrot.lane.b32.xlu0 %v286, 64
  %v558 = vpop.permute.xlu0 %557
  %559 = vrot.lane.b32.xlu0 %v291, 64
  %v560 = vpop.permute.xlu0 %559
  %v570 = vsel %vm456, %v537, 0
  %v573 = vsel %vm456, %v538, 0
  %v576 = vsel %vm456, %v539, 0
  %v579 = vsel %vm456, %v540, 0
  %v582 = vsel %vm456, %v541, 0
  %v585 = vsel %vm456, %v542, 0
  %v588 = vsel %vm456, %v543, 0
  %v591 = vsel %vm456, %v544, 0
  %593 = vmatprep.subr.mxu0 0.0
  %594 = vmatpush1.msra.mxu0 %v546
  %595 = vmatprep.subr.mxu0 0.0
  %596 = vmatpush1.msra.mxu0 %v548
  %597 = vmatprep.subr.mxu0 0.0
  %598 = vmatpush1.msra.mxu0 %v550
  %599 = vmatprep.subr.mxu0 0.0
  %600 = vmatpush1.msra.mxu0 %v552
  %601 = vmatprep.subr.mxu0 0.0
  %602 = vmatpush1.msra.mxu0 %v554
  %603 = vmatprep.subr.mxu0 0.0
  %604 = vmatpush1.msra.mxu0 %v556
  %605 = vmatprep.subr.mxu0 0.0
  %606 = vmatpush1.msra.mxu0 %v558
  %607 = vmatprep.subr.mxu0 0.0
  %608 = vmatpush1.msra.mxu0 %v560
  %609 = vmatprep.subr.mxu0 0.0
  %610 = vmatpush1.msra.mxu0 0.0
  %611 = vmatprep.subr.mxu0 0.0
  %612 = vmatpush1.msra.mxu0 0.0
  %613 = vmatprep.subr.mxu0 0.0
  %614 = vmatpush1.msra.mxu0 0.0
  %615 = vmatprep.subr.mxu0 0.0
  %616 = vmatpush1.msra.mxu0 0.0
  %617 = vmatprep.subr.mxu0 0.0
  %618 = vmatpush1.msra.mxu0 0.0
  %619 = vmatprep.subr.mxu0 0.0
  %620 = vmatpush1.msra.mxu0 0.0
  %621 = vmatprep.subr.mxu0 0.0
  %622 = vmatpush1.msra.mxu0 0.0
  %623 = vmatprep.subr.mxu0 0.0
  %624 = vmatpush1.msra.mxu0 0.0
  %625 = vmatprep.subr.mxu0 0.0
  %626 = vmatpush1.msra.mxu0 0.0
  %627 = vmatprep.subr.mxu0 0.0
  %628 = vmatpush1.msra.mxu0 0.0
  %629 = vmatprep.subr.mxu0 0.0
  %630 = vmatpush1.msra.mxu0 0.0
  %631 = vmatprep.subr.mxu0 0.0
  %632 = vmatpush1.msra.mxu0 0.0
  %633 = vmatprep.subr.mxu0 0.0
  %634 = vmatpush1.msra.mxu0 0.0
  %635 = vmatprep.subr.mxu0 0.0
  %636 = vmatpush1.msra.mxu0 0.0
  %637 = vmatprep.subr.mxu0 0.0
  %638 = vmatpush1.msra.mxu0 0.0
  %639 = vmatprep.subr.mxu0 0.0
  %640 = vmatpush1.msra.mxu0 0.0
  %641 = vmatprep.subr.mxu0 0.0
  %642 = vmatpush1.msra.mxu0 0.0
  %643 = vmatprep.subr.mxu0 0.0
  %644 = vmatpush1.msra.mxu0 0.0
  %645 = vmatprep.subr.mxu0 0.0
  %646 = vmatpush1.msra.mxu0 0.0
  %647 = vmatprep.subr.mxu0 0.0
  %648 = vmatpush1.msra.mxu0 0.0
  %649 = vmatprep.subr.mxu0 0.0
  %650 = vmatpush1.msra.mxu0 0.0
  %651 = vmatprep.subr.mxu0 0.0
  %652 = vmatpush1.msra.mxu0 0.0
  %653 = vmatprep.subr.mxu0 0.0
  %654 = vmatpush1.msra.mxu0 0.0
  %655 = vmatprep.subr.mxu0 0.0
  %656 = vmatpush1.msra.mxu0 0.0
  %657 = vmatprep.mubr.f32.mxu0 0.0
  %658 = vmatmul.mubr.f32.gmra.mrb[0].mxu0 %v570
  %v659 = vpop.f32.mrb[0].mxu0
  %v660 = vadd.f32 0.0, %v659
  %v661 = vpop.f32.mrb[0].mxu0
  %662 = vmatprep.mubr.f32.mxu0 0.0
  %663 = vmatmul.mubr.f32.gmra.mrb[0].mxu0 %v573
  %v664 = vpop.f32.mrb[0].mxu0
  %v665 = vadd.f32 0.0, %v664
  %v666 = vpop.f32.mrb[0].mxu0
  %667 = vmatprep.mubr.f32.mxu0 0.0
  %668 = vmatmul.mubr.f32.gmra.mrb[0].mxu0 %v576
  %v669 = vpop.f32.mrb[0].mxu0
  %v670 = vadd.f32 0.0, %v669
  %v671 = vpop.f32.mrb[0].mxu0
  %672 = vmatprep.mubr.f32.mxu0 0.0
  %673 = vmatmul.mubr.f32.gmra.mrb[0].mxu0 %v579
  %v674 = vpop.f32.mrb[0].mxu0
  %v675 = vadd.f32 0.0, %v674
  %v676 = vpop.f32.mrb[0].mxu0
  %677 = vmatprep.mubr.f32.mxu0 0.0
  %678 = vmatmul.mubr.f32.gmra.mrb[0].mxu0 %v582
  %v679 = vpop.f32.mrb[0].mxu0
  %v680 = vadd.f32 0.0, %v679
  %v681 = vpop.f32.mrb[0].mxu0
  %682 = vmatprep.mubr.f32.mxu0 0.0
  %683 = vmatmul.mubr.f32.gmra.mrb[0].mxu0 %v585
  %v684 = vpop.f32.mrb[0].mxu0
  %v685 = vadd.f32 0.0, %v684
  %v686 = vpop.f32.mrb[0].mxu0
  %687 = vmatprep.mubr.f32.mxu0 0.0
  %688 = vmatmul.mubr.f32.gmra.mrb[0].mxu0 %v588
  %v689 = vpop.f32.mrb[0].mxu0
  %v690 = vadd.f32 0.0, %v689
  %v691 = vpop.f32.mrb[0].mxu0
  %692 = vmatprep.mubr.f32.mxu0 0.0
  %693 = vmatmul.mubr.f32.gmra.mrb[0].mxu0 %v591
  %v694 = vpop.f32.mrb[0].mxu0
  %v695 = vadd.f32 0.0, %v694
  %v696 = vpop.f32.mrb[0].mxu0
  %697 = vdwg.mxu0
  %698 = vst.msk [vmem:[#allocation2] sm:$0xff] %vm318, %v660
  %699 = vst.msk [vmem:[#allocation2 + $0x8] sm:$0xff] %vm318, %v665
  %700 = vst.msk [vmem:[#allocation2 + $0x10] sm:$0xff] %vm318, %v670
  %701 = vst.msk [vmem:[#allocation2 + $0x18] sm:$0xff] %vm318, %v675
  %702 = vst.msk [vmem:[#allocation2 + $0x20] sm:$0xff] %vm318, %v680
  %703 = vst.msk [vmem:[#allocation2 + $0x28] sm:$0xff] %vm318, %v685
  %704 = vst.msk [vmem:[#allocation2 + $0x30] sm:$0xff] %vm318, %v690
  %705 = vst.msk [vmem:[#allocation2 + $0x38] sm:$0xff] %vm318, %v695
  %706 = vrot.lane.b32.xlu0 %v256, 120
  %v707 = vpop.permute.xlu0 %706
  %708 = vrot.lane.b32.xlu0 %v261, 120
  %v709 = vpop.permute.xlu0 %708
  %710 = vrot.lane.b32.xlu0 %v266, 120
  %v711 = vpop.permute.xlu0 %710
  %712 = vrot.lane.b32.xlu0 %v271, 120
  %v713 = vpop.permute.xlu0 %712
  %714 = vrot.lane.b32.xlu0 %v276, 120
  %v715 = vpop.permute.xlu0 %714
  %716 = vrot.lane.b32.xlu0 %v281, 120
  %v717 = vpop.permute.xlu0 %716
  %718 = vrot.lane.b32.xlu0 %v286, 120
  %v719 = vpop.permute.xlu0 %718
  %720 = vrot.lane.b32.xlu0 %v291, 120
  %v721 = vpop.permute.xlu0 %720
  %722 = vrot.lane.b32.xlu0 %v256, 88
  %v723 = vpop.permute.xlu0 %722
  %724 = vrot.lane.b32.xlu0 %v261, 88
  %v725 = vpop.permute.xlu0 %724
  %726 = vrot.lane.b32.xlu0 %v266, 88
  %v727 = vpop.permute.xlu0 %726
  %728 = vrot.lane.b32.xlu0 %v271, 88
  %v729 = vpop.permute.xlu0 %728
  %730 = vrot.lane.b32.xlu0 %v276, 88
  %v731 = vpop.permute.xlu0 %730
  %732 = vrot.lane.b32.xlu0 %v281, 88
  %v733 = vpop.permute.xlu0 %732
  %734 = vrot.lane.b32.xlu0 %v286, 88
  %v735 = vpop.permute.xlu0 %734
  %736 = vrot.lane.b32.xlu0 %v291, 88
  %v737 = vpop.permute.xlu0 %736
  %v738 = vsel %vm318, %v707, 0
  %v740 = vsel %vm318, %v709, 0
  %v742 = vsel %vm318, %v711, 0
  %v744 = vsel %vm318, %v713, 0
  %v746 = vsel %vm318, %v715, 0
  %v748 = vsel %vm318, %v717, 0
  %v750 = vsel %vm318, %v719, 0
  %v752 = vsel %vm318, %v721, 0
  %v754 = vsel %vm318, %v723, 0
  %v756 = vsel %vm318, %v725, 0
  %v758 = vsel %vm318, %v727, 0
  %v760 = vsel %vm318, %v729, 0
  %v762 = vsel %vm318, %v731, 0
  %v764 = vsel %vm318, %v733, 0
  %v766 = vsel %vm318, %v735, 0
  %v768 = vsel %vm318, %v737, 0
  %770 = vmatprep.subr.mxu0 0.0
  %771 = vmatpush1.xpose.msra.mxu0 %v754
  %772 = vmatprep.subr.mxu0 0.0
  %773 = vmatpush1.xpose.msra.mxu0 %v756
  %774 = vmatprep.subr.mxu0 0.0
  %775 = vmatpush1.xpose.msra.mxu0 %v758
  %776 = vmatprep.subr.mxu0 0.0
  %777 = vmatpush1.xpose.msra.mxu0 %v760
  %778 = vmatprep.subr.mxu0 0.0
  %779 = vmatpush1.xpose.msra.mxu0 %v762
  %780 = vmatprep.subr.mxu0 0.0
  %781 = vmatpush1.xpose.msra.mxu0 %v764
  %782 = vmatprep.subr.mxu0 0.0
  %783 = vmatpush1.xpose.msra.mxu0 %v766
  %784 = vmatprep.subr.mxu0 0.0
  %785 = vmatpush1.xpose.msra.mxu0 %v768
  %786 = vmatprep.subr.mxu0 0.0
  %787 = vmatpush1.xpose.msra.mxu0 0.0
  %788 = vmatprep.subr.mxu0 0.0
  %789 = vmatpush1.xpose.msra.mxu0 0.0
  %790 = vmatprep.subr.mxu0 0.0
  %791 = vmatpush1.xpose.msra.mxu0 0.0
  %792 = vmatprep.subr.mxu0 0.0
  %793 = vmatpush1.xpose.msra.mxu0 0.0
  %794 = vmatprep.subr.mxu0 0.0
  %795 = vmatpush1.xpose.msra.mxu0 0.0
  %796 = vmatprep.subr.mxu0 0.0
  %797 = vmatpush1.xpose.msra.mxu0 0.0
  %798 = vmatprep.subr.mxu0 0.0
  %799 = vmatpush1.xpose.msra.mxu0 0.0
  %800 = vmatprep.subr.mxu0 0.0
  %801 = vmatpush1.xpose.msra.mxu0 0.0
  %802 = vmatprep.subr.mxu0 0.0
  %803 = vmatpush1.xpose.msra.mxu0 0.0
  %804 = vmatprep.subr.mxu0 0.0
  %805 = vmatpush1.xpose.msra.mxu0 0.0
  %806 = vmatprep.subr.mxu0 0.0
  %807 = vmatpush1.xpose.msra.mxu0 0.0
  %808 = vmatprep.subr.mxu0 0.0
  %809 = vmatpush1.xpose.msra.mxu0 0.0
  %810 = vmatprep.subr.mxu0 0.0
  %811 = vmatpush1.xpose.msra.mxu0 0.0
  %812 = vmatprep.subr.mxu0 0.0
  %813 = vmatpush1.xpose.msra.mxu0 0.0
  %814 = vmatprep.subr.mxu0 0.0
  %815 = vmatpush1.xpose.msra.mxu0 0.0
  %816 = vmatprep.subr.mxu0 0.0
  %817 = vmatpush1.xpose.msra.mxu0 0.0
  %818 = vmatprep.subr.mxu0 0.0
  %819 = vmatpush1.xpose.msra.mxu0 0.0
  %820 = vmatprep.subr.mxu0 0.0
  %821 = vmatpush1.xpose.msra.mxu0 0.0
  %822 = vmatprep.subr.mxu0 0.0
  %823 = vmatpush1.xpose.msra.mxu0 0.0
  %824 = vmatprep.subr.mxu0 0.0
  %825 = vmatpush1.xpose.msra.mxu0 0.0
  %826 = vmatprep.subr.mxu0 0.0
  %827 = vmatpush1.xpose.msra.mxu0 0.0
  %828 = vmatprep.subr.mxu0 0.0
  %829 = vmatpush1.xpose.msra.mxu0 0.0
  %830 = vmatprep.subr.mxu0 0.0
  %831 = vmatpush1.xpose.msra.mxu0 0.0
  %832 = vmatprep.subr.mxu0 0.0
  %833 = vmatpush1.xpose.msra.mxu0 0.0
  %834 = vmatprep.mubr.f32.mxu0 0.0
  %835 = vmatmul.mubr.f32.gmra.mrb[0].mxu0 %v738
  %v836 = vpop.f32.mrb[0].mxu0
  %v837 = vadd.f32 0.0, %v836
  %v838 = vpop.f32.mrb[0].mxu0
  %839 = vmatprep.mubr.f32.mxu0 0.0
  %840 = vmatmul.mubr.f32.gmra.mrb[0].mxu0 %v740
  %v841 = vpop.f32.mrb[0].mxu0
  %v842 = vadd.f32 0.0, %v841
  %v843 = vpop.f32.mrb[0].mxu0
  %844 = vmatprep.mubr.f32.mxu0 0.0
  %845 = vmatmul.mubr.f32.gmra.mrb[0].mxu0 %v742
  %v846 = vpop.f32.mrb[0].mxu0
  %v847 = vadd.f32 0.0, %v846
  %v848 = vpop.f32.mrb[0].mxu0
  %849 = vmatprep.mubr.f32.mxu0 0.0
  %850 = vmatmul.mubr.f32.gmra.mrb[0].mxu0 %v744
  %v851 = vpop.f32.mrb[0].mxu0
  %v852 = vadd.f32 0.0, %v851
  %v853 = vpop.f32.mrb[0].mxu0
  %854 = vmatprep.mubr.f32.mxu0 0.0
  %855 = vmatmul.mubr.f32.gmra.mrb[0].mxu0 %v746
  %v856 = vpop.f32.mrb[0].mxu0
  %v857 = vadd.f32 0.0, %v856
  %v858 = vpop.f32.mrb[0].mxu0
  %859 = vmatprep.mubr.f32.mxu0 0.0
  %860 = vmatmul.mubr.f32.gmra.mrb[0].mxu0 %v748
  %v861 = vpop.f32.mrb[0].mxu0
  %v862 = vadd.f32 0.0, %v861
  %v863 = vpop.f32.mrb[0].mxu0
  %864 = vmatprep.mubr.f32.mxu0 0.0
  %865 = vmatmul.mubr.f32.gmra.mrb[0].mxu0 %v750
  %v866 = vpop.f32.mrb[0].mxu0
  %v867 = vadd.f32 0.0, %v866
  %v868 = vpop.f32.mrb[0].mxu0
  %869 = vmatprep.mubr.f32.mxu0 0.0
  %870 = vmatmul.mubr.f32.gmra.mrb[0].mxu0 %v752
  %v871 = vpop.f32.mrb[0].mxu0
  %v872 = vadd.f32 0.0, %v871
  %v873 = vpop.f32.mrb[0].mxu0
  %874 = vdwg.mxu0
  %v875 = vsel %vm456, %v837, -inf
  %876 = vmax.xlane.f32.xlu0 %v875
  %v877 = vpop.xlane.xlu0 %876
  %v878 = vsel %vm456, %v842, -inf
  %879 = vmax.xlane.f32.xlu0 %v878
  %v880 = vpop.xlane.xlu0 %879
  %v881 = vsel %vm456, %v847, -inf
  %882 = vmax.xlane.f32.xlu0 %v881
  %v883 = vpop.xlane.xlu0 %882
  %v884 = vsel %vm456, %v852, -inf
  %885 = vmax.xlane.f32.xlu0 %v884
  %v886 = vpop.xlane.xlu0 %885
  %v887 = vsel %vm456, %v857, -inf
  %888 = vmax.xlane.f32.xlu0 %v887
  %v889 = vpop.xlane.xlu0 %888
  %v890 = vsel %vm456, %v862, -inf
  %891 = vmax.xlane.f32.xlu0 %v890
  %v892 = vpop.xlane.xlu0 %891
  %v893 = vsel %vm456, %v867, -inf
  %894 = vmax.xlane.f32.xlu0 %v893
  %v895 = vpop.xlane.xlu0 %894
  %v896 = vsel %vm456, %v872, -inf
  %897 = vmax.xlane.f32.xlu0 %v896
  %v898 = vpop.xlane.xlu0 %897
  %v899 = vsub.f32 %v837, %v877
  %v900 = vsub.f32 %v842, %v880
  %v901 = vsub.f32 %v847, %v883
  %v902 = vsub.f32 %v852, %v886
  %v903 = vsub.f32 %v857, %v889
  %v904 = vsub.f32 %v862, %v892
  %v905 = vsub.f32 %v867, %v895
  %v906 = vsub.f32 %v872, %v898
  %v907 = vmul.f32 %v899, 1.442695
  %v908 = vpow.pop %v907
  %v909 = vmul.f32 %v900, 1.442695
  %v910 = vpow.pop %v909
  %v911 = vmul.f32 %v901, 1.442695
  %v912 = vpow.pop %v911
  %v913 = vmul.f32 %v902, 1.442695
  %v914 = vpow.pop %v913
  %v915 = vmul.f32 %v903, 1.442695
  %v916 = vpow.pop %v915
  %v917 = vmul.f32 %v904, 1.442695
  %v918 = vpow.pop %v917
  %v919 = vmul.f32 %v905, 1.442695
  %v920 = vpow.pop %v919
  %v921 = vmul.f32 %v906, 1.442695
  %v922 = vpow.pop %v921
  %v923 = vsel %vm456, %v908, 0.0
  %924 = vadd.xlane.f32.xlu0 %v923
  %v925 = vpop.xlane.xlu0 %924
  %v926 = vsel %vm456, %v910, 0.0
  %927 = vadd.xlane.f32.xlu0 %v926
  %v928 = vpop.xlane.xlu0 %927
  %v929 = vsel %vm456, %v912, 0.0
  %930 = vadd.xlane.f32.xlu0 %v929
  %v931 = vpop.xlane.xlu0 %930
  %v932 = vsel %vm456, %v914, 0.0
  %933 = vadd.xlane.f32.xlu0 %v932
  %v934 = vpop.xlane.xlu0 %933
  %v935 = vsel %vm456, %v916, 0.0
  %936 = vadd.xlane.f32.xlu0 %v935
  %v937 = vpop.xlane.xlu0 %936
  %v938 = vsel %vm456, %v918, 0.0
  %939 = vadd.xlane.f32.xlu0 %v938
  %v940 = vpop.xlane.xlu0 %939
  %v941 = vsel %vm456, %v920, 0.0
  %942 = vadd.xlane.f32.xlu0 %v941
  %v943 = vpop.xlane.xlu0 %942
  %v944 = vsel %vm456, %v922, 0.0
  %945 = vadd.xlane.f32.xlu0 %v944
  %v946 = vpop.xlane.xlu0 %945
  %v947 = vrcp.pop %v925
  %v948 = vrcp.pop %v928
  %v949 = vrcp.pop %v931
  %v950 = vrcp.pop %v934
  %v951 = vrcp.pop %v937
  %v952 = vrcp.pop %v940
  %v953 = vrcp.pop %v943
  %v954 = vrcp.pop %v946
  %v955 = vmul.f32 %v908, %v947
  %v956 = vmul.f32 %v910, %v948
  %v957 = vmul.f32 %v912, %v949
  %v958 = vmul.f32 %v914, %v950
  %v959 = vmul.f32 %v916, %v951
  %v960 = vmul.f32 %v918, %v952
  %v961 = vmul.f32 %v920, %v953
  %v962 = vmul.f32 %v922, %v954
  %963 = vrot.lane.b32.xlu0 %v256, 56
  %v964 = vpop.permute.xlu0 %963
  %965 = vrot.lane.b32.xlu0 %v261, 56
  %v966 = vpop.permute.xlu0 %965
  %967 = vrot.lane.b32.xlu0 %v266, 56
  %v968 = vpop.permute.xlu0 %967
  %969 = vrot.lane.b32.xlu0 %v271, 56
  %v970 = vpop.permute.xlu0 %969
  %971 = vrot.lane.b32.xlu0 %v276, 56
  %v972 = vpop.permute.xlu0 %971
  %973 = vrot.lane.b32.xlu0 %v281, 56
  %v974 = vpop.permute.xlu0 %973
  %975 = vrot.lane.b32.xlu0 %v286, 56
  %v976 = vpop.permute.xlu0 %975
  %977 = vrot.lane.b32.xlu0 %v291, 56
  %v978 = vpop.permute.xlu0 %977
  %v988 = vsel %vm456, %v955, 0
  %v991 = vsel %vm456, %v956, 0
  %v994 = vsel %vm456, %v957, 0
  %v997 = vsel %vm456, %v958, 0
  %v1000 = vsel %vm456, %v959, 0
  %v1003 = vsel %vm456, %v960, 0
  %v1006 = vsel %vm456, %v961, 0
  %v1009 = vsel %vm456, %v962, 0
  %1011 = vmatprep.subr.mxu0 0.0
  %1012 = vmatpush1.msra.mxu0 %v964
  %1013 = vmatprep.subr.mxu0 0.0
  %1014 = vmatpush1.msra.mxu0 %v966
  %1015 = vmatprep.subr.mxu0 0.0
  %1016 = vmatpush1.msra.mxu0 %v968
  %1017 = vmatprep.subr.mxu0 0.0
  %1018 = vmatpush1.msra.mxu0 %v970
  %1019 = vmatprep.subr.mxu0 0.0
  %1020 = vmatpush1.msra.mxu0 %v972
  %1021 = vmatprep.subr.mxu0 0.0
  %1022 = vmatpush1.msra.mxu0 %v974
  %1023 = vmatprep.subr.mxu0 0.0
  %1024 = vmatpush1.msra.mxu0 %v976
  %1025 = vmatprep.subr.mxu0 0.0
  %1026 = vmatpush1.msra.mxu0 %v978
  %1027 = vmatprep.subr.mxu0 0.0
  %1028 = vmatpush1.msra.mxu0 0.0
  %1029 = vmatprep.subr.mxu0 0.0
  %1030 = vmatpush1.msra.mxu0 0.0
  %1031 = vmatprep.subr.mxu0 0.0
  %1032 = vmatpush1.msra.mxu0 0.0
  %1033 = vmatprep.subr.mxu0 0.0
  %1034 = vmatpush1.msra.mxu0 0.0
  %1035 = vmatprep.subr.mxu0 0.0
  %1036 = vmatpush1.msra.mxu0 0.0
  %1037 = vmatprep.subr.mxu0 0.0
  %1038 = vmatpush1.msra.mxu0 0.0
  %1039 = vmatprep.subr.mxu0 0.0
  %1040 = vmatpush1.msra.mxu0 0.0
  %1041 = vmatprep.subr.mxu0 0.0
  %1042 = vmatpush1.msra.mxu0 0.0
  %1043 = vmatprep.subr.mxu0 0.0
  %1044 = vmatpush1.msra.mxu0 0.0
  %1045 = vmatprep.subr.mxu0 0.0
  %1046 = vmatpush1.msra.mxu0 0.0
  %1047 = vmatprep.subr.mxu0 0.0
  %1048 = vmatpush1.msra.mxu0 0.0
  %1049 = vmatprep.subr.mxu0 0.0
  %1050 = vmatpush1.msra.mxu0 0.0
  %1051 = vmatprep.subr.mxu0 0.0
  %1052 = vmatpush1.msra.mxu0 0.0
  %1053 = vmatprep.subr.mxu0 0.0
  %1054 = vmatpush1.msra.mxu0 0.0
  %1055 = vmatprep.subr.mxu0 0.0
  %1056 = vmatpush1.msra.mxu0 0.0
  %1057 = vmatprep.subr.mxu0 0.0
  %1058 = vmatpush1.msra.mxu0 0.0
  %1059 = vmatprep.subr.mxu0 0.0
  %1060 = vmatpush1.msra.mxu0 0.0
  %1061 = vmatprep.subr.mxu0 0.0
  %1062 = vmatpush1.msra.mxu0 0.0
  %1063 = vmatprep.subr.mxu0 0.0
  %1064 = vmatpush1.msra.mxu0 0.0
  %1065 = vmatprep.subr.mxu0 0.0
  %1066 = vmatpush1.msra.mxu0 0.0
  %1067 = vmatprep.subr.mxu0 0.0
  %1068 = vmatpush1.msra.mxu0 0.0
  %1069 = vmatprep.subr.mxu0 0.0
  %1070 = vmatpush1.msra.mxu0 0.0
  %1071 = vmatprep.subr.mxu0 0.0
  %1072 = vmatpush1.msra.mxu0 0.0
  %1073 = vmatprep.subr.mxu0 0.0
  %1074 = vmatpush1.msra.mxu0 0.0
  %1075 = vmatprep.mubr.f32.mxu0 0.0
  %1076 = vmatmul.mubr.f32.gmra.mrb[0].mxu0 %v988
  %v1077 = vpop.f32.mrb[0].mxu0
  %v1078 = vadd.f32 0.0, %v1077
  %v1079 = vpop.f32.mrb[0].mxu0
  %1080 = vmatprep.mubr.f32.mxu0 0.0
  %1081 = vmatmul.mubr.f32.gmra.mrb[0].mxu0 %v991
  %v1082 = vpop.f32.mrb[0].mxu0
  %v1083 = vadd.f32 0.0, %v1082
  %v1084 = vpop.f32.mrb[0].mxu0
  %1085 = vmatprep.mubr.f32.mxu0 0.0
  %1086 = vmatmul.mubr.f32.gmra.mrb[0].mxu0 %v994
  %v1087 = vpop.f32.mrb[0].mxu0
  %v1088 = vadd.f32 0.0, %v1087
  %v1089 = vpop.f32.mrb[0].mxu0
  %1090 = vmatprep.mubr.f32.mxu0 0.0
  %1091 = vmatmul.mubr.f32.gmra.mrb[0].mxu0 %v997
  %v1092 = vpop.f32.mrb[0].mxu0
  %v1093 = vadd.f32 0.0, %v1092
  %v1094 = vpop.f32.mrb[0].mxu0
  %1095 = vmatprep.mubr.f32.mxu0 0.0
  %1096 = vmatmul.mubr.f32.gmra.mrb[0].mxu0 %v1000
  %v1097 = vpop.f32.mrb[0].mxu0
  %v1098 = vadd.f32 0.0, %v1097
  %v1099 = vpop.f32.mrb[0].mxu0
  %1100 = vmatprep.mubr.f32.mxu0 0.0
  %1101 = vmatmul.mubr.f32.gmra.mrb[0].mxu0 %v1003
  %v1102 = vpop.f32.mrb[0].mxu0
  %v1103 = vadd.f32 0.0, %v1102
  %v1104 = vpop.f32.mrb[0].mxu0
  %1105 = vmatprep.mubr.f32.mxu0 0.0
  %1106 = vmatmul.mubr.f32.gmra.mrb[0].mxu0 %v1006
  %v1107 = vpop.f32.mrb[0].mxu0
  %v1108 = vadd.f32 0.0, %v1107
  %v1109 = vpop.f32.mrb[0].mxu0
  %1110 = vmatprep.mubr.f32.mxu0 0.0
  %1111 = vmatmul.mubr.f32.gmra.mrb[0].mxu0 %v1009
  %v1112 = vpop.f32.mrb[0].mxu0
  %v1113 = vadd.f32 0.0, %v1112
  %v1114 = vpop.f32.mrb[0].mxu0
  %1115 = vdwg.mxu0
  %1124 = vrot.lane.b32.xlu0 %v1078, 8
  %v1125 = vpop.permute.xlu0 %1124
  %1126 = vrot.lane.b32.xlu0 %v1083, 8
  %v1127 = vpop.permute.xlu0 %1126
  %1128 = vrot.lane.b32.xlu0 %v1088, 8
  %v1129 = vpop.permute.xlu0 %1128
  %1130 = vrot.lane.b32.xlu0 %v1093, 8
  %v1131 = vpop.permute.xlu0 %1130
  %1132 = vrot.lane.b32.xlu0 %v1098, 8
  %v1133 = vpop.permute.xlu0 %1132
  %1134 = vrot.lane.b32.xlu0 %v1103, 8
  %v1135 = vpop.permute.xlu0 %1134
  %1136 = vrot.lane.b32.xlu0 %v1108, 8
  %v1137 = vpop.permute.xlu0 %1136
  %1138 = vrot.lane.b32.xlu0 %v1113, 8
  %v1139 = vpop.permute.xlu0 %1138
  %vm1148 = vcmask 130112
  %1149 = vst.msk [vmem:[#allocation2] sm:$0xff] %vm1148, %v1125
  %1150 = vst.msk [vmem:[#allocation2 + $0x8] sm:$0xff] %vm1148, %v1127
  %1151 = vst.msk [vmem:[#allocation2 + $0x10] sm:$0xff] %vm1148, %v1129
  %1152 = vst.msk [vmem:[#allocation2 + $0x18] sm:$0xff] %vm1148, %v1131
  %1153 = vst.msk [vmem:[#allocation2 + $0x20] sm:$0xff] %vm1148, %v1133
  %1154 = vst.msk [vmem:[#allocation2 + $0x28] sm:$0xff] %vm1148, %v1135
  %1155 = vst.msk [vmem:[#allocation2 + $0x30] sm:$0xff] %vm1148, %v1137
  %1156 = vst.msk [vmem:[#allocation2 + $0x38] sm:$0xff] %vm1148, %v1139
  %1157 = vrot.lane.b32.xlu0 %v256, 112
  %v1158 = vpop.permute.xlu0 %1157
  %1159 = vrot.lane.b32.xlu0 %v261, 112
  %v1160 = vpop.permute.xlu0 %1159
  %1161 = vrot.lane.b32.xlu0 %v266, 112
  %v1162 = vpop.permute.xlu0 %1161
  %1163 = vrot.lane.b32.xlu0 %v271, 112
  %v1164 = vpop.permute.xlu0 %1163
  %1165 = vrot.lane.b32.xlu0 %v276, 112
  %v1166 = vpop.permute.xlu0 %1165
  %1167 = vrot.lane.b32.xlu0 %v281, 112
  %v1168 = vpop.permute.xlu0 %1167
  %1169 = vrot.lane.b32.xlu0 %v286, 112
  %v1170 = vpop.permute.xlu0 %1169
  %1171 = vrot.lane.b32.xlu0 %v291, 112
  %v1172 = vpop.permute.xlu0 %1171
  %1173 = vrot.lane.b32.xlu0 %v256, 80
  %v1174 = vpop.permute.xlu0 %1173
  %1175 = vrot.lane.b32.xlu0 %v261, 80
  %v1176 = vpop.permute.xlu0 %1175
  %1177 = vrot.lane.b32.xlu0 %v266, 80
  %v1178 = vpop.permute.xlu0 %1177
  %1179 = vrot.lane.b32.xlu0 %v271, 80
  %v1180 = vpop.permute.xlu0 %1179
  %1181 = vrot.lane.b32.xlu0 %v276, 80
  %v1182 = vpop.permute.xlu0 %1181
  %1183 = vrot.lane.b32.xlu0 %v281, 80
  %v1184 = vpop.permute.xlu0 %1183
  %1185 = vrot.lane.b32.xlu0 %v286, 80
  %v1186 = vpop.permute.xlu0 %1185
  %1187 = vrot.lane.b32.xlu0 %v291, 80
  %v1188 = vpop.permute.xlu0 %1187
  %v1189 = vsel %vm318, %v1158, 0
  %v1191 = vsel %vm318, %v1160, 0
  %v1193 = vsel %vm318, %v1162, 0
  %v1195 = vsel %vm318, %v1164, 0
  %v1197 = vsel %vm318, %v1166, 0
  %v1199 = vsel %vm318, %v1168, 0
  %v1201 = vsel %vm318, %v1170, 0
  %v1203 = vsel %vm318, %v1172, 0
  %v1205 = vsel %vm318, %v1174, 0
  %v1207 = vsel %vm318, %v1176, 0
  %v1209 = vsel %vm318, %v1178, 0
  %v1211 = vsel %vm318, %v1180, 0
  %v1213 = vsel %vm318, %v1182, 0
  %v1215 = vsel %vm318, %v1184, 0
  %v1217 = vsel %vm318, %v1186, 0
  %v1219 = vsel %vm318, %v1188, 0
  %1221 = vmatprep.subr.mxu0 0.0
  %1222 = vmatpush1.xpose.msra.mxu0 %v1205
  %1223 = vmatprep.subr.mxu0 0.0
  %1224 = vmatpush1.xpose.msra.mxu0 %v1207
  %1225 = vmatprep.subr.mxu0 0.0
  %1226 = vmatpush1.xpose.msra.mxu0 %v1209
  %1227 = vmatprep.subr.mxu0 0.0
  %1228 = vmatpush1.xpose.msra.mxu0 %v1211
  %1229 = vmatprep.subr.mxu0 0.0
  %1230 = vmatpush1.xpose.msra.mxu0 %v1213
  %1231 = vmatprep.subr.mxu0 0.0
  %1232 = vmatpush1.xpose.msra.mxu0 %v1215
  %1233 = vmatprep.subr.mxu0 0.0
  %1234 = vmatpush1.xpose.msra.mxu0 %v1217
  %1235 = vmatprep.subr.mxu0 0.0
  %1236 = vmatpush1.xpose.msra.mxu0 %v1219
  %1237 = vmatprep.subr.mxu0 0.0
  %1238 = vmatpush1.xpose.msra.mxu0 0.0
  %1239 = vmatprep.subr.mxu0 0.0
  %1240 = vmatpush1.xpose.msra.mxu0 0.0
  %1241 = vmatprep.subr.mxu0 0.0
  %1242 = vmatpush1.xpose.msra.mxu0 0.0
  %1243 = vmatprep.subr.mxu0 0.0
  %1244 = vmatpush1.xpose.msra.mxu0 0.0
  %1245 = vmatprep.subr.mxu0 0.0
  %1246 = vmatpush1.xpose.msra.mxu0 0.0
  %1247 = vmatprep.subr.mxu0 0.0
  %1248 = vmatpush1.xpose.msra.mxu0 0.0
  %1249 = vmatprep.subr.mxu0 0.0
  %1250 = vmatpush1.xpose.msra.mxu0 0.0
  %1251 = vmatprep.subr.mxu0 0.0
  %1252 = vmatpush1.xpose.msra.mxu0 0.0
  %1253 = vmatprep.subr.mxu0 0.0
  %1254 = vmatpush1.xpose.msra.mxu0 0.0
  %1255 = vmatprep.subr.mxu0 0.0
  %1256 = vmatpush1.xpose.msra.mxu0 0.0
  %1257 = vmatprep.subr.mxu0 0.0
  %1258 = vmatpush1.xpose.msra.mxu0 0.0
  %1259 = vmatprep.subr.mxu0 0.0
  %1260 = vmatpush1.xpose.msra.mxu0 0.0
  %1261 = vmatprep.subr.mxu0 0.0
  %1262 = vmatpush1.xpose.msra.mxu0 0.0
  %1263 = vmatprep.subr.mxu0 0.0
  %1264 = vmatpush1.xpose.msra.mxu0 0.0
  %1265 = vmatprep.subr.mxu0 0.0
  %1266 = vmatpush1.xpose.msra.mxu0 0.0
  %1267 = vmatprep.subr.mxu0 0.0
  %1268 = vmatpush1.xpose.msra.mxu0 0.0
  %1269 = vmatprep.subr.mxu0 0.0
  %1270 = vmatpush1.xpose.msra.mxu0 0.0
  %1271 = vmatprep.subr.mxu0 0.0
  %1272 = vmatpush1.xpose.msra.mxu0 0.0
  %1273 = vmatprep.subr.mxu0 0.0
  %1274 = vmatpush1.xpose.msra.mxu0 0.0
  %1275 = vmatprep.subr.mxu0 0.0
  %1276 = vmatpush1.xpose.msra.mxu0 0.0
  %1277 = vmatprep.subr.mxu0 0.0
  %1278 = vmatpush1.xpose.msra.mxu0 0.0
  %1279 = vmatprep.subr.mxu0 0.0
  %1280 = vmatpush1.xpose.msra.mxu0 0.0
  %1281 = vmatprep.subr.mxu0 0.0
  %1282 = vmatpush1.xpose.msra.mxu0 0.0
  %1283 = vmatprep.subr.mxu0 0.0
  %1284 = vmatpush1.xpose.msra.mxu0 0.0
  %1285 = vmatprep.mubr.f32.mxu0 0.0
  %1286 = vmatmul.mubr.f32.gmra.mrb[0].mxu0 %v1189
  %v1287 = vpop.f32.mrb[0].mxu0
  %v1288 = vadd.f32 0.0, %v1287
  %v1289 = vpop.f32.mrb[0].mxu0
  %1290 = vmatprep.mubr.f32.mxu0 0.0
  %1291 = vmatmul.mubr.f32.gmra.mrb[0].mxu0 %v1191
  %v1292 = vpop.f32.mrb[0].mxu0
  %v1293 = vadd.f32 0.0, %v1292
  %v1294 = vpop.f32.mrb[0].mxu0
  %1295 = vmatprep.mubr.f32.mxu0 0.0
  %1296 = vmatmul.mubr.f32.gmra.mrb[0].mxu0 %v1193
  %v1297 = vpop.f32.mrb[0].mxu0
  %v1298 = vadd.f32 0.0, %v1297
  %v1299 = vpop.f32.mrb[0].mxu0
  %1300 = vmatprep.mubr.f32.mxu0 0.0
  %1301 = vmatmul.mubr.f32.gmra.mrb[0].mxu0 %v1195
  %v1302 = vpop.f32.mrb[0].mxu0
  %v1303 = vadd.f32 0.0, %v1302
  %v1304 = vpop.f32.mrb[0].mxu0
  %1305 = vmatprep.mubr.f32.mxu0 0.0
  %1306 = vmatmul.mubr.f32.gmra.mrb[0].mxu0 %v1197
  %v1307 = vpop.f32.mrb[0].mxu0
  %v1308 = vadd.f32 0.0, %v1307
  %v1309 = vpop.f32.mrb[0].mxu0
  %1310 = vmatprep.mubr.f32.mxu0 0.0
  %1311 = vmatmul.mubr.f32.gmra.mrb[0].mxu0 %v1199
  %v1312 = vpop.f32.mrb[0].mxu0
  %v1313 = vadd.f32 0.0, %v1312
  %v1314 = vpop.f32.mrb[0].mxu0
  %1315 = vmatprep.mubr.f32.mxu0 0.0
  %1316 = vmatmul.mubr.f32.gmra.mrb[0].mxu0 %v1201
  %v1317 = vpop.f32.mrb[0].mxu0
  %v1318 = vadd.f32 0.0, %v1317
  %v1319 = vpop.f32.mrb[0].mxu0
  %1320 = vmatprep.mubr.f32.mxu0 0.0
  %1321 = vmatmul.mubr.f32.gmra.mrb[0].mxu0 %v1203
  %v1322 = vpop.f32.mrb[0].mxu0
  %v1323 = vadd.f32 0.0, %v1322
  %v1324 = vpop.f32.mrb[0].mxu0
  %1325 = vdwg.mxu0
  %v1326 = vsel %vm456, %v1288, -inf
  %1327 = vmax.xlane.f32.xlu0 %v1326
  %v1328 = vpop.xlane.xlu0 %1327
  %v1329 = vsel %vm456, %v1293, -inf
  %1330 = vmax.xlane.f32.xlu0 %v1329
  %v1331 = vpop.xlane.xlu0 %1330
  %v1332 = vsel %vm456, %v1298, -inf
  %1333 = vmax.xlane.f32.xlu0 %v1332
  %v1334 = vpop.xlane.xlu0 %1333
  %v1335 = vsel %vm456, %v1303, -inf
  %1336 = vmax.xlane.f32.xlu0 %v1335
  %v1337 = vpop.xlane.xlu0 %1336
  %v1338 = vsel %vm456, %v1308, -inf
  %1339 = vmax.xlane.f32.xlu0 %v1338
  %v1340 = vpop.xlane.xlu0 %1339
  %v1341 = vsel %vm456, %v1313, -inf
  %1342 = vmax.xlane.f32.xlu0 %v1341
  %v1343 = vpop.xlane.xlu0 %1342
  %v1344 = vsel %vm456, %v1318, -inf
  %1345 = vmax.xlane.f32.xlu0 %v1344
  %v1346 = vpop.xlane.xlu0 %1345
  %v1347 = vsel %vm456, %v1323, -inf
  %1348 = vmax.xlane.f32.xlu0 %v1347
  %v1349 = vpop.xlane.xlu0 %1348
  %v1350 = vsub.f32 %v1288, %v1328
  %v1351 = vsub.f32 %v1293, %v1331
  %v1352 = vsub.f32 %v1298, %v1334
  %v1353 = vsub.f32 %v1303, %v1337
  %v1354 = vsub.f32 %v1308, %v1340
  %v1355 = vsub.f32 %v1313, %v1343
  %v1356 = vsub.f32 %v1318, %v1346
  %v1357 = vsub.f32 %v1323, %v1349
  %v1358 = vmul.f32 %v1350, 1.442695
  %v1359 = vpow.pop %v1358
  %v1360 = vmul.f32 %v1351, 1.442695
  %v1361 = vpow.pop %v1360
  %v1362 = vmul.f32 %v1352, 1.442695
  %v1363 = vpow.pop %v1362
  %v1364 = vmul.f32 %v1353, 1.442695
  %v1365 = vpow.pop %v1364
  %v1366 = vmul.f32 %v1354, 1.442695
  %v1367 = vpow.pop %v1366
  %v1368 = vmul.f32 %v1355, 1.442695
  %v1369 = vpow.pop %v1368
  %v1370 = vmul.f32 %v1356, 1.442695
  %v1371 = vpow.pop %v1370
  %v1372 = vmul.f32 %v1357, 1.442695
  %v1373 = vpow.pop %v1372
  %v1374 = vsel %vm456, %v1359, 0.0
  %1375 = vadd.xlane.f32.xlu0 %v1374
  %v1376 = vpop.xlane.xlu0 %1375
  %v1377 = vsel %vm456, %v1361, 0.0
  %1378 = vadd.xlane.f32.xlu0 %v1377
  %v1379 = vpop.xlane.xlu0 %1378
  %v1380 = vsel %vm456, %v1363, 0.0
  %1381 = vadd.xlane.f32.xlu0 %v1380
  %v1382 = vpop.xlane.xlu0 %1381
  %v1383 = vsel %vm456, %v1365, 0.0
  %1384 = vadd.xlane.f32.xlu0 %v1383
  %v1385 = vpop.xlane.xlu0 %1384
  %v1386 = vsel %vm456, %v1367, 0.0
  %1387 = vadd.xlane.f32.xlu0 %v1386
  %v1388 = vpop.xlane.xlu0 %1387
  %v1389 = vsel %vm456, %v1369, 0.0
  %1390 = vadd.xlane.f32.xlu0 %v1389
  %v1391 = vpop.xlane.xlu0 %1390
  %v1392 = vsel %vm456, %v1371, 0.0
  %1393 = vadd.xlane.f32.xlu0 %v1392
  %v1394 = vpop.xlane.xlu0 %1393
  %v1395 = vsel %vm456, %v1373, 0.0
  %1396 = vadd.xlane.f32.xlu0 %v1395
  %v1397 = vpop.xlane.xlu0 %1396
  %v1398 = vrcp.pop %v1376
  %v1399 = vrcp.pop %v1379
  %v1400 = vrcp.pop %v1382
  %v1401 = vrcp.pop %v1385
  %v1402 = vrcp.pop %v1388
  %v1403 = vrcp.pop %v1391
  %v1404 = vrcp.pop %v1394
  %v1405 = vrcp.pop %v1397
  %v1406 = vmul.f32 %v1359, %v1398
  %v1407 = vmul.f32 %v1361, %v1399
  %v1408 = vmul.f32 %v1363, %v1400
  %v1409 = vmul.f32 %v1365, %v1401
  %v1410 = vmul.f32 %v1367, %v1402
  %v1411 = vmul.f32 %v1369, %v1403
  %v1412 = vmul.f32 %v1371, %v1404
  %v1413 = vmul.f32 %v1373, %v1405
  %1414 = vrot.lane.b32.xlu0 %v256, 48
  %v1415 = vpop.permute.xlu0 %1414
  %1416 = vrot.lane.b32.xlu0 %v261, 48
  %v1417 = vpop.permute.xlu0 %1416
  %1418 = vrot.lane.b32.xlu0 %v266, 48
  %v1419 = vpop.permute.xlu0 %1418
  %1420 = vrot.lane.b32.xlu0 %v271, 48
  %v1421 = vpop.permute.xlu0 %1420
  %1422 = vrot.lane.b32.xlu0 %v276, 48
  %v1423 = vpop.permute.xlu0 %1422
  %1424 = vrot.lane.b32.xlu0 %v281, 48
  %v1425 = vpop.permute.xlu0 %1424
  %1426 = vrot.lane.b32.xlu0 %v286, 48
  %v1427 = vpop.permute.xlu0 %1426
  %1428 = vrot.lane.b32.xlu0 %v291, 48
  %v1429 = vpop.permute.xlu0 %1428
  %v1439 = vsel %vm456, %v1406, 0
  %v1442 = vsel %vm456, %v1407, 0
  %v1445 = vsel %vm456, %v1408, 0
  %v1448 = vsel %vm456, %v1409, 0
  %v1451 = vsel %vm456, %v1410, 0
  %v1454 = vsel %vm456, %v1411, 0
  %v1457 = vsel %vm456, %v1412, 0
  %v1460 = vsel %vm456, %v1413, 0
  %1462 = vmatprep.subr.mxu0 0.0
  %1463 = vmatpush1.msra.mxu0 %v1415
  %1464 = vmatprep.subr.mxu0 0.0
  %1465 = vmatpush1.msra.mxu0 %v1417
  %1466 = vmatprep.subr.mxu0 0.0
  %1467 = vmatpush1.msra.mxu0 %v1419
  %1468 = vmatprep.subr.mxu0 0.0
  %1469 = vmatpush1.msra.mxu0 %v1421
  %1470 = vmatprep.subr.mxu0 0.0
  %1471 = vmatpush1.msra.mxu0 %v1423
  %1472 = vmatprep.subr.mxu0 0.0
  %1473 = vmatpush1.msra.mxu0 %v1425
  %1474 = vmatprep.subr.mxu0 0.0
  %1475 = vmatpush1.msra.mxu0 %v1427
  %1476 = vmatprep.subr.mxu0 0.0
  %1477 = vmatpush1.msra.mxu0 %v1429
  %1478 = vmatprep.subr.mxu0 0.0
  %1479 = vmatpush1.msra.mxu0 0.0
  %1480 = vmatprep.subr.mxu0 0.0
  %1481 = vmatpush1.msra.mxu0 0.0
  %1482 = vmatprep.subr.mxu0 0.0
  %1483 = vmatpush1.msra.mxu0 0.0
  %1484 = vmatprep.subr.mxu0 0.0
  %1485 = vmatpush1.msra.mxu0 0.0
  %1486 = vmatprep.subr.mxu0 0.0
  %1487 = vmatpush1.msra.mxu0 0.0
  %1488 = vmatprep.subr.mxu0 0.0
  %1489 = vmatpush1.msra.mxu0 0.0
  %1490 = vmatprep.subr.mxu0 0.0
  %1491 = vmatpush1.msra.mxu0 0.0
  %1492 = vmatprep.subr.mxu0 0.0
  %1493 = vmatpush1.msra.mxu0 0.0
  %1494 = vmatprep.subr.mxu0 0.0
  %1495 = vmatpush1.msra.mxu0 0.0
  %1496 = vmatprep.subr.mxu0 0.0
  %1497 = vmatpush1.msra.mxu0 0.0
  %1498 = vmatprep.subr.mxu0 0.0
  %1499 = vmatpush1.msra.mxu0 0.0
  %1500 = vmatprep.subr.mxu0 0.0
  %1501 = vmatpush1.msra.mxu0 0.0
  %1502 = vmatprep.subr.mxu0 0.0
  %1503 = vmatpush1.msra.mxu0 0.0
  %1504 = vmatprep.subr.mxu0 0.0
  %1505 = vmatpush1.msra.mxu0 0.0
  %1506 = vmatprep.subr.mxu0 0.0
  %1507 = vmatpush1.msra.mxu0 0.0
  %1508 = vmatprep.subr.mxu0 0.0
  %1509 = vmatpush1.msra.mxu0 0.0
  %1510 = vmatprep.subr.mxu0 0.0
  %1511 = vmatpush1.msra.mxu0 0.0
  %1512 = vmatprep.subr.mxu0 0.0
  %1513 = vmatpush1.msra.mxu0 0.0
  %1514 = vmatprep.subr.mxu0 0.0
  %1515 = vmatpush1.msra.mxu0 0.0
  %1516 = vmatprep.subr.mxu0 0.0
  %1517 = vmatpush1.msra.mxu0 0.0
  %1518 = vmatprep.subr.mxu0 0.0
  %1519 = vmatpush1.msra.mxu0 0.0
  %1520 = vmatprep.subr.mxu0 0.0
  %1521 = vmatpush1.msra.mxu0 0.0
  %1522 = vmatprep.subr.mxu0 0.0
  %1523 = vmatpush1.msra.mxu0 0.0
  %1524 = vmatprep.subr.mxu0 0.0
  %1525 = vmatpush1.msra.mxu0 0.0
  %1526 = vmatprep.mubr.f32.mxu0 0.0
  %1527 = vmatmul.mubr.f32.gmra.mrb[0].mxu0 %v1439
  %v1528 = vpop.f32.mrb[0].mxu0
  %v1529 = vadd.f32 0.0, %v1528
  %v1530 = vpop.f32.mrb[0].mxu0
  %1531 = vmatprep.mubr.f32.mxu0 0.0
  %1532 = vmatmul.mubr.f32.gmra.mrb[0].mxu0 %v1442
  %v1533 = vpop.f32.mrb[0].mxu0
  %v1534 = vadd.f32 0.0, %v1533
  %v1535 = vpop.f32.mrb[0].mxu0
  %1536 = vmatprep.mubr.f32.mxu0 0.0
  %1537 = vmatmul.mubr.f32.gmra.mrb[0].mxu0 %v1445
  %v1538 = vpop.f32.mrb[0].mxu0
  %v1539 = vadd.f32 0.0, %v1538
  %v1540 = vpop.f32.mrb[0].mxu0
  %1541 = vmatprep.mubr.f32.mxu0 0.0
  %1542 = vmatmul.mubr.f32.gmra.mrb[0].mxu0 %v1448
  %v1543 = vpop.f32.mrb[0].mxu0
  %v1544 = vadd.f32 0.0, %v1543
  %v1545 = vpop.f32.mrb[0].mxu0
  %1546 = vmatprep.mubr.f32.mxu0 0.0
  %1547 = vmatmul.mubr.f32.gmra.mrb[0].mxu0 %v1451
  %v1548 = vpop.f32.mrb[0].mxu0
  %v1549 = vadd.f32 0.0, %v1548
  %v1550 = vpop.f32.mrb[0].mxu0
  %1551 = vmatprep.mubr.f32.mxu0 0.0
  %1552 = vmatmul.mubr.f32.gmra.mrb[0].mxu0 %v1454
  %v1553 = vpop.f32.mrb[0].mxu0
  %v1554 = vadd.f32 0.0, %v1553
  %v1555 = vpop.f32.mrb[0].mxu0
  %1556 = vmatprep.mubr.f32.mxu0 0.0
  %1557 = vmatmul.mubr.f32.gmra.mrb[0].mxu0 %v1457
  %v1558 = vpop.f32.mrb[0].mxu0
  %v1559 = vadd.f32 0.0, %v1558
  %v1560 = vpop.f32.mrb[0].mxu0
  %1561 = vmatprep.mubr.f32.mxu0 0.0
  %1562 = vmatmul.mubr.f32.gmra.mrb[0].mxu0 %v1460
  %v1563 = vpop.f32.mrb[0].mxu0
  %v1564 = vadd.f32 0.0, %v1563
  %v1565 = vpop.f32.mrb[0].mxu0
  %1566 = vdwg.mxu0
  %1575 = vrot.lane.b32.xlu0 %v1529, 16
  %v1576 = vpop.permute.xlu0 %1575
  %1577 = vrot.lane.b32.xlu0 %v1534, 16
  %v1578 = vpop.permute.xlu0 %1577
  %1579 = vrot.lane.b32.xlu0 %v1539, 16
  %v1580 = vpop.permute.xlu0 %1579
  %1581 = vrot.lane.b32.xlu0 %v1544, 16
  %v1582 = vpop.permute.xlu0 %1581
  %1583 = vrot.lane.b32.xlu0 %v1549, 16
  %v1584 = vpop.permute.xlu0 %1583
  %1585 = vrot.lane.b32.xlu0 %v1554, 16
  %v1586 = vpop.permute.xlu0 %1585
  %1587 = vrot.lane.b32.xlu0 %v1559, 16
  %v1588 = vpop.permute.xlu0 %1587
  %1589 = vrot.lane.b32.xlu0 %v1564, 16
  %v1590 = vpop.permute.xlu0 %1589
  %vm1599 = vcmask 195712
  %1600 = vst.msk [vmem:[#allocation2] sm:$0xff] %vm1599, %v1576
  %1601 = vst.msk [vmem:[#allocation2 + $0x8] sm:$0xff] %vm1599, %v1578
  %1602 = vst.msk [vmem:[#allocation2 + $0x10] sm:$0xff] %vm1599, %v1580
  %1603 = vst.msk [vmem:[#allocation2 + $0x18] sm:$0xff] %vm1599, %v1582
  %1604 = vst.msk [vmem:[#allocation2 + $0x20] sm:$0xff] %vm1599, %v1584
  %1605 = vst.msk [vmem:[#allocation2 + $0x28] sm:$0xff] %vm1599, %v1586
  %1606 = vst.msk [vmem:[#allocation2 + $0x30] sm:$0xff] %vm1599, %v1588
  %1607 = vst.msk [vmem:[#allocation2 + $0x38] sm:$0xff] %vm1599, %v1590
  %1608 = vrot.lane.b32.xlu0 %v256, 104
  %v1609 = vpop.permute.xlu0 %1608
  %1610 = vrot.lane.b32.xlu0 %v261, 104
  %v1611 = vpop.permute.xlu0 %1610
  %1612 = vrot.lane.b32.xlu0 %v266, 104
  %v1613 = vpop.permute.xlu0 %1612
  %1614 = vrot.lane.b32.xlu0 %v271, 104
  %v1615 = vpop.permute.xlu0 %1614
  %1616 = vrot.lane.b32.xlu0 %v276, 104
  %v1617 = vpop.permute.xlu0 %1616
  %1618 = vrot.lane.b32.xlu0 %v281, 104
  %v1619 = vpop.permute.xlu0 %1618
  %1620 = vrot.lane.b32.xlu0 %v286, 104
  %v1621 = vpop.permute.xlu0 %1620
  %1622 = vrot.lane.b32.xlu0 %v291, 104
  %v1623 = vpop.permute.xlu0 %1622
  %1624 = vrot.lane.b32.xlu0 %v256, 72
  %v1625 = vpop.permute.xlu0 %1624
  %1626 = vrot.lane.b32.xlu0 %v261, 72
  %v1627 = vpop.permute.xlu0 %1626
  %1628 = vrot.lane.b32.xlu0 %v266, 72
  %v1629 = vpop.permute.xlu0 %1628
  %1630 = vrot.lane.b32.xlu0 %v271, 72
  %v1631 = vpop.permute.xlu0 %1630
  %1632 = vrot.lane.b32.xlu0 %v276, 72
  %v1633 = vpop.permute.xlu0 %1632
  %1634 = vrot.lane.b32.xlu0 %v281, 72
  %v1635 = vpop.permute.xlu0 %1634
  %1636 = vrot.lane.b32.xlu0 %v286, 72
  %v1637 = vpop.permute.xlu0 %1636
  %1638 = vrot.lane.b32.xlu0 %v291, 72
  %v1639 = vpop.permute.xlu0 %1638
  %v1640 = vsel %vm318, %v1609, 0
  %v1642 = vsel %vm318, %v1611, 0
  %v1644 = vsel %vm318, %v1613, 0
  %v1646 = vsel %vm318, %v1615, 0
  %v1648 = vsel %vm318, %v1617, 0
  %v1650 = vsel %vm318, %v1619, 0
  %v1652 = vsel %vm318, %v1621, 0
  %v1654 = vsel %vm318, %v1623, 0
  %v1656 = vsel %vm318, %v1625, 0
  %v1658 = vsel %vm318, %v1627, 0
  %v1660 = vsel %vm318, %v1629, 0
  %v1662 = vsel %vm318, %v1631, 0
  %v1664 = vsel %vm318, %v1633, 0
  %v1666 = vsel %vm318, %v1635, 0
  %v1668 = vsel %vm318, %v1637, 0
  %v1670 = vsel %vm318, %v1639, 0
  %1672 = vmatprep.subr.mxu0 0.0
  %1673 = vmatpush1.xpose.msra.mxu0 %v1656
  %1674 = vmatprep.subr.mxu0 0.0
  %1675 = vmatpush1.xpose.msra.mxu0 %v1658
  %1676 = vmatprep.subr.mxu0 0.0
  %1677 = vmatpush1.xpose.msra.mxu0 %v1660
  %1678 = vmatprep.subr.mxu0 0.0
  %1679 = vmatpush1.xpose.msra.mxu0 %v1662
  %1680 = vmatprep.subr.mxu0 0.0
  %1681 = vmatpush1.xpose.msra.mxu0 %v1664
  %1682 = vmatprep.subr.mxu0 0.0
  %1683 = vmatpush1.xpose.msra.mxu0 %v1666
  %1684 = vmatprep.subr.mxu0 0.0
  %1685 = vmatpush1.xpose.msra.mxu0 %v1668
  %1686 = vmatprep.subr.mxu0 0.0
  %1687 = vmatpush1.xpose.msra.mxu0 %v1670
  %1688 = vmatprep.subr.mxu0 0.0
  %1689 = vmatpush1.xpose.msra.mxu0 0.0
  %1690 = vmatprep.subr.mxu0 0.0
  %1691 = vmatpush1.xpose.msra.mxu0 0.0
  %1692 = vmatprep.subr.mxu0 0.0
  %1693 = vmatpush1.xpose.msra.mxu0 0.0
  %1694 = vmatprep.subr.mxu0 0.0
  %1695 = vmatpush1.xpose.msra.mxu0 0.0
  %1696 = vmatprep.subr.mxu0 0.0
  %1697 = vmatpush1.xpose.msra.mxu0 0.0
  %1698 = vmatprep.subr.mxu0 0.0
  %1699 = vmatpush1.xpose.msra.mxu0 0.0
  %1700 = vmatprep.subr.mxu0 0.0
  %1701 = vmatpush1.xpose.msra.mxu0 0.0
  %1702 = vmatprep.subr.mxu0 0.0
  %1703 = vmatpush1.xpose.msra.mxu0 0.0
  %1704 = vmatprep.subr.mxu0 0.0
  %1705 = vmatpush1.xpose.msra.mxu0 0.0
  %1706 = vmatprep.subr.mxu0 0.0
  %1707 = vmatpush1.xpose.msra.mxu0 0.0
  %1708 = vmatprep.subr.mxu0 0.0
  %1709 = vmatpush1.xpose.msra.mxu0 0.0
  %1710 = vmatprep.subr.mxu0 0.0
  %1711 = vmatpush1.xpose.msra.mxu0 0.0
  %1712 = vmatprep.subr.mxu0 0.0
  %1713 = vmatpush1.xpose.msra.mxu0 0.0
  %1714 = vmatprep.subr.mxu0 0.0
  %1715 = vmatpush1.xpose.msra.mxu0 0.0
  %1716 = vmatprep.subr.mxu0 0.0
  %1717 = vmatpush1.xpose.msra.mxu0 0.0
  %1718 = vmatprep.subr.mxu0 0.0
  %1719 = vmatpush1.xpose.msra.mxu0 0.0
  %1720 = vmatprep.subr.mxu0 0.0
  %1721 = vmatpush1.xpose.msra.mxu0 0.0
  %1722 = vmatprep.subr.mxu0 0.0
  %1723 = vmatpush1.xpose.msra.mxu0 0.0
  %1724 = vmatprep.subr.mxu0 0.0
  %1725 = vmatpush1.xpose.msra.mxu0 0.0
  %1726 = vmatprep.subr.mxu0 0.0
  %1727 = vmatpush1.xpose.msra.mxu0 0.0
  %1728 = vmatprep.subr.mxu0 0.0
  %1729 = vmatpush1.xpose.msra.mxu0 0.0
  %1730 = vmatprep.subr.mxu0 0.0
  %1731 = vmatpush1.xpose.msra.mxu0 0.0
  %1732 = vmatprep.subr.mxu0 0.0
  %1733 = vmatpush1.xpose.msra.mxu0 0.0
  %1734 = vmatprep.subr.mxu0 0.0
  %1735 = vmatpush1.xpose.msra.mxu0 0.0
  %1736 = vmatprep.mubr.f32.mxu0 0.0
  %1737 = vmatmul.mubr.f32.gmra.mrb[0].mxu0 %v1640
  %v1738 = vpop.f32.mrb[0].mxu0
  %v1739 = vadd.f32 0.0, %v1738
  %v1740 = vpop.f32.mrb[0].mxu0
  %1741 = vmatprep.mubr.f32.mxu0 0.0
  %1742 = vmatmul.mubr.f32.gmra.mrb[0].mxu0 %v1642
  %v1743 = vpop.f32.mrb[0].mxu0
  %v1744 = vadd.f32 0.0, %v1743
  %v1745 = vpop.f32.mrb[0].mxu0
  %1746 = vmatprep.mubr.f32.mxu0 0.0
  %1747 = vmatmul.mubr.f32.gmra.mrb[0].mxu0 %v1644
  %v1748 = vpop.f32.mrb[0].mxu0
  %v1749 = vadd.f32 0.0, %v1748
  %v1750 = vpop.f32.mrb[0].mxu0
  %1751 = vmatprep.mubr.f32.mxu0 0.0
  %1752 = vmatmul.mubr.f32.gmra.mrb[0].mxu0 %v1646
  %v1753 = vpop.f32.mrb[0].mxu0
  %v1754 = vadd.f32 0.0, %v1753
  %v1755 = vpop.f32.mrb[0].mxu0
  %1756 = vmatprep.mubr.f32.mxu0 0.0
  %1757 = vmatmul.mubr.f32.gmra.mrb[0].mxu0 %v1648
  %v1758 = vpop.f32.mrb[0].mxu0
  %v1759 = vadd.f32 0.0, %v1758
  %v1760 = vpop.f32.mrb[0].mxu0
  %1761 = vmatprep.mubr.f32.mxu0 0.0
  %1762 = vmatmul.mubr.f32.gmra.mrb[0].mxu0 %v1650
  %v1763 = vpop.f32.mrb[0].mxu0
  %v1764 = vadd.f32 0.0, %v1763
  %v1765 = vpop.f32.mrb[0].mxu0
  %1766 = vmatprep.mubr.f32.mxu0 0.0
  %1767 = vmatmul.mubr.f32.gmra.mrb[0].mxu0 %v1652
  %v1768 = vpop.f32.mrb[0].mxu0
  %v1769 = vadd.f32 0.0, %v1768
  %v1770 = vpop.f32.mrb[0].mxu0
  %1771 = vmatprep.mubr.f32.mxu0 0.0
  %1772 = vmatmul.mubr.f32.gmra.mrb[0].mxu0 %v1654
  %v1773 = vpop.f32.mrb[0].mxu0
  %v1774 = vadd.f32 0.0, %v1773
  %v1775 = vpop.f32.mrb[0].mxu0
  %1776 = vdwg.mxu0
  %v1777 = vsel %vm456, %v1739, -inf
  %1778 = vmax.xlane.f32.xlu0 %v1777
  %v1779 = vpop.xlane.xlu0 %1778
  %v1780 = vsel %vm456, %v1744, -inf
  %1781 = vmax.xlane.f32.xlu0 %v1780
  %v1782 = vpop.xlane.xlu0 %1781
  %v1783 = vsel %vm456, %v1749, -inf
  %1784 = vmax.xlane.f32.xlu0 %v1783
  %v1785 = vpop.xlane.xlu0 %1784
  %v1786 = vsel %vm456, %v1754, -inf
  %1787 = vmax.xlane.f32.xlu0 %v1786
  %v1788 = vpop.xlane.xlu0 %1787
  %v1789 = vsel %vm456, %v1759, -inf
  %1790 = vmax.xlane.f32.xlu0 %v1789
  %v1791 = vpop.xlane.xlu0 %1790
  %v1792 = vsel %vm456, %v1764, -inf
  %1793 = vmax.xlane.f32.xlu0 %v1792
  %v1794 = vpop.xlane.xlu0 %1793
  %v1795 = vsel %vm456, %v1769, -inf
  %1796 = vmax.xlane.f32.xlu0 %v1795
  %v1797 = vpop.xlane.xlu0 %1796
  %v1798 = vsel %vm456, %v1774, -inf
  %1799 = vmax.xlane.f32.xlu0 %v1798
  %v1800 = vpop.xlane.xlu0 %1799
  %v1801 = vsub.f32 %v1739, %v1779
  %v1802 = vsub.f32 %v1744, %v1782
  %v1803 = vsub.f32 %v1749, %v1785
  %v1804 = vsub.f32 %v1754, %v1788
  %v1805 = vsub.f32 %v1759, %v1791
  %v1806 = vsub.f32 %v1764, %v1794
  %v1807 = vsub.f32 %v1769, %v1797
  %v1808 = vsub.f32 %v1774, %v1800
  %v1809 = vmul.f32 %v1801, 1.442695
  %v1810 = vpow.pop %v1809
  %v1811 = vmul.f32 %v1802, 1.442695
  %v1812 = vpow.pop %v1811
  %v1813 = vmul.f32 %v1803, 1.442695
  %v1814 = vpow.pop %v1813
  %v1815 = vmul.f32 %v1804, 1.442695
  %v1816 = vpow.pop %v1815
  %v1817 = vmul.f32 %v1805, 1.442695
  %v1818 = vpow.pop %v1817
  %v1819 = vmul.f32 %v1806, 1.442695
  %v1820 = vpow.pop %v1819
  %v1821 = vmul.f32 %v1807, 1.442695
  %v1822 = vpow.pop %v1821
  %v1823 = vmul.f32 %v1808, 1.442695
  %v1824 = vpow.pop %v1823
  %v1825 = vsel %vm456, %v1810, 0.0
  %1826 = vadd.xlane.f32.xlu0 %v1825
  %v1827 = vpop.xlane.xlu0 %1826
  %v1828 = vsel %vm456, %v1812, 0.0
  %1829 = vadd.xlane.f32.xlu0 %v1828
  %v1830 = vpop.xlane.xlu0 %1829
  %v1831 = vsel %vm456, %v1814, 0.0
  %1832 = vadd.xlane.f32.xlu0 %v1831
  %v1833 = vpop.xlane.xlu0 %1832
  %v1834 = vsel %vm456, %v1816, 0.0
  %1835 = vadd.xlane.f32.xlu0 %v1834
  %v1836 = vpop.xlane.xlu0 %1835
  %v1837 = vsel %vm456, %v1818, 0.0
  %1838 = vadd.xlane.f32.xlu0 %v1837
  %v1839 = vpop.xlane.xlu0 %1838
  %v1840 = vsel %vm456, %v1820, 0.0
  %1841 = vadd.xlane.f32.xlu0 %v1840
  %v1842 = vpop.xlane.xlu0 %1841
  %v1843 = vsel %vm456, %v1822, 0.0
  %1844 = vadd.xlane.f32.xlu0 %v1843
  %v1845 = vpop.xlane.xlu0 %1844
  %v1846 = vsel %vm456, %v1824, 0.0
  %1847 = vadd.xlane.f32.xlu0 %v1846
  %v1848 = vpop.xlane.xlu0 %1847
  %v1849 = vrcp.pop %v1827
  %v1850 = vrcp.pop %v1830
  %v1851 = vrcp.pop %v1833
  %v1852 = vrcp.pop %v1836
  %v1853 = vrcp.pop %v1839
  %v1854 = vrcp.pop %v1842
  %v1855 = vrcp.pop %v1845
  %v1856 = vrcp.pop %v1848
  %v1857 = vmul.f32 %v1810, %v1849
  %v1858 = vmul.f32 %v1812, %v1850
  %v1859 = vmul.f32 %v1814, %v1851
  %v1860 = vmul.f32 %v1816, %v1852
  %v1861 = vmul.f32 %v1818, %v1853
  %v1862 = vmul.f32 %v1820, %v1854
  %v1863 = vmul.f32 %v1822, %v1855
  %v1864 = vmul.f32 %v1824, %v1856
  %1865 = vrot.lane.b32.xlu0 %v256, 40
  %v1866 = vpop.permute.xlu0 %1865
  %1867 = vrot.lane.b32.xlu0 %v261, 40
  %v1868 = vpop.permute.xlu0 %1867
  %1869 = vrot.lane.b32.xlu0 %v266, 40
  %v1870 = vpop.permute.xlu0 %1869
  %1871 = vrot.lane.b32.xlu0 %v271, 40
  %v1872 = vpop.permute.xlu0 %1871
  %1873 = vrot.lane.b32.xlu0 %v276, 40
  %v1874 = vpop.permute.xlu0 %1873
  %1875 = vrot.lane.b32.xlu0 %v281, 40
  %v1876 = vpop.permute.xlu0 %1875
  %1877 = vrot.lane.b32.xlu0 %v286, 40
  %v1878 = vpop.permute.xlu0 %1877
  %1879 = vrot.lane.b32.xlu0 %v291, 40
  %v1880 = vpop.permute.xlu0 %1879
  %v1890 = vsel %vm456, %v1857, 0
  %v1893 = vsel %vm456, %v1858, 0
  %v1896 = vsel %vm456, %v1859, 0
  %v1899 = vsel %vm456, %v1860, 0
  %v1902 = vsel %vm456, %v1861, 0
  %v1905 = vsel %vm456, %v1862, 0
  %v1908 = vsel %vm456, %v1863, 0
  %v1911 = vsel %vm456, %v1864, 0
  %1913 = vmatprep.subr.mxu0 0.0
  %1914 = vmatpush1.msra.mxu0 %v1866
  %1915 = vmatprep.subr.mxu0 0.0
  %1916 = vmatpush1.msra.mxu0 %v1868
  %1917 = vmatprep.subr.mxu0 0.0
  %1918 = vmatpush1.msra.mxu0 %v1870
  %1919 = vmatprep.subr.mxu0 0.0
  %1920 = vmatpush1.msra.mxu0 %v1872
  %1921 = vmatprep.subr.mxu0 0.0
  %1922 = vmatpush1.msra.mxu0 %v1874
  %1923 = vmatprep.subr.mxu0 0.0
  %1924 = vmatpush1.msra.mxu0 %v1876
  %1925 = vmatprep.subr.mxu0 0.0
  %1926 = vmatpush1.msra.mxu0 %v1878
  %1927 = vmatprep.subr.mxu0 0.0
  %1928 = vmatpush1.msra.mxu0 %v1880
  %1929 = vmatprep.subr.mxu0 0.0
  %1930 = vmatpush1.msra.mxu0 0.0
  %1931 = vmatprep.subr.mxu0 0.0
  %1932 = vmatpush1.msra.mxu0 0.0
  %1933 = vmatprep.subr.mxu0 0.0
  %1934 = vmatpush1.msra.mxu0 0.0
  %1935 = vmatprep.subr.mxu0 0.0
  %1936 = vmatpush1.msra.mxu0 0.0
  %1937 = vmatprep.subr.mxu0 0.0
  %1938 = vmatpush1.msra.mxu0 0.0
  %1939 = vmatprep.subr.mxu0 0.0
  %1940 = vmatpush1.msra.mxu0 0.0
  %1941 = vmatprep.subr.mxu0 0.0
  %1942 = vmatpush1.msra.mxu0 0.0
  %1943 = vmatprep.subr.mxu0 0.0
  %1944 = vmatpush1.msra.mxu0 0.0
  %1945 = vmatprep.subr.mxu0 0.0
  %1946 = vmatpush1.msra.mxu0 0.0
  %1947 = vmatprep.subr.mxu0 0.0
  %1948 = vmatpush1.msra.mxu0 0.0
  %1949 = vmatprep.subr.mxu0 0.0
  %1950 = vmatpush1.msra.mxu0 0.0
  %1951 = vmatprep.subr.mxu0 0.0
  %1952 = vmatpush1.msra.mxu0 0.0
  %1953 = vmatprep.subr.mxu0 0.0
  %1954 = vmatpush1.msra.mxu0 0.0
  %1955 = vmatprep.subr.mxu0 0.0
  %1956 = vmatpush1.msra.mxu0 0.0
  %1957 = vmatprep.subr.mxu0 0.0
  %1958 = vmatpush1.msra.mxu0 0.0
  %1959 = vmatprep.subr.mxu0 0.0
  %1960 = vmatpush1.msra.mxu0 0.0
  %1961 = vmatprep.subr.mxu0 0.0
  %1962 = vmatpush1.msra.mxu0 0.0
  %1963 = vmatprep.subr.mxu0 0.0
  %1964 = vmatpush1.msra.mxu0 0.0
  %1965 = vmatprep.subr.mxu0 0.0
  %1966 = vmatpush1.msra.mxu0 0.0
  %1967 = vmatprep.subr.mxu0 0.0
  %1968 = vmatpush1.msra.mxu0 0.0
  %1969 = vmatprep.subr.mxu0 0.0
  %1970 = vmatpush1.msra.mxu0 0.0
  %1971 = vmatprep.subr.mxu0 0.0
  %1972 = vmatpush1.msra.mxu0 0.0
  %1973 = vmatprep.subr.mxu0 0.0
  %1974 = vmatpush1.msra.mxu0 0.0
  %1975 = vmatprep.subr.mxu0 0.0
  %1976 = vmatpush1.msra.mxu0 0.0
  %1977 = vmatprep.mubr.f32.mxu0 0.0
  %1978 = vmatmul.mubr.f32.gmra.mrb[0].mxu0 %v1890
  %v1979 = vpop.f32.mrb[0].mxu0
  %v1980 = vadd.f32 0.0, %v1979
  %v1981 = vpop.f32.mrb[0].mxu0
  %1982 = vmatprep.mubr.f32.mxu0 0.0
  %1983 = vmatmul.mubr.f32.gmra.mrb[0].mxu0 %v1893
  %v1984 = vpop.f32.mrb[0].mxu0
  %v1985 = vadd.f32 0.0, %v1984
  %v1986 = vpop.f32.mrb[0].mxu0
  %1987 = vmatprep.mubr.f32.mxu0 0.0
  %1988 = vmatmul.mubr.f32.gmra.mrb[0].mxu0 %v1896
  %v1989 = vpop.f32.mrb[0].mxu0
  %v1990 = vadd.f32 0.0, %v1989
  %v1991 = vpop.f32.mrb[0].mxu0
  %1992 = vmatprep.mubr.f32.mxu0 0.0
  %1993 = vmatmul.mubr.f32.gmra.mrb[0].mxu0 %v1899
  %v1994 = vpop.f32.mrb[0].mxu0
  %v1995 = vadd.f32 0.0, %v1994
  %v1996 = vpop.f32.mrb[0].mxu0
  %1997 = vmatprep.mubr.f32.mxu0 0.0
  %1998 = vmatmul.mubr.f32.gmra.mrb[0].mxu0 %v1902
  %v1999 = vpop.f32.mrb[0].mxu0
  %v2000 = vadd.f32 0.0, %v1999
  %v2001 = vpop.f32.mrb[0].mxu0
  %2002 = vmatprep.mubr.f32.mxu0 0.0
  %2003 = vmatmul.mubr.f32.gmra.mrb[0].mxu0 %v1905
  %v2004 = vpop.f32.mrb[0].mxu0
  %v2005 = vadd.f32 0.0, %v2004
  %v2006 = vpop.f32.mrb[0].mxu0
  %2007 = vmatprep.mubr.f32.mxu0 0.0
  %2008 = vmatmul.mubr.f32.gmra.mrb[0].mxu0 %v1908
  %v2009 = vpop.f32.mrb[0].mxu0
  %v2010 = vadd.f32 0.0, %v2009
  %v2011 = vpop.f32.mrb[0].mxu0
  %2012 = vmatprep.mubr.f32.mxu0 0.0
  %2013 = vmatmul.mubr.f32.gmra.mrb[0].mxu0 %v1911
  %v2014 = vpop.f32.mrb[0].mxu0
  %v2015 = vadd.f32 0.0, %v2014
  %v2016 = vpop.f32.mrb[0].mxu0
  %2017 = vdwg.mxu0
  %2026 = vrot.lane.b32.xlu0 %v1980, 24
  %v2027 = vpop.permute.xlu0 %2026
  %2028 = vrot.lane.b32.xlu0 %v1985, 24
  %v2029 = vpop.permute.xlu0 %2028
  %2030 = vrot.lane.b32.xlu0 %v1990, 24
  %v2031 = vpop.permute.xlu0 %2030
  %2032 = vrot.lane.b32.xlu0 %v1995, 24
  %v2033 = vpop.permute.xlu0 %2032
  %2034 = vrot.lane.b32.xlu0 %v2000, 24
  %v2035 = vpop.permute.xlu0 %2034
  %2036 = vrot.lane.b32.xlu0 %v2005, 24
  %v2037 = vpop.permute.xlu0 %2036
  %2038 = vrot.lane.b32.xlu0 %v2010, 24
  %v2039 = vpop.permute.xlu0 %2038
  %2040 = vrot.lane.b32.xlu0 %v2015, 24
  %v2041 = vpop.permute.xlu0 %2040
  %vm2050 = vcmask 261312
  %2051 = vst.msk [vmem:[#allocation2] sm:$0xff] %vm2050, %v2027
  %2052 = vst.msk [vmem:[#allocation2 + $0x8] sm:$0xff] %vm2050, %v2029
  %2053 = vst.msk [vmem:[#allocation2 + $0x10] sm:$0xff] %vm2050, %v2031
  %2054 = vst.msk [vmem:[#allocation2 + $0x18] sm:$0xff] %vm2050, %v2033
  %2055 = vst.msk [vmem:[#allocation2 + $0x20] sm:$0xff] %vm2050, %v2035
  %2056 = vst.msk [vmem:[#allocation2 + $0x28] sm:$0xff] %vm2050, %v2037
  %2057 = vst.msk [vmem:[#allocation2 + $0x30] sm:$0xff] %vm2050, %v2039
  %2058 = vst.msk [vmem:[#allocation2 + $0x38] sm:$0xff] %vm2050, %v2041
  %v2059 = vld [vmem:[#allocation2] sm:$0xff]
  %v2060 = vld [vmem:[#allocation2 + $0x8] sm:$0xff]
  %v2061 = vld [vmem:[#allocation2 + $0x10] sm:$0xff]
  %v2062 = vld [vmem:[#allocation2 + $0x18] sm:$0xff]
  %v2063 = vld [vmem:[#allocation2 + $0x20] sm:$0xff]
  %v2064 = vld [vmem:[#allocation2 + $0x28] sm:$0xff]
  %v2065 = vld [vmem:[#allocation2 + $0x30] sm:$0xff]
  %v2066 = vld [vmem:[#allocation2 + $0x38] sm:$0xff]
  %v2068 = vsel %vm46, %v2059, 0
  %v2071 = vsel %vm46, %v2060, 0
  %v2074 = vsel %vm46, %v2061, 0
  %v2077 = vsel %vm46, %v2062, 0
  %v2080 = vsel %vm46, %v2063, 0
  %v2083 = vsel %vm46, %v2064, 0
  %v2086 = vsel %vm46, %v2065, 0
  %v2089 = vsel %vm46, %v2066, 0
  %2091 = vmatprep.subr.mxu0 0.0
  %2092 = vmatpush1.msra.mxu0 %v33
  %2093 = vmatprep.subr.mxu0 0.0
  %2094 = vmatpush1.msra.mxu0 %v34
  %2095 = vmatprep.subr.mxu0 0.0
  %2096 = vmatpush1.msra.mxu0 %v35
  %2097 = vmatprep.subr.mxu0 0.0
  %2098 = vmatpush1.msra.mxu0 %v36
  %2099 = vmatprep.subr.mxu0 0.0
  %2100 = vmatpush1.msra.mxu0 0.0
  %2101 = vmatprep.subr.mxu0 0.0
  %2102 = vmatpush1.msra.mxu0 0.0
  %2103 = vmatprep.subr.mxu0 0.0
  %2104 = vmatpush1.msra.mxu0 0.0
  %2105 = vmatprep.subr.mxu0 0.0
  %2106 = vmatpush1.msra.mxu0 0.0
  %2107 = vmatprep.subr.mxu0 0.0
  %2108 = vmatpush1.msra.mxu0 0.0
  %2109 = vmatprep.subr.mxu0 0.0
  %2110 = vmatpush1.msra.mxu0 0.0
  %2111 = vmatprep.subr.mxu0 0.0
  %2112 = vmatpush1.msra.mxu0 0.0
  %2113 = vmatprep.subr.mxu0 0.0
  %2114 = vmatpush1.msra.mxu0 0.0
  %2115 = vmatprep.subr.mxu0 0.0
  %2116 = vmatpush1.msra.mxu0 0.0
  %2117 = vmatprep.subr.mxu0 0.0
  %2118 = vmatpush1.msra.mxu0 0.0
  %2119 = vmatprep.subr.mxu0 0.0
  %2120 = vmatpush1.msra.mxu0 0.0
  %2121 = vmatprep.subr.mxu0 0.0
  %2122 = vmatpush1.msra.mxu0 0.0
  %2123 = vmatprep.subr.mxu0 0.0
  %2124 = vmatpush1.msra.mxu0 0.0
  %2125 = vmatprep.subr.mxu0 0.0
  %2126 = vmatpush1.msra.mxu0 0.0
  %2127 = vmatprep.subr.mxu0 0.0
  %2128 = vmatpush1.msra.mxu0 0.0
  %2129 = vmatprep.subr.mxu0 0.0
  %2130 = vmatpush1.msra.mxu0 0.0
  %2131 = vmatprep.subr.mxu0 0.0
  %2132 = vmatpush1.msra.mxu0 0.0
  %2133 = vmatprep.subr.mxu0 0.0
  %2134 = vmatpush1.msra.mxu0 0.0
  %2135 = vmatprep.subr.mxu0 0.0
  %2136 = vmatpush1.msra.mxu0 0.0
  %2137 = vmatprep.subr.mxu0 0.0
  %2138 = vmatpush1.msra.mxu0 0.0
  %2139 = vmatprep.subr.mxu0 0.0
  %2140 = vmatpush1.msra.mxu0 0.0
  %2141 = vmatprep.subr.mxu0 0.0
  %2142 = vmatpush1.msra.mxu0 0.0
  %2143 = vmatprep.subr.mxu0 0.0
  %2144 = vmatpush1.msra.mxu0 0.0
  %2145 = vmatprep.subr.mxu0 0.0
  %2146 = vmatpush1.msra.mxu0 0.0
  %2147 = vmatprep.subr.mxu0 0.0
  %2148 = vmatpush1.msra.mxu0 0.0
  %2149 = vmatprep.subr.mxu0 0.0
  %2150 = vmatpush1.msra.mxu0 0.0
  %2151 = vmatprep.subr.mxu0 0.0
  %2152 = vmatpush1.msra.mxu0 0.0
  %2153 = vmatprep.subr.mxu0 0.0
  %2154 = vmatpush1.msra.mxu0 0.0
  %2155 = vmatprep.mubr.f32.mxu0 0.0
  %2156 = vmatmul.mubr.f32.gmra.mrb[0].mxu0 %v2068
  %v2157 = vpop.f32.mrb[0].mxu0
  %v2158 = vadd.f32 0.0, %v2157
  %v2159 = vpop.f32.mrb[0].mxu0
  %2160 = vmatprep.mubr.f32.mxu0 0.0
  %2161 = vmatmul.mubr.f32.gmra.mrb[0].mxu0 %v2071
  %v2162 = vpop.f32.mrb[0].mxu0
  %v2163 = vadd.f32 0.0, %v2162
  %v2164 = vpop.f32.mrb[0].mxu0
  %2165 = vmatprep.mubr.f32.mxu0 0.0
  %2166 = vmatmul.mubr.f32.gmra.mrb[0].mxu0 %v2074
  %v2167 = vpop.f32.mrb[0].mxu0
  %v2168 = vadd.f32 0.0, %v2167
  %v2169 = vpop.f32.mrb[0].mxu0
  %2170 = vmatprep.mubr.f32.mxu0 0.0
  %2171 = vmatmul.mubr.f32.gmra.mrb[0].mxu0 %v2077
  %v2172 = vpop.f32.mrb[0].mxu0
  %v2173 = vadd.f32 0.0, %v2172
  %v2174 = vpop.f32.mrb[0].mxu0
  %2175 = vmatprep.mubr.f32.mxu0 0.0
  %2176 = vmatmul.mubr.f32.gmra.mrb[0].mxu0 %v2080
  %v2177 = vpop.f32.mrb[0].mxu0
  %v2178 = vadd.f32 0.0, %v2177
  %v2179 = vpop.f32.mrb[0].mxu0
  %2180 = vmatprep.mubr.f32.mxu0 0.0
  %2181 = vmatmul.mubr.f32.gmra.mrb[0].mxu0 %v2083
  %v2182 = vpop.f32.mrb[0].mxu0
  %v2183 = vadd.f32 0.0, %v2182
  %v2184 = vpop.f32.mrb[0].mxu0
  %2185 = vmatprep.mubr.f32.mxu0 0.0
  %2186 = vmatmul.mubr.f32.gmra.mrb[0].mxu0 %v2086
  %v2187 = vpop.f32.mrb[0].mxu0
  %v2188 = vadd.f32 0.0, %v2187
  %v2189 = vpop.f32.mrb[0].mxu0
  %2190 = vmatprep.mubr.f32.mxu0 0.0
  %2191 = vmatmul.mubr.f32.gmra.mrb[0].mxu0 %v2089
  %v2192 = vpop.f32.mrb[0].mxu0
  %v2193 = vadd.f32 0.0, %v2192
  %v2194 = vpop.f32.mrb[0].mxu0
  %2195 = vdwg.mxu0
  %v2196 = vadd.f32 %v38, %v2158
  %v2197 = vadd.f32 %v39, %v2163
  %v2198 = vadd.f32 %v40, %v2168
  %v2199 = vadd.f32 %v41, %v2173
  %v2200 = vadd.f32 %v42, %v2178
  %v2201 = vadd.f32 %v43, %v2183
  %v2202 = vadd.f32 %v44, %v2188
  %v2203 = vadd.f32 %v45, %v2193
  %v2205 = vlaneseq
  %v2206 = vshrl.u32 %v2205, 7
  %v2207 = vsub.s32 0, %v2206
  %v2208 = vrot.slane %v37, %v2207
  %v2210 = vadd.f32 %v2196, %v2208
  %v2211 = vadd.f32 %v2197, %v2208
  %v2212 = vadd.f32 %v2198, %v2208
  %v2213 = vadd.f32 %v2199, %v2208
  %v2214 = vadd.f32 %v2200, %v2208
  %v2215 = vadd.f32 %v2201, %v2208
  %v2216 = vadd.f32 %v2202, %v2208
  %v2217 = vadd.f32 %v2203, %v2208
  %2218 = vst.msk [vmem:[%s7] sm:$0xff] %vm46, %v2210
  %2219 = vst.msk [vmem:[%s7 + $0x8] sm:$0xff] %vm46, %v2211
  %2220 = vst.msk [vmem:[%s7 + $0x10] sm:$0xff] %vm46, %v2212
  %2221 = vst.msk [vmem:[%s7 + $0x18] sm:$0xff] %vm46, %v2213
  %2222 = vst.msk [vmem:[%s7 + $0x20] sm:$0xff] %vm46, %v2214
  %2223 = vst.msk [vmem:[%s7 + $0x28] sm:$0xff] %vm46, %v2215
  %2224 = vst.msk [vmem:[%s7 + $0x30] sm:$0xff] %vm46, %v2216
  %2225 = vst.msk [vmem:[%s7 + $0x38] sm:$0xff] %vm46, %v2217
  %s2226 = scalar_lea.vmem %s0, 64
  %v2227 = vld [vmem:[%s2226] sm:$0xff]
  %v2228 = vld [vmem:[%s2226 + $0x8] sm:$0xff]
  %v2229 = vld [vmem:[%s2226 + $0x10] sm:$0xff]
  %v2230 = vld [vmem:[%s2226 + $0x18] sm:$0xff]
  %v2231 = vld [vmem:[%s2226 + $0x20] sm:$0xff]
  %v2232 = vld [vmem:[%s2226 + $0x28] sm:$0xff]
  %v2233 = vld [vmem:[%s2226 + $0x30] sm:$0xff]
  %v2234 = vld [vmem:[%s2226 + $0x38] sm:$0xff]
  %v2235 = vsel %vm46, %v2227, 0.0
  %v2236 = vsel %vm46, %v2228, 0.0
  %v2237 = vadd.f32 %v2235, %v2236
  %v2238 = vsel %vm46, %v2229, 0.0
  %v2239 = vadd.f32 %v2237, %v2238
  %v2240 = vsel %vm46, %v2230, 0.0
  %v2241 = vadd.f32 %v2239, %v2240
  %v2242 = vsel %vm46, %v2231, 0.0
  %v2243 = vadd.f32 %v2241, %v2242
  %v2244 = vsel %vm46, %v2232, 0.0
  %v2245 = vadd.f32 %v2243, %v2244
  %v2246 = vsel %vm46, %v2233, 0.0
  %v2247 = vadd.f32 %v2245, %v2246
  %v2248 = vsel %vm46, %v2234, 0.0
  %v2249 = vadd.f32 %v2247, %v2248
  %2250 = vadd.xlane.f32.xlu0 %v2249
  %v2251 = vpop.xlane.xlu0 %2250
  %v2252 = vrot.slane %v2251, 4
  %v2253 = vadd.f32 %v2251, %v2252
  %v2254 = vrot.slane %v2253, 2
  %v2255 = vadd.f32 %v2253, %v2254
  %v2256 = vrot.slane %v2255, 1
  %v2257 = vadd.f32 %v2255, %v2256
  %s2258 = vtos %v2257
  %v2259 = vrcp.pop 2048.0
  %s2260 = vtos %v2259
  %s2261 = smul.f32 %s2258, %s2260
  %v2262 = vstv %s2261
  %v2263 = vsub.f32 %v2227, %v2262
  %v2264 = vsub.f32 %v2228, %v2262
  %v2265 = vsub.f32 %v2229, %v2262
  %v2266 = vsub.f32 %v2230, %v2262
  %v2267 = vsub.f32 %v2231, %v2262
  %v2268 = vsub.f32 %v2232, %v2262
  %v2269 = vsub.f32 %v2233, %v2262
  %v2270 = vsub.f32 %v2234, %v2262
  %v2271 = vmul.f32 %v2263, %v2263
  %v2272 = vmul.f32 %v2264, %v2264
  %v2273 = vmul.f32 %v2265, %v2265
  %v2274 = vmul.f32 %v2266, %v2266
  %v2275 = vmul.f32 %v2267, %v2267
  %v2276 = vmul.f32 %v2268, %v2268
  %v2277 = vmul.f32 %v2269, %v2269
  %v2278 = vmul.f32 %v2270, %v2270
  %v2279 = vsel %vm46, %v2271, 0.0
  %v2280 = vsel %vm46, %v2272, 0.0
  %v2281 = vadd.f32 %v2279, %v2280
  %v2282 = vsel %vm46, %v2273, 0.0
  %v2283 = vadd.f32 %v2281, %v2282
  %v2284 = vsel %vm46, %v2274, 0.0
  %v2285 = vadd.f32 %v2283, %v2284
  %v2286 = vsel %vm46, %v2275, 0.0
  %v2287 = vadd.f32 %v2285, %v2286
  %v2288 = vsel %vm46, %v2276, 0.0
  %v2289 = vadd.f32 %v2287, %v2288
  %v2290 = vsel %vm46, %v2277, 0.0
  %v2291 = vadd.f32 %v2289, %v2290
  %v2292 = vsel %vm46, %v2278, 0.0
  %v2293 = vadd.f32 %v2291, %v2292
  %2294 = vadd.xlane.f32.xlu0 %v2293
  %v2295 = vpop.xlane.xlu0 %2294
  %v2296 = vrot.slane %v2295, 4
  %v2297 = vadd.f32 %v2295, %v2296
  %v2298 = vrot.slane %v2297, 2
  %v2299 = vadd.f32 %v2297, %v2298
  %v2300 = vrot.slane %v2299, 1
  %v2301 = vadd.f32 %v2299, %v2300
  %s2302 = vtos %v2301
  %v2303 = vrcp.pop 2048.0
  %s2304 = vtos %v2303
  %s2305 = smul.f32 %s2302, %s2304
  %s2306 = sadd.f32 %s2305, 1e-05
  %v2307 = vstv %s2306
  %v2308 = vrsqrt.pop %v2307
  %s2309 = vtos %v2308
  %v2310 = vstv %s2309
  %v2311 = vmul.f32 %v2263, %v2310
  %v2312 = vmul.f32 %v2264, %v2310
  %v2313 = vmul.f32 %v2265, %v2310
  %v2314 = vmul.f32 %v2266, %v2310
  %v2315 = vmul.f32 %v2267, %v2310
  %v2316 = vmul.f32 %v2268, %v2310
  %v2317 = vmul.f32 %v2269, %v2310
  %v2318 = vmul.f32 %v2270, %v2310
  %v2319 = vmul.f32 %v2311, %v135
  %v2320 = vmul.f32 %v2312, %v135
  %v2321 = vmul.f32 %v2313, %v135
  %v2322 = vmul.f32 %v2314, %v135
  %v2323 = vmul.f32 %v2315, %v135
  %v2324 = vmul.f32 %v2316, %v135
  %v2325 = vmul.f32 %v2317, %v135
  %v2326 = vmul.f32 %v2318, %v135
  %v2327 = vadd.f32 %v2319, %v149
  %v2328 = vadd.f32 %v2320, %v149
  %v2329 = vadd.f32 %v2321, %v149
  %v2330 = vadd.f32 %v2322, %v149
  %v2331 = vadd.f32 %v2323, %v149
  %v2332 = vadd.f32 %v2324, %v149
  %v2333 = vadd.f32 %v2325, %v149
  %v2334 = vadd.f32 %v2326, %v149
  %v2336 = vsel %vm46, %v2327, 0
  %v2339 = vsel %vm46, %v2328, 0
  %v2342 = vsel %vm46, %v2329, 0
  %v2345 = vsel %vm46, %v2330, 0
  %v2348 = vsel %vm46, %v2331, 0
  %v2351 = vsel %vm46, %v2332, 0
  %v2354 = vsel %vm46, %v2333, 0
  %v2357 = vsel %vm46, %v2334, 0
  %2359 = vmatprep.subr.mxu0 0.0
  %2360 = vmatpush1.msra.mxu0 %v28
  %2361 = vmatprep.subr.mxu0 0.0
  %2362 = vmatpush1.msra.mxu0 %v29
  %2363 = vmatprep.subr.mxu0 0.0
  %2364 = vmatpush1.msra.mxu0 %v30
  %2365 = vmatprep.subr.mxu0 0.0
  %2366 = vmatpush1.msra.mxu0 %v31
  %2367 = vmatprep.subr.mxu0 0.0
  %2368 = vmatpush1.msra.mxu0 0.0
  %2369 = vmatprep.subr.mxu0 0.0
  %2370 = vmatpush1.msra.mxu0 0.0
  %2371 = vmatprep.subr.mxu0 0.0
  %2372 = vmatpush1.msra.mxu0 0.0
  %2373 = vmatprep.subr.mxu0 0.0
  %2374 = vmatpush1.msra.mxu0 0.0
  %2375 = vmatprep.subr.mxu0 0.0
  %2376 = vmatpush1.msra.mxu0 0.0
  %2377 = vmatprep.subr.mxu0 0.0
  %2378 = vmatpush1.msra.mxu0 0.0
  %2379 = vmatprep.subr.mxu0 0.0
  %2380 = vmatpush1.msra.mxu0 0.0
  %2381 = vmatprep.subr.mxu0 0.0
  %2382 = vmatpush1.msra.mxu0 0.0
  %2383 = vmatprep.subr.mxu0 0.0
  %2384 = vmatpush1.msra.mxu0 0.0
  %2385 = vmatprep.subr.mxu0 0.0
  %2386 = vmatpush1.msra.mxu0 0.0
  %2387 = vmatprep.subr.mxu0 0.0
  %2388 = vmatpush1.msra.mxu0 0.0
  %2389 = vmatprep.subr.mxu0 0.0
  %2390 = vmatpush1.msra.mxu0 0.0
  %2391 = vmatprep.subr.mxu0 0.0
  %2392 = vmatpush1.msra.mxu0 0.0
  %2393 = vmatprep.subr.mxu0 0.0
  %2394 = vmatpush1.msra.mxu0 0.0
  %2395 = vmatprep.subr.mxu0 0.0
  %2396 = vmatpush1.msra.mxu0 0.0
  %2397 = vmatprep.subr.mxu0 0.0
  %2398 = vmatpush1.msra.mxu0 0.0
  %2399 = vmatprep.subr.mxu0 0.0
  %2400 = vmatpush1.msra.mxu0 0.0
  %2401 = vmatprep.subr.mxu0 0.0
  %2402 = vmatpush1.msra.mxu0 0.0
  %2403 = vmatprep.subr.mxu0 0.0
  %2404 = vmatpush1.msra.mxu0 0.0
  %2405 = vmatprep.subr.mxu0 0.0
  %2406 = vmatpush1.msra.mxu0 0.0
  %2407 = vmatprep.subr.mxu0 0.0
  %2408 = vmatpush1.msra.mxu0 0.0
  %2409 = vmatprep.subr.mxu0 0.0
  %2410 = vmatpush1.msra.mxu0 0.0
  %2411 = vmatprep.subr.mxu0 0.0
  %2412 = vmatpush1.msra.mxu0 0.0
  %2413 = vmatprep.subr.mxu0 0.0
  %2414 = vmatpush1.msra.mxu0 0.0
  %2415 = vmatprep.subr.mxu0 0.0
  %2416 = vmatpush1.msra.mxu0 0.0
  %2417 = vmatprep.subr.mxu0 0.0
  %2418 = vmatpush1.msra.mxu0 0.0
  %2419 = vmatprep.subr.mxu0 0.0
  %2420 = vmatpush1.msra.mxu0 0.0
  %2421 = vmatprep.subr.mxu0 0.0
  %2422 = vmatpush1.msra.mxu0 0.0
  %2423 = vmatprep.mubr.f32.mxu0 0.0
  %2424 = vmatmul.mubr.f32.gmra.mrb[0].mxu0 %v2336
  %v2425 = vpop.f32.mrb[0].mxu0
  %v2426 = vadd.f32 %v163, %v2425
  %v2427 = vpop.f32.mrb[0].mxu0
  %2428 = vmatprep.mubr.f32.mxu0 0.0
  %2429 = vmatmul.mubr.f32.gmra.mrb[0].mxu0 %v2339
  %v2430 = vpop.f32.mrb[0].mxu0
  %v2431 = vadd.f32 %v163, %v2430
  %v2432 = vpop.f32.mrb[0].mxu0
  %2433 = vmatprep.mubr.f32.mxu0 0.0
  %2434 = vmatmul.mubr.f32.gmra.mrb[0].mxu0 %v2342
  %v2435 = vpop.f32.mrb[0].mxu0
  %v2436 = vadd.f32 %v163, %v2435
  %v2437 = vpop.f32.mrb[0].mxu0
  %2438 = vmatprep.mubr.f32.mxu0 0.0
  %2439 = vmatmul.mubr.f32.gmra.mrb[0].mxu0 %v2345
  %v2440 = vpop.f32.mrb[0].mxu0
  %v2441 = vadd.f32 %v163, %v2440
  %v2442 = vpop.f32.mrb[0].mxu0
  %2443 = vmatprep.mubr.f32.mxu0 0.0
  %2444 = vmatmul.mubr.f32.gmra.mrb[0].mxu0 %v2348
  %v2445 = vpop.f32.mrb[0].mxu0
  %v2446 = vadd.f32 %v163, %v2445
  %v2447 = vpop.f32.mrb[0].mxu0
  %2448 = vmatprep.mubr.f32.mxu0 0.0
  %2449 = vmatmul.mubr.f32.gmra.mrb[0].mxu0 %v2351
  %v2450 = vpop.f32.mrb[0].mxu0
  %v2451 = vadd.f32 %v163, %v2450
  %v2452 = vpop.f32.mrb[0].mxu0
  %2453 = vmatprep.mubr.f32.mxu0 0.0
  %2454 = vmatmul.mubr.f32.gmra.mrb[0].mxu0 %v2354
  %v2455 = vpop.f32.mrb[0].mxu0
  %v2456 = vadd.f32 %v163, %v2455
  %v2457 = vpop.f32.mrb[0].mxu0
  %2458 = vmatprep.mubr.f32.mxu0 0.0
  %2459 = vmatmul.mubr.f32.gmra.mrb[0].mxu0 %v2357
  %v2460 = vpop.f32.mrb[0].mxu0
  %v2461 = vadd.f32 %v163, %v2460
  %v2462 = vpop.f32.mrb[0].mxu0
  %2463 = vdwg.mxu0
  %2472 = vrot.lane.b32.xlu0 %v2426, 96
  %v2473 = vpop.permute.xlu0 %2472
  %2474 = vrot.lane.b32.xlu0 %v2431, 96
  %v2475 = vpop.permute.xlu0 %2474
  %2476 = vrot.lane.b32.xlu0 %v2436, 96
  %v2477 = vpop.permute.xlu0 %2476
  %2478 = vrot.lane.b32.xlu0 %v2441, 96
  %v2479 = vpop.permute.xlu0 %2478
  %2480 = vrot.lane.b32.xlu0 %v2446, 96
  %v2481 = vpop.permute.xlu0 %2480
  %2482 = vrot.lane.b32.xlu0 %v2451, 96
  %v2483 = vpop.permute.xlu0 %2482
  %2484 = vrot.lane.b32.xlu0 %v2456, 96
  %v2485 = vpop.permute.xlu0 %2484
  %2486 = vrot.lane.b32.xlu0 %v2461, 96
  %v2487 = vpop.permute.xlu0 %2486
  %v2488 = vsel %vm318, %v2426, 0
  %v2490 = vsel %vm318, %v2431, 0
  %v2492 = vsel %vm318, %v2436, 0
  %v2494 = vsel %vm318, %v2441, 0
  %v2496 = vsel %vm318, %v2446, 0
  %v2498 = vsel %vm318, %v2451, 0
  %v2500 = vsel %vm318, %v2456, 0
  %v2502 = vsel %vm318, %v2461, 0
  %v2504 = vsel %vm318, %v2473, 0
  %v2506 = vsel %vm318, %v2475, 0
  %v2508 = vsel %vm318, %v2477, 0
  %v2510 = vsel %vm318, %v2479, 0
  %v2512 = vsel %vm318, %v2481, 0
  %v2514 = vsel %vm318, %v2483, 0
  %v2516 = vsel %vm318, %v2485, 0
  %v2518 = vsel %vm318, %v2487, 0
  %2520 = vmatprep.subr.mxu0 0.0
  %2521 = vmatpush1.xpose.msra.mxu0 %v2504
  %2522 = vmatprep.subr.mxu0 0.0
  %2523 = vmatpush1.xpose.msra.mxu0 %v2506
  %2524 = vmatprep.subr.mxu0 0.0
  %2525 = vmatpush1.xpose.msra.mxu0 %v2508
  %2526 = vmatprep.subr.mxu0 0.0
  %2527 = vmatpush1.xpose.msra.mxu0 %v2510
  %2528 = vmatprep.subr.mxu0 0.0
  %2529 = vmatpush1.xpose.msra.mxu0 %v2512
  %2530 = vmatprep.subr.mxu0 0.0
  %2531 = vmatpush1.xpose.msra.mxu0 %v2514
  %2532 = vmatprep.subr.mxu0 0.0
  %2533 = vmatpush1.xpose.msra.mxu0 %v2516
  %2534 = vmatprep.subr.mxu0 0.0
  %2535 = vmatpush1.xpose.msra.mxu0 %v2518
  %2536 = vmatprep.subr.mxu0 0.0
  %2537 = vmatpush1.xpose.msra.mxu0 0.0
  %2538 = vmatprep.subr.mxu0 0.0
  %2539 = vmatpush1.xpose.msra.mxu0 0.0
  %2540 = vmatprep.subr.mxu0 0.0
  %2541 = vmatpush1.xpose.msra.mxu0 0.0
  %2542 = vmatprep.subr.mxu0 0.0
  %2543 = vmatpush1.xpose.msra.mxu0 0.0
  %2544 = vmatprep.subr.mxu0 0.0
  %2545 = vmatpush1.xpose.msra.mxu0 0.0
  %2546 = vmatprep.subr.mxu0 0.0
  %2547 = vmatpush1.xpose.msra.mxu0 0.0
  %2548 = vmatprep.subr.mxu0 0.0
  %2549 = vmatpush1.xpose.msra.mxu0 0.0
  %2550 = vmatprep.subr.mxu0 0.0
  %2551 = vmatpush1.xpose.msra.mxu0 0.0
  %2552 = vmatprep.subr.mxu0 0.0
  %2553 = vmatpush1.xpose.msra.mxu0 0.0
  %2554 = vmatprep.subr.mxu0 0.0
  %2555 = vmatpush1.xpose.msra.mxu0 0.0
  %2556 = vmatprep.subr.mxu0 0.0
  %2557 = vmatpush1.xpose.msra.mxu0 0.0
  %2558 = vmatprep.subr.mxu0 0.0
  %2559 = vmatpush1.xpose.msra.mxu0 0.0
  %2560 = vmatprep.subr.mxu0 0.0
  %2561 = vmatpush1.xpose.msra.mxu0 0.0
  %2562 = vmatprep.subr.mxu0 0.0
  %2563 = vmatpush1.xpose.msra.mxu0 0.0
  %2564 = vmatprep.subr.mxu0 0.0
  %2565 = vmatpush1.xpose.msra.mxu0 0.0
  %2566 = vmatprep.subr.mxu0 0.0
  %2567 = vmatpush1.xpose.msra.mxu0 0.0
  %2568 = vmatprep.subr.mxu0 0.0
  %2569 = vmatpush1.xpose.msra.mxu0 0.0
  %2570 = vmatprep.subr.mxu0 0.0
  %2571 = vmatpush1.xpose.msra.mxu0 0.0
  %2572 = vmatprep.subr.mxu0 0.0
  %2573 = vmatpush1.xpose.msra.mxu0 0.0
  %2574 = vmatprep.subr.mxu0 0.0
  %2575 = vmatpush1.xpose.msra.mxu0 0.0
  %2576 = vmatprep.subr.mxu0 0.0
  %2577 = vmatpush1.xpose.msra.mxu0 0.0
  %2578 = vmatprep.subr.mxu0 0.0
  %2579 = vmatpush1.xpose.msra.mxu0 0.0
  %2580 = vmatprep.subr.mxu0 0.0
  %2581 = vmatpush1.xpose.msra.mxu0 0.0
  %2582 = vmatprep.subr.mxu0 0.0
  %2583 = vmatpush1.xpose.msra.mxu0 0.0
  %2584 = vmatprep.mubr.f32.mxu0 0.0
  %2585 = vmatmul.mubr.f32.gmra.mrb[0].mxu0 %v2488
  %v2586 = vpop.f32.mrb[0].mxu0
  %v2587 = vadd.f32 0.0, %v2586
  %v2588 = vpop.f32.mrb[0].mxu0
  %2589 = vmatprep.mubr.f32.mxu0 0.0
  %2590 = vmatmul.mubr.f32.gmra.mrb[0].mxu0 %v2490
  %v2591 = vpop.f32.mrb[0].mxu0
  %v2592 = vadd.f32 0.0, %v2591
  %v2593 = vpop.f32.mrb[0].mxu0
  %2594 = vmatprep.mubr.f32.mxu0 0.0
  %2595 = vmatmul.mubr.f32.gmra.mrb[0].mxu0 %v2492
  %v2596 = vpop.f32.mrb[0].mxu0
  %v2597 = vadd.f32 0.0, %v2596
  %v2598 = vpop.f32.mrb[0].mxu0
  %2599 = vmatprep.mubr.f32.mxu0 0.0
  %2600 = vmatmul.mubr.f32.gmra.mrb[0].mxu0 %v2494
  %v2601 = vpop.f32.mrb[0].mxu0
  %v2602 = vadd.f32 0.0, %v2601
  %v2603 = vpop.f32.mrb[0].mxu0
  %2604 = vmatprep.mubr.f32.mxu0 0.0
  %2605 = vmatmul.mubr.f32.gmra.mrb[0].mxu0 %v2496
  %v2606 = vpop.f32.mrb[0].mxu0
  %v2607 = vadd.f32 0.0, %v2606
  %v2608 = vpop.f32.mrb[0].mxu0
  %2609 = vmatprep.mubr.f32.mxu0 0.0
  %2610 = vmatmul.mubr.f32.gmra.mrb[0].mxu0 %v2498
  %v2611 = vpop.f32.mrb[0].mxu0
  %v2612 = vadd.f32 0.0, %v2611
  %v2613 = vpop.f32.mrb[0].mxu0
  %2614 = vmatprep.mubr.f32.mxu0 0.0
  %2615 = vmatmul.mubr.f32.gmra.mrb[0].mxu0 %v2500
  %v2616 = vpop.f32.mrb[0].mxu0
  %v2617 = vadd.f32 0.0, %v2616
  %v2618 = vpop.f32.mrb[0].mxu0
  %2619 = vmatprep.mubr.f32.mxu0 0.0
  %2620 = vmatmul.mubr.f32.gmra.mrb[0].mxu0 %v2502
  %v2621 = vpop.f32.mrb[0].mxu0
  %v2622 = vadd.f32 0.0, %v2621
  %v2623 = vpop.f32.mrb[0].mxu0
  %2624 = vdwg.mxu0
  %v2625 = vsel %vm456, %v2587, -inf
  %2626 = vmax.xlane.f32.xlu0 %v2625
  %v2627 = vpop.xlane.xlu0 %2626
  %v2628 = vsel %vm456, %v2592, -inf
  %2629 = vmax.xlane.f32.xlu0 %v2628
  %v2630 = vpop.xlane.xlu0 %2629
  %v2631 = vsel %vm456, %v2597, -inf
  %2632 = vmax.xlane.f32.xlu0 %v2631
  %v2633 = vpop.xlane.xlu0 %2632
  %v2634 = vsel %vm456, %v2602, -inf
  %2635 = vmax.xlane.f32.xlu0 %v2634
  %v2636 = vpop.xlane.xlu0 %2635
  %v2637 = vsel %vm456, %v2607, -inf
  %2638 = vmax.xlane.f32.xlu0 %v2637
  %v2639 = vpop.xlane.xlu0 %2638
  %v2640 = vsel %vm456, %v2612, -inf
  %2641 = vmax.xlane.f32.xlu0 %v2640
  %v2642 = vpop.xlane.xlu0 %2641
  %v2643 = vsel %vm456, %v2617, -inf
  %2644 = vmax.xlane.f32.xlu0 %v2643
  %v2645 = vpop.xlane.xlu0 %2644
  %v2646 = vsel %vm456, %v2622, -inf
  %2647 = vmax.xlane.f32.xlu0 %v2646
  %v2648 = vpop.xlane.xlu0 %2647
  %v2649 = vsub.f32 %v2587, %v2627
  %v2650 = vsub.f32 %v2592, %v2630
  %v2651 = vsub.f32 %v2597, %v2633
  %v2652 = vsub.f32 %v2602, %v2636
  %v2653 = vsub.f32 %v2607, %v2639
  %v2654 = vsub.f32 %v2612, %v2642
  %v2655 = vsub.f32 %v2617, %v2645
  %v2656 = vsub.f32 %v2622, %v2648
  %v2657 = vmul.f32 %v2649, 1.442695
  %v2658 = vpow.pop %v2657
  %v2659 = vmul.f32 %v2650, 1.442695
  %v2660 = vpow.pop %v2659
  %v2661 = vmul.f32 %v2651, 1.442695
  %v2662 = vpow.pop %v2661
  %v2663 = vmul.f32 %v2652, 1.442695
  %v2664 = vpow.pop %v2663
  %v2665 = vmul.f32 %v2653, 1.442695
  %v2666 = vpow.pop %v2665
  %v2667 = vmul.f32 %v2654, 1.442695
  %v2668 = vpow.pop %v2667
  %v2669 = vmul.f32 %v2655, 1.442695
  %v2670 = vpow.pop %v2669
  %v2671 = vmul.f32 %v2656, 1.442695
  %v2672 = vpow.pop %v2671
  %v2673 = vsel %vm456, %v2658, 0.0
  %2674 = vadd.xlane.f32.xlu0 %v2673
  %v2675 = vpop.xlane.xlu0 %2674
  %v2676 = vsel %vm456, %v2660, 0.0
  %2677 = vadd.xlane.f32.xlu0 %v2676
  %v2678 = vpop.xlane.xlu0 %2677
  %v2679 = vsel %vm456, %v2662, 0.0
  %2680 = vadd.xlane.f32.xlu0 %v2679
  %v2681 = vpop.xlane.xlu0 %2680
  %v2682 = vsel %vm456, %v2664, 0.0
  %2683 = vadd.xlane.f32.xlu0 %v2682
  %v2684 = vpop.xlane.xlu0 %2683
  %v2685 = vsel %vm456, %v2666, 0.0
  %2686 = vadd.xlane.f32.xlu0 %v2685
  %v2687 = vpop.xlane.xlu0 %2686
  %v2688 = vsel %vm456, %v2668, 0.0
  %2689 = vadd.xlane.f32.xlu0 %v2688
  %v2690 = vpop.xlane.xlu0 %2689
  %v2691 = vsel %vm456, %v2670, 0.0
  %2692 = vadd.xlane.f32.xlu0 %v2691
  %v2693 = vpop.xlane.xlu0 %2692
  %v2694 = vsel %vm456, %v2672, 0.0
  %2695 = vadd.xlane.f32.xlu0 %v2694
  %v2696 = vpop.xlane.xlu0 %2695
  %v2697 = vrcp.pop %v2675
  %v2698 = vrcp.pop %v2678
  %v2699 = vrcp.pop %v2681
  %v2700 = vrcp.pop %v2684
  %v2701 = vrcp.pop %v2687
  %v2702 = vrcp.pop %v2690
  %v2703 = vrcp.pop %v2693
  %v2704 = vrcp.pop %v2696
  %v2705 = vmul.f32 %v2658, %v2697
  %v2706 = vmul.f32 %v2660, %v2698
  %v2707 = vmul.f32 %v2662, %v2699
  %v2708 = vmul.f32 %v2664, %v2700
  %v2709 = vmul.f32 %v2666, %v2701
  %v2710 = vmul.f32 %v2668, %v2702
  %v2711 = vmul.f32 %v2670, %v2703
  %v2712 = vmul.f32 %v2672, %v2704
  %2713 = vrot.lane.b32.xlu0 %v2426, 64
  %v2714 = vpop.permute.xlu0 %2713
  %2715 = vrot.lane.b32.xlu0 %v2431, 64
  %v2716 = vpop.permute.xlu0 %2715
  %2717 = vrot.lane.b32.xlu0 %v2436, 64
  %v2718 = vpop.permute.xlu0 %2717
  %2719 = vrot.lane.b32.xlu0 %v2441, 64
  %v2720 = vpop.permute.xlu0 %2719
  %2721 = vrot.lane.b32.xlu0 %v2446, 64
  %v2722 = vpop.permute.xlu0 %2721
  %2723 = vrot.lane.b32.xlu0 %v2451, 64
  %v2724 = vpop.permute.xlu0 %2723
  %2725 = vrot.lane.b32.xlu0 %v2456, 64
  %v2726 = vpop.permute.xlu0 %2725
  %2727 = vrot.lane.b32.xlu0 %v2461, 64
  %v2728 = vpop.permute.xlu0 %2727
  %v2738 = vsel %vm456, %v2705, 0
  %v2741 = vsel %vm456, %v2706, 0
  %v2744 = vsel %vm456, %v2707, 0
  %v2747 = vsel %vm456, %v2708, 0
  %v2750 = vsel %vm456, %v2709, 0
  %v2753 = vsel %vm456, %v2710, 0
  %v2756 = vsel %vm456, %v2711, 0
  %v2759 = vsel %vm456, %v2712, 0
  %2761 = vmatprep.subr.mxu0 0.0
  %2762 = vmatpush1.msra.mxu0 %v2714
  %2763 = vmatprep.subr.mxu0 0.0
  %2764 = vmatpush1.msra.mxu0 %v2716
  %2765 = vmatprep.subr.mxu0 0.0
  %2766 = vmatpush1.msra.mxu0 %v2718
  %2767 = vmatprep.subr.mxu0 0.0
  %2768 = vmatpush1.msra.mxu0 %v2720
  %2769 = vmatprep.subr.mxu0 0.0
  %2770 = vmatpush1.msra.mxu0 %v2722
  %2771 = vmatprep.subr.mxu0 0.0
  %2772 = vmatpush1.msra.mxu0 %v2724
  %2773 = vmatprep.subr.mxu0 0.0
  %2774 = vmatpush1.msra.mxu0 %v2726
  %2775 = vmatprep.subr.mxu0 0.0
  %2776 = vmatpush1.msra.mxu0 %v2728
  %2777 = vmatprep.subr.mxu0 0.0
  %2778 = vmatpush1.msra.mxu0 0.0
  %2779 = vmatprep.subr.mxu0 0.0
  %2780 = vmatpush1.msra.mxu0 0.0
  %2781 = vmatprep.subr.mxu0 0.0
  %2782 = vmatpush1.msra.mxu0 0.0
  %2783 = vmatprep.subr.mxu0 0.0
  %2784 = vmatpush1.msra.mxu0 0.0
  %2785 = vmatprep.subr.mxu0 0.0
  %2786 = vmatpush1.msra.mxu0 0.0
  %2787 = vmatprep.subr.mxu0 0.0
  %2788 = vmatpush1.msra.mxu0 0.0
  %2789 = vmatprep.subr.mxu0 0.0
  %2790 = vmatpush1.msra.mxu0 0.0
  %2791 = vmatprep.subr.mxu0 0.0
  %2792 = vmatpush1.msra.mxu0 0.0
  %2793 = vmatprep.subr.mxu0 0.0
  %2794 = vmatpush1.msra.mxu0 0.0
  %2795 = vmatprep.subr.mxu0 0.0
  %2796 = vmatpush1.msra.mxu0 0.0
  %2797 = vmatprep.subr.mxu0 0.0
  %2798 = vmatpush1.msra.mxu0 0.0
  %2799 = vmatprep.subr.mxu0 0.0
  %2800 = vmatpush1.msra.mxu0 0.0
  %2801 = vmatprep.subr.mxu0 0.0
  %2802 = vmatpush1.msra.mxu0 0.0
  %2803 = vmatprep.subr.mxu0 0.0
  %2804 = vmatpush1.msra.mxu0 0.0
  %2805 = vmatprep.subr.mxu0 0.0
  %2806 = vmatpush1.msra.mxu0 0.0
  %2807 = vmatprep.subr.mxu0 0.0
  %2808 = vmatpush1.msra.mxu0 0.0
  %2809 = vmatprep.subr.mxu0 0.0
  %2810 = vmatpush1.msra.mxu0 0.0
  %2811 = vmatprep.subr.mxu0 0.0
  %2812 = vmatpush1.msra.mxu0 0.0
  %2813 = vmatprep.subr.mxu0 0.0
  %2814 = vmatpush1.msra.mxu0 0.0
  %2815 = vmatprep.subr.mxu0 0.0
  %2816 = vmatpush1.msra.mxu0 0.0
  %2817 = vmatprep.subr.mxu0 0.0
  %2818 = vmatpush1.msra.mxu0 0.0
  %2819 = vmatprep.subr.mxu0 0.0
  %2820 = vmatpush1.msra.mxu0 0.0
  %2821 = vmatprep.subr.mxu0 0.0
  %2822 = vmatpush1.msra.mxu0 0.0
  %2823 = vmatprep.subr.mxu0 0.0
  %2824 = vmatpush1.msra.mxu0 0.0
  %2825 = vmatprep.mubr.f32.mxu0 0.0
  %2826 = vmatmul.mubr.f32.gmra.mrb[0].mxu0 %v2738
  %v2827 = vpop.f32.mrb[0].mxu0
  %v2828 = vadd.f32 0.0, %v2827
  %v2829 = vpop.f32.mrb[0].mxu0
  %2830 = vmatprep.mubr.f32.mxu0 0.0
  %2831 = vmatmul.mubr.f32.gmra.mrb[0].mxu0 %v2741
  %v2832 = vpop.f32.mrb[0].mxu0
  %v2833 = vadd.f32 0.0, %v2832
  %v2834 = vpop.f32.mrb[0].mxu0
  %2835 = vmatprep.mubr.f32.mxu0 0.0
  %2836 = vmatmul.mubr.f32.gmra.mrb[0].mxu0 %v2744
  %v2837 = vpop.f32.mrb[0].mxu0
  %v2838 = vadd.f32 0.0, %v2837
  %v2839 = vpop.f32.mrb[0].mxu0
  %2840 = vmatprep.mubr.f32.mxu0 0.0
  %2841 = vmatmul.mubr.f32.gmra.mrb[0].mxu0 %v2747
  %v2842 = vpop.f32.mrb[0].mxu0
  %v2843 = vadd.f32 0.0, %v2842
  %v2844 = vpop.f32.mrb[0].mxu0
  %2845 = vmatprep.mubr.f32.mxu0 0.0
  %2846 = vmatmul.mubr.f32.gmra.mrb[0].mxu0 %v2750
  %v2847 = vpop.f32.mrb[0].mxu0
  %v2848 = vadd.f32 0.0, %v2847
  %v2849 = vpop.f32.mrb[0].mxu0
  %2850 = vmatprep.mubr.f32.mxu0 0.0
  %2851 = vmatmul.mubr.f32.gmra.mrb[0].mxu0 %v2753
  %v2852 = vpop.f32.mrb[0].mxu0
  %v2853 = vadd.f32 0.0, %v2852
  %v2854 = vpop.f32.mrb[0].mxu0
  %2855 = vmatprep.mubr.f32.mxu0 0.0
  %2856 = vmatmul.mubr.f32.gmra.mrb[0].mxu0 %v2756
  %v2857 = vpop.f32.mrb[0].mxu0
  %v2858 = vadd.f32 0.0, %v2857
  %v2859 = vpop.f32.mrb[0].mxu0
  %2860 = vmatprep.mubr.f32.mxu0 0.0
  %2861 = vmatmul.mubr.f32.gmra.mrb[0].mxu0 %v2759
  %v2862 = vpop.f32.mrb[0].mxu0
  %v2863 = vadd.f32 0.0, %v2862
  %v2864 = vpop.f32.mrb[0].mxu0
  %2865 = vdwg.mxu0
  %2866 = vst.msk [vmem:[#allocation2] sm:$0xff] %vm318, %v2828
  %2867 = vst.msk [vmem:[#allocation2 + $0x8] sm:$0xff] %vm318, %v2833
  %2868 = vst.msk [vmem:[#allocation2 + $0x10] sm:$0xff] %vm318, %v2838
  %2869 = vst.msk [vmem:[#allocation2 + $0x18] sm:$0xff] %vm318, %v2843
  %2870 = vst.msk [vmem:[#allocation2 + $0x20] sm:$0xff] %vm318, %v2848
  %2871 = vst.msk [vmem:[#allocation2 + $0x28] sm:$0xff] %vm318, %v2853
  %2872 = vst.msk [vmem:[#allocation2 + $0x30] sm:$0xff] %vm318, %v2858
  %2873 = vst.msk [vmem:[#allocation2 + $0x38] sm:$0xff] %vm318, %v2863
  %2874 = vrot.lane.b32.xlu0 %v2426, 120
  %v2875 = vpop.permute.xlu0 %2874
  %2876 = vrot.lane.b32.xlu0 %v2431, 120
  %v2877 = vpop.permute.xlu0 %2876
  %2878 = vrot.lane.b32.xlu0 %v2436, 120
  %v2879 = vpop.permute.xlu0 %2878
  %2880 = vrot.lane.b32.xlu0 %v2441, 120
  %v2881 = vpop.permute.xlu0 %2880
  %2882 = vrot.lane.b32.xlu0 %v2446, 120
  %v2883 = vpop.permute.xlu0 %2882
  %2884 = vrot.lane.b32.xlu0 %v2451, 120
  %v2885 = vpop.permute.xlu0 %2884
  %2886 = vrot.lane.b32.xlu0 %v2456, 120
  %v2887 = vpop.permute.xlu0 %2886
  %2888 = vrot.lane.b32.xlu0 %v2461, 120
  %v2889 = vpop.permute.xlu0 %2888
  %2890 = vrot.lane.b32.xlu0 %v2426, 88
  %v2891 = vpop.permute.xlu0 %2890
  %2892 = vrot.lane.b32.xlu0 %v2431, 88
  %v2893 = vpop.permute.xlu0 %2892
  %2894 = vrot.lane.b32.xlu0 %v2436, 88
  %v2895 = vpop.permute.xlu0 %2894
  %2896 = vrot.lane.b32.xlu0 %v2441, 88
  %v2897 = vpop.permute.xlu0 %2896
  %2898 = vrot.lane.b32.xlu0 %v2446, 88
  %v2899 = vpop.permute.xlu0 %2898
  %2900 = vrot.lane.b32.xlu0 %v2451, 88
  %v2901 = vpop.permute.xlu0 %2900
  %2902 = vrot.lane.b32.xlu0 %v2456, 88
  %v2903 = vpop.permute.xlu0 %2902
  %2904 = vrot.lane.b32.xlu0 %v2461, 88
  %v2905 = vpop.permute.xlu0 %2904
  %v2906 = vsel %vm318, %v2875, 0
  %v2908 = vsel %vm318, %v2877, 0
  %v2910 = vsel %vm318, %v2879, 0
  %v2912 = vsel %vm318, %v2881, 0
  %v2914 = vsel %vm318, %v2883, 0
  %v2916 = vsel %vm318, %v2885, 0
  %v2918 = vsel %vm318, %v2887, 0
  %v2920 = vsel %vm318, %v2889, 0
  %v2922 = vsel %vm318, %v2891, 0
  %v2924 = vsel %vm318, %v2893, 0
  %v2926 = vsel %vm318, %v2895, 0
  %v2928 = vsel %vm318, %v2897, 0
  %v2930 = vsel %vm318, %v2899, 0
  %v2932 = vsel %vm318, %v2901, 0
  %v2934 = vsel %vm318, %v2903, 0
  %v2936 = vsel %vm318, %v2905, 0
  %2938 = vmatprep.subr.mxu0 0.0
  %2939 = vmatpush1.xpose.msra.mxu0 %v2922
  %2940 = vmatprep.subr.mxu0 0.0
  %2941 = vmatpush1.xpose.msra.mxu0 %v2924
  %2942 = vmatprep.subr.mxu0 0.0
  %2943 = vmatpush1.xpose.msra.mxu0 %v2926
  %2944 = vmatprep.subr.mxu0 0.0
  %2945 = vmatpush1.xpose.msra.mxu0 %v2928
  %2946 = vmatprep.subr.mxu0 0.0
  %2947 = vmatpush1.xpose.msra.mxu0 %v2930
  %2948 = vmatprep.subr.mxu0 0.0
  %2949 = vmatpush1.xpose.msra.mxu0 %v2932
  %2950 = vmatprep.subr.mxu0 0.0
  %2951 = vmatpush1.xpose.msra.mxu0 %v2934
  %2952 = vmatprep.subr.mxu0 0.0
  %2953 = vmatpush1.xpose.msra.mxu0 %v2936
  %2954 = vmatprep.subr.mxu0 0.0
  %2955 = vmatpush1.xpose.msra.mxu0 0.0
  %2956 = vmatprep.subr.mxu0 0.0
  %2957 = vmatpush1.xpose.msra.mxu0 0.0
  %2958 = vmatprep.subr.mxu0 0.0
  %2959 = vmatpush1.xpose.msra.mxu0 0.0
  %2960 = vmatprep.subr.mxu0 0.0
  %2961 = vmatpush1.xpose.msra.mxu0 0.0
  %2962 = vmatprep.subr.mxu0 0.0
  %2963 = vmatpush1.xpose.msra.mxu0 0.0
  %2964 = vmatprep.subr.mxu0 0.0
  %2965 = vmatpush1.xpose.msra.mxu0 0.0
  %2966 = vmatprep.subr.mxu0 0.0
  %2967 = vmatpush1.xpose.msra.mxu0 0.0
  %2968 = vmatprep.subr.mxu0 0.0
  %2969 = vmatpush1.xpose.msra.mxu0 0.0
  %2970 = vmatprep.subr.mxu0 0.0
  %2971 = vmatpush1.xpose.msra.mxu0 0.0
  %2972 = vmatprep.subr.mxu0 0.0
  %2973 = vmatpush1.xpose.msra.mxu0 0.0
  %2974 = vmatprep.subr.mxu0 0.0
  %2975 = vmatpush1.xpose.msra.mxu0 0.0
  %2976 = vmatprep.subr.mxu0 0.0
  %2977 = vmatpush1.xpose.msra.mxu0 0.0
  %2978 = vmatprep.subr.mxu0 0.0
  %2979 = vmatpush1.xpose.msra.mxu0 0.0
  %2980 = vmatprep.subr.mxu0 0.0
  %2981 = vmatpush1.xpose.msra.mxu0 0.0
  %2982 = vmatprep.subr.mxu0 0.0
  %2983 = vmatpush1.xpose.msra.mxu0 0.0
  %2984 = vmatprep.subr.mxu0 0.0
  %2985 = vmatpush1.xpose.msra.mxu0 0.0
  %2986 = vmatprep.subr.mxu0 0.0
  %2987 = vmatpush1.xpose.msra.mxu0 0.0
  %2988 = vmatprep.subr.mxu0 0.0
  %2989 = vmatpush1.xpose.msra.mxu0 0.0
  %2990 = vmatprep.subr.mxu0 0.0
  %2991 = vmatpush1.xpose.msra.mxu0 0.0
  %2992 = vmatprep.subr.mxu0 0.0
  %2993 = vmatpush1.xpose.msra.mxu0 0.0
  %2994 = vmatprep.subr.mxu0 0.0
  %2995 = vmatpush1.xpose.msra.mxu0 0.0
  %2996 = vmatprep.subr.mxu0 0.0
  %2997 = vmatpush1.xpose.msra.mxu0 0.0
  %2998 = vmatprep.subr.mxu0 0.0
  %2999 = vmatpush1.xpose.msra.mxu0 0.0
  %3000 = vmatprep.subr.mxu0 0.0
  %3001 = vmatpush1.xpose.msra.mxu0 0.0
  %3002 = vmatprep.mubr.f32.mxu0 0.0
  %3003 = vmatmul.mubr.f32.gmra.mrb[0].mxu0 %v2906
  %v3004 = vpop.f32.mrb[0].mxu0
  %v3005 = vadd.f32 0.0, %v3004
  %v3006 = vpop.f32.mrb[0].mxu0
  %3007 = vmatprep.mubr.f32.mxu0 0.0
  %3008 = vmatmul.mubr.f32.gmra.mrb[0].mxu0 %v2908
  %v3009 = vpop.f32.mrb[0].mxu0
  %v3010 = vadd.f32 0.0, %v3009
  %v3011 = vpop.f32.mrb[0].mxu0
  %3012 = vmatprep.mubr.f32.mxu0 0.0
  %3013 = vmatmul.mubr.f32.gmra.mrb[0].mxu0 %v2910
  %v3014 = vpop.f32.mrb[0].mxu0
  %v3015 = vadd.f32 0.0, %v3014
  %v3016 = vpop.f32.mrb[0].mxu0
  %3017 = vmatprep.mubr.f32.mxu0 0.0
  %3018 = vmatmul.mubr.f32.gmra.mrb[0].mxu0 %v2912
  %v3019 = vpop.f32.mrb[0].mxu0
  %v3020 = vadd.f32 0.0, %v3019
  %v3021 = vpop.f32.mrb[0].mxu0
  %3022 = vmatprep.mubr.f32.mxu0 0.0
  %3023 = vmatmul.mubr.f32.gmra.mrb[0].mxu0 %v2914
  %v3024 = vpop.f32.mrb[0].mxu0
  %v3025 = vadd.f32 0.0, %v3024
  %v3026 = vpop.f32.mrb[0].mxu0
  %3027 = vmatprep.mubr.f32.mxu0 0.0
  %3028 = vmatmul.mubr.f32.gmra.mrb[0].mxu0 %v2916
  %v3029 = vpop.f32.mrb[0].mxu0
  %v3030 = vadd.f32 0.0, %v3029
  %v3031 = vpop.f32.mrb[0].mxu0
  %3032 = vmatprep.mubr.f32.mxu0 0.0
  %3033 = vmatmul.mubr.f32.gmra.mrb[0].mxu0 %v2918
  %v3034 = vpop.f32.mrb[0].mxu0
  %v3035 = vadd.f32 0.0, %v3034
  %v3036 = vpop.f32.mrb[0].mxu0
  %3037 = vmatprep.mubr.f32.mxu0 0.0
  %3038 = vmatmul.mubr.f32.gmra.mrb[0].mxu0 %v2920
  %v3039 = vpop.f32.mrb[0].mxu0
  %v3040 = vadd.f32 0.0, %v3039
  %v3041 = vpop.f32.mrb[0].mxu0
  %3042 = vdwg.mxu0
  %v3043 = vsel %vm456, %v3005, -inf
  %3044 = vmax.xlane.f32.xlu0 %v3043
  %v3045 = vpop.xlane.xlu0 %3044
  %v3046 = vsel %vm456, %v3010, -inf
  %3047 = vmax.xlane.f32.xlu0 %v3046
  %v3048 = vpop.xlane.xlu0 %3047
  %v3049 = vsel %vm456, %v3015, -inf
  %3050 = vmax.xlane.f32.xlu0 %v3049
  %v3051 = vpop.xlane.xlu0 %3050
  %v3052 = vsel %vm456, %v3020, -inf
  %3053 = vmax.xlane.f32.xlu0 %v3052
  %v3054 = vpop.xlane.xlu0 %3053
  %v3055 = vsel %vm456, %v3025, -inf
  %3056 = vmax.xlane.f32.xlu0 %v3055
  %v3057 = vpop.xlane.xlu0 %3056
  %v3058 = vsel %vm456, %v3030, -inf
  %3059 = vmax.xlane.f32.xlu0 %v3058
  %v3060 = vpop.xlane.xlu0 %3059
  %v3061 = vsel %vm456, %v3035, -inf
  %3062 = vmax.xlane.f32.xlu0 %v3061
  %v3063 = vpop.xlane.xlu0 %3062
  %v3064 = vsel %vm456, %v3040, -inf
  %3065 = vmax.xlane.f32.xlu0 %v3064
  %v3066 = vpop.xlane.xlu0 %3065
  %v3067 = vsub.f32 %v3005, %v3045
  %v3068 = vsub.f32 %v3010, %v3048
  %v3069 = vsub.f32 %v3015, %v3051
  %v3070 = vsub.f32 %v3020, %v3054
  %v3071 = vsub.f32 %v3025, %v3057
  %v3072 = vsub.f32 %v3030, %v3060
  %v3073 = vsub.f32 %v3035, %v3063
  %v3074 = vsub.f32 %v3040, %v3066
  %v3075 = vmul.f32 %v3067, 1.442695
  %v3076 = vpow.pop %v3075
  %v3077 = vmul.f32 %v3068, 1.442695
  %v3078 = vpow.pop %v3077
  %v3079 = vmul.f32 %v3069, 1.442695
  %v3080 = vpow.pop %v3079
  %v3081 = vmul.f32 %v3070, 1.442695
  %v3082 = vpow.pop %v3081
  %v3083 = vmul.f32 %v3071, 1.442695
  %v3084 = vpow.pop %v3083
  %v3085 = vmul.f32 %v3072, 1.442695
  %v3086 = vpow.pop %v3085
  %v3087 = vmul.f32 %v3073, 1.442695
  %v3088 = vpow.pop %v3087
  %v3089 = vmul.f32 %v3074, 1.442695
  %v3090 = vpow.pop %v3089
  %v3091 = vsel %vm456, %v3076, 0.0
  %3092 = vadd.xlane.f32.xlu0 %v3091
  %v3093 = vpop.xlane.xlu0 %3092
  %v3094 = vsel %vm456, %v3078, 0.0
  %3095 = vadd.xlane.f32.xlu0 %v3094
  %v3096 = vpop.xlane.xlu0 %3095
  %v3097 = vsel %vm456, %v3080, 0.0
  %3098 = vadd.xlane.f32.xlu0 %v3097
  %v3099 = vpop.xlane.xlu0 %3098
  %v3100 = vsel %vm456, %v3082, 0.0
  %3101 = vadd.xlane.f32.xlu0 %v3100
  %v3102 = vpop.xlane.xlu0 %3101
  %v3103 = vsel %vm456, %v3084, 0.0
  %3104 = vadd.xlane.f32.xlu0 %v3103
  %v3105 = vpop.xlane.xlu0 %3104
  %v3106 = vsel %vm456, %v3086, 0.0
  %3107 = vadd.xlane.f32.xlu0 %v3106
  %v3108 = vpop.xlane.xlu0 %3107
  %v3109 = vsel %vm456, %v3088, 0.0
  %3110 = vadd.xlane.f32.xlu0 %v3109
  %v3111 = vpop.xlane.xlu0 %3110
  %v3112 = vsel %vm456, %v3090, 0.0
  %3113 = vadd.xlane.f32.xlu0 %v3112
  %v3114 = vpop.xlane.xlu0 %3113
  %v3115 = vrcp.pop %v3093
  %v3116 = vrcp.pop %v3096
  %v3117 = vrcp.pop %v3099
  %v3118 = vrcp.pop %v3102
  %v3119 = vrcp.pop %v3105
  %v3120 = vrcp.pop %v3108
  %v3121 = vrcp.pop %v3111
  %v3122 = vrcp.pop %v3114
  %v3123 = vmul.f32 %v3076, %v3115
  %v3124 = vmul.f32 %v3078, %v3116
  %v3125 = vmul.f32 %v3080, %v3117
  %v3126 = vmul.f32 %v3082, %v3118
  %v3127 = vmul.f32 %v3084, %v3119
  %v3128 = vmul.f32 %v3086, %v3120
  %v3129 = vmul.f32 %v3088, %v3121
  %v3130 = vmul.f32 %v3090, %v3122
  %3131 = vrot.lane.b32.xlu0 %v2426, 56
  %v3132 = vpop.permute.xlu0 %3131
  %3133 = vrot.lane.b32.xlu0 %v2431, 56
  %v3134 = vpop.permute.xlu0 %3133
  %3135 = vrot.lane.b32.xlu0 %v2436, 56
  %v3136 = vpop.permute.xlu0 %3135
  %3137 = vrot.lane.b32.xlu0 %v2441, 56
  %v3138 = vpop.permute.xlu0 %3137
  %3139 = vrot.lane.b32.xlu0 %v2446, 56
  %v3140 = vpop.permute.xlu0 %3139
  %3141 = vrot.lane.b32.xlu0 %v2451, 56
  %v3142 = vpop.permute.xlu0 %3141
  %3143 = vrot.lane.b32.xlu0 %v2456, 56
  %v3144 = vpop.permute.xlu0 %3143
  %3145 = vrot.lane.b32.xlu0 %v2461, 56
  %v3146 = vpop.permute.xlu0 %3145
  %v3156 = vsel %vm456, %v3123, 0
  %v3159 = vsel %vm456, %v3124, 0
  %v3162 = vsel %vm456, %v3125, 0
  %v3165 = vsel %vm456, %v3126, 0
  %v3168 = vsel %vm456, %v3127, 0
  %v3171 = vsel %vm456, %v3128, 0
  %v3174 = vsel %vm456, %v3129, 0
  %v3177 = vsel %vm456, %v3130, 0
  %3179 = vmatprep.subr.mxu0 0.0
  %3180 = vmatpush1.msra.mxu0 %v3132
  %3181 = vmatprep.subr.mxu0 0.0
  %3182 = vmatpush1.msra.mxu0 %v3134
  %3183 = vmatprep.subr.mxu0 0.0
  %3184 = vmatpush1.msra.mxu0 %v3136
  %3185 = vmatprep.subr.mxu0 0.0
  %3186 = vmatpush1.msra.mxu0 %v3138
  %3187 = vmatprep.subr.mxu0 0.0
  %3188 = vmatpush1.msra.mxu0 %v3140
  %3189 = vmatprep.subr.mxu0 0.0
  %3190 = vmatpush1.msra.mxu0 %v3142
  %3191 = vmatprep.subr.mxu0 0.0
  %3192 = vmatpush1.msra.mxu0 %v3144
  %3193 = vmatprep.subr.mxu0 0.0
  %3194 = vmatpush1.msra.mxu0 %v3146
  %3195 = vmatprep.subr.mxu0 0.0
  %3196 = vmatpush1.msra.mxu0 0.0
  %3197 = vmatprep.subr.mxu0 0.0
  %3198 = vmatpush1.msra.mxu0 0.0
  %3199 = vmatprep.subr.mxu0 0.0
  %3200 = vmatpush1.msra.mxu0 0.0
  %3201 = vmatprep.subr.mxu0 0.0
  %3202 = vmatpush1.msra.mxu0 0.0
  %3203 = vmatprep.subr.mxu0 0.0
  %3204 = vmatpush1.msra.mxu0 0.0
  %3205 = vmatprep.subr.mxu0 0.0
  %3206 = vmatpush1.msra.mxu0 0.0
  %3207 = vmatprep.subr.mxu0 0.0
  %3208 = vmatpush1.msra.mxu0 0.0
  %3209 = vmatprep.subr.mxu0 0.0
  %3210 = vmatpush1.msra.mxu0 0.0
  %3211 = vmatprep.subr.mxu0 0.0
  %3212 = vmatpush1.msra.mxu0 0.0
  %3213 = vmatprep.subr.mxu0 0.0
  %3214 = vmatpush1.msra.mxu0 0.0
  %3215 = vmatprep.subr.mxu0 0.0
  %3216 = vmatpush1.msra.mxu0 0.0
  %3217 = vmatprep.subr.mxu0 0.0
  %3218 = vmatpush1.msra.mxu0 0.0
  %3219 = vmatprep.subr.mxu0 0.0
  %3220 = vmatpush1.msra.mxu0 0.0
  %3221 = vmatprep.subr.mxu0 0.0
  %3222 = vmatpush1.msra.mxu0 0.0
  %3223 = vmatprep.subr.mxu0 0.0
  %3224 = vmatpush1.msra.mxu0 0.0
  %3225 = vmatprep.subr.mxu0 0.0
  %3226 = vmatpush1.msra.mxu0 0.0
  %3227 = vmatprep.subr.mxu0 0.0
  %3228 = vmatpush1.msra.mxu0 0.0
  %3229 = vmatprep.subr.mxu0 0.0
  %3230 = vmatpush1.msra.mxu0 0.0
  %3231 = vmatprep.subr.mxu0 0.0
  %3232 = vmatpush1.msra.mxu0 0.0
  %3233 = vmatprep.subr.mxu0 0.0
  %3234 = vmatpush1.msra.mxu0 0.0
  %3235 = vmatprep.subr.mxu0 0.0
  %3236 = vmatpush1.msra.mxu0 0.0
  %3237 = vmatprep.subr.mxu0 0.0
  %3238 = vmatpush1.msra.mxu0 0.0
  %3239 = vmatprep.subr.mxu0 0.0
  %3240 = vmatpush1.msra.mxu0 0.0
  %3241 = vmatprep.subr.mxu0 0.0
  %3242 = vmatpush1.msra.mxu0 0.0
  %3243 = vmatprep.mubr.f32.mxu0 0.0
  %3244 = vmatmul.mubr.f32.gmra.mrb[0].mxu0 %v3156
  %v3245 = vpop.f32.mrb[0].mxu0
  %v3246 = vadd.f32 0.0, %v3245
  %v3247 = vpop.f32.mrb[0].mxu0
  %3248 = vmatprep.mubr.f32.mxu0 0.0
  %3249 = vmatmul.mubr.f32.gmra.mrb[0].mxu0 %v3159
  %v3250 = vpop.f32.mrb[0].mxu0
  %v3251 = vadd.f32 0.0, %v3250
  %v3252 = vpop.f32.mrb[0].mxu0
  %3253 = vmatprep.mubr.f32.mxu0 0.0
  %3254 = vmatmul.mubr.f32.gmra.mrb[0].mxu0 %v3162
  %v3255 = vpop.f32.mrb[0].mxu0
  %v3256 = vadd.f32 0.0, %v3255
  %v3257 = vpop.f32.mrb[0].mxu0
  %3258 = vmatprep.mubr.f32.mxu0 0.0
  %3259 = vmatmul.mubr.f32.gmra.mrb[0].mxu0 %v3165
  %v3260 = vpop.f32.mrb[0].mxu0
  %v3261 = vadd.f32 0.0, %v3260
  %v3262 = vpop.f32.mrb[0].mxu0
  %3263 = vmatprep.mubr.f32.mxu0 0.0
  %3264 = vmatmul.mubr.f32.gmra.mrb[0].mxu0 %v3168
  %v3265 = vpop.f32.mrb[0].mxu0
  %v3266 = vadd.f32 0.0, %v3265
  %v3267 = vpop.f32.mrb[0].mxu0
  %3268 = vmatprep.mubr.f32.mxu0 0.0
  %3269 = vmatmul.mubr.f32.gmra.mrb[0].mxu0 %v3171
  %v3270 = vpop.f32.mrb[0].mxu0
  %v3271 = vadd.f32 0.0, %v3270
  %v3272 = vpop.f32.mrb[0].mxu0
  %3273 = vmatprep.mubr.f32.mxu0 0.0
  %3274 = vmatmul.mubr.f32.gmra.mrb[0].mxu0 %v3174
  %v3275 = vpop.f32.mrb[0].mxu0
  %v3276 = vadd.f32 0.0, %v3275
  %v3277 = vpop.f32.mrb[0].mxu0
  %3278 = vmatprep.mubr.f32.mxu0 0.0
  %3279 = vmatmul.mubr.f32.gmra.mrb[0].mxu0 %v3177
  %v3280 = vpop.f32.mrb[0].mxu0
  %v3281 = vadd.f32 0.0, %v3280
  %v3282 = vpop.f32.mrb[0].mxu0
  %3283 = vdwg.mxu0
  %3292 = vrot.lane.b32.xlu0 %v3246, 8
  %v3293 = vpop.permute.xlu0 %3292
  %3294 = vrot.lane.b32.xlu0 %v3251, 8
  %v3295 = vpop.permute.xlu0 %3294
  %3296 = vrot.lane.b32.xlu0 %v3256, 8
  %v3297 = vpop.permute.xlu0 %3296
  %3298 = vrot.lane.b32.xlu0 %v3261, 8
  %v3299 = vpop.permute.xlu0 %3298
  %3300 = vrot.lane.b32.xlu0 %v3266, 8
  %v3301 = vpop.permute.xlu0 %3300
  %3302 = vrot.lane.b32.xlu0 %v3271, 8
  %v3303 = vpop.permute.xlu0 %3302
  %3304 = vrot.lane.b32.xlu0 %v3276, 8
  %v3305 = vpop.permute.xlu0 %3304
  %3306 = vrot.lane.b32.xlu0 %v3281, 8
  %v3307 = vpop.permute.xlu0 %3306
  %3316 = vst.msk [vmem:[#allocation2] sm:$0xff] %vm1148, %v3293
  %3317 = vst.msk [vmem:[#allocation2 + $0x8] sm:$0xff] %vm1148, %v3295
  %3318 = vst.msk [vmem:[#allocation2 + $0x10] sm:$0xff] %vm1148, %v3297
  %3319 = vst.msk [vmem:[#allocation2 + $0x18] sm:$0xff] %vm1148, %v3299
  %3320 = vst.msk [vmem:[#allocation2 + $0x20] sm:$0xff] %vm1148, %v3301
  %3321 = vst.msk [vmem:[#allocation2 + $0x28] sm:$0xff] %vm1148, %v3303
  %3322 = vst.msk [vmem:[#allocation2 + $0x30] sm:$0xff] %vm1148, %v3305
  %3323 = vst.msk [vmem:[#allocation2 + $0x38] sm:$0xff] %vm1148, %v3307
  %3324 = vrot.lane.b32.xlu0 %v2426, 112
  %v3325 = vpop.permute.xlu0 %3324
  %3326 = vrot.lane.b32.xlu0 %v2431, 112
  %v3327 = vpop.permute.xlu0 %3326
  %3328 = vrot.lane.b32.xlu0 %v2436, 112
  %v3329 = vpop.permute.xlu0 %3328
  %3330 = vrot.lane.b32.xlu0 %v2441, 112
  %v3331 = vpop.permute.xlu0 %3330
  %3332 = vrot.lane.b32.xlu0 %v2446, 112
  %v3333 = vpop.permute.xlu0 %3332
  %3334 = vrot.lane.b32.xlu0 %v2451, 112
  %v3335 = vpop.permute.xlu0 %3334
  %3336 = vrot.lane.b32.xlu0 %v2456, 112
  %v3337 = vpop.permute.xlu0 %3336
  %3338 = vrot.lane.b32.xlu0 %v2461, 112
  %v3339 = vpop.permute.xlu0 %3338
  %3340 = vrot.lane.b32.xlu0 %v2426, 80
  %v3341 = vpop.permute.xlu0 %3340
  %3342 = vrot.lane.b32.xlu0 %v2431, 80
  %v3343 = vpop.permute.xlu0 %3342
  %3344 = vrot.lane.b32.xlu0 %v2436, 80
  %v3345 = vpop.permute.xlu0 %3344
  %3346 = vrot.lane.b32.xlu0 %v2441, 80
  %v3347 = vpop.permute.xlu0 %3346
  %3348 = vrot.lane.b32.xlu0 %v2446, 80
  %v3349 = vpop.permute.xlu0 %3348
  %3350 = vrot.lane.b32.xlu0 %v2451, 80
  %v3351 = vpop.permute.xlu0 %3350
  %3352 = vrot.lane.b32.xlu0 %v2456, 80
  %v3353 = vpop.permute.xlu0 %3352
  %3354 = vrot.lane.b32.xlu0 %v2461, 80
  %v3355 = vpop.permute.xlu0 %3354
  %v3356 = vsel %vm318, %v3325, 0
  %v3358 = vsel %vm318, %v3327, 0
  %v3360 = vsel %vm318, %v3329, 0
  %v3362 = vsel %vm318, %v3331, 0
  %v3364 = vsel %vm318, %v3333, 0
  %v3366 = vsel %vm318, %v3335, 0
  %v3368 = vsel %vm318, %v3337, 0
  %v3370 = vsel %vm318, %v3339, 0
  %v3372 = vsel %vm318, %v3341, 0
  %v3374 = vsel %vm318, %v3343, 0
  %v3376 = vsel %vm318, %v3345, 0
  %v3378 = vsel %vm318, %v3347, 0
  %v3380 = vsel %vm318, %v3349, 0
  %v3382 = vsel %vm318, %v3351, 0
  %v3384 = vsel %vm318, %v3353, 0
  %v3386 = vsel %vm318, %v3355, 0
  %3388 = vmatprep.subr.mxu0 0.0
  %3389 = vmatpush1.xpose.msra.mxu0 %v3372
  %3390 = vmatprep.subr.mxu0 0.0
  %3391 = vmatpush1.xpose.msra.mxu0 %v3374
  %3392 = vmatprep.subr.mxu0 0.0
  %3393 = vmatpush1.xpose.msra.mxu0 %v3376
  %3394 = vmatprep.subr.mxu0 0.0
  %3395 = vmatpush1.xpose.msra.mxu0 %v3378
  %3396 = vmatprep.subr.mxu0 0.0
  %3397 = vmatpush1.xpose.msra.mxu0 %v3380
  %3398 = vmatprep.subr.mxu0 0.0
  %3399 = vmatpush1.xpose.msra.mxu0 %v3382
  %3400 = vmatprep.subr.mxu0 0.0
  %3401 = vmatpush1.xpose.msra.mxu0 %v3384
  %3402 = vmatprep.subr.mxu0 0.0
  %3403 = vmatpush1.xpose.msra.mxu0 %v3386
  %3404 = vmatprep.subr.mxu0 0.0
  %3405 = vmatpush1.xpose.msra.mxu0 0.0
  %3406 = vmatprep.subr.mxu0 0.0
  %3407 = vmatpush1.xpose.msra.mxu0 0.0
  %3408 = vmatprep.subr.mxu0 0.0
  %3409 = vmatpush1.xpose.msra.mxu0 0.0
  %3410 = vmatprep.subr.mxu0 0.0
  %3411 = vmatpush1.xpose.msra.mxu0 0.0
  %3412 = vmatprep.subr.mxu0 0.0
  %3413 = vmatpush1.xpose.msra.mxu0 0.0
  %3414 = vmatprep.subr.mxu0 0.0
  %3415 = vmatpush1.xpose.msra.mxu0 0.0
  %3416 = vmatprep.subr.mxu0 0.0
  %3417 = vmatpush1.xpose.msra.mxu0 0.0
  %3418 = vmatprep.subr.mxu0 0.0
  %3419 = vmatpush1.xpose.msra.mxu0 0.0
  %3420 = vmatprep.subr.mxu0 0.0
  %3421 = vmatpush1.xpose.msra.mxu0 0.0
  %3422 = vmatprep.subr.mxu0 0.0
  %3423 = vmatpush1.xpose.msra.mxu0 0.0
  %3424 = vmatprep.subr.mxu0 0.0
  %3425 = vmatpush1.xpose.msra.mxu0 0.0
  %3426 = vmatprep.subr.mxu0 0.0
  %3427 = vmatpush1.xpose.msra.mxu0 0.0
  %3428 = vmatprep.subr.mxu0 0.0
  %3429 = vmatpush1.xpose.msra.mxu0 0.0
  %3430 = vmatprep.subr.mxu0 0.0
  %3431 = vmatpush1.xpose.msra.mxu0 0.0
  %3432 = vmatprep.subr.mxu0 0.0
  %3433 = vmatpush1.xpose.msra.mxu0 0.0
  %3434 = vmatprep.subr.mxu0 0.0
  %3435 = vmatpush1.xpose.msra.mxu0 0.0
  %3436 = vmatprep.subr.mxu0 0.0
  %3437 = vmatpush1.xpose.msra.mxu0 0.0
  %3438 = vmatprep.subr.mxu0 0.0
  %3439 = vmatpush1.xpose.msra.mxu0 0.0
  %3440 = vmatprep.subr.mxu0 0.0
  %3441 = vmatpush1.xpose.msra.mxu0 0.0
  %3442 = vmatprep.subr.mxu0 0.0
  %3443 = vmatpush1.xpose.msra.mxu0 0.0
  %3444 = vmatprep.subr.mxu0 0.0
  %3445 = vmatpush1.xpose.msra.mxu0 0.0
  %3446 = vmatprep.subr.mxu0 0.0
  %3447 = vmatpush1.xpose.msra.mxu0 0.0
  %3448 = vmatprep.subr.mxu0 0.0
  %3449 = vmatpush1.xpose.msra.mxu0 0.0
  %3450 = vmatprep.subr.mxu0 0.0
  %3451 = vmatpush1.xpose.msra.mxu0 0.0
  %3452 = vmatprep.mubr.f32.mxu0 0.0
  %3453 = vmatmul.mubr.f32.gmra.mrb[0].mxu0 %v3356
  %v3454 = vpop.f32.mrb[0].mxu0
  %v3455 = vadd.f32 0.0, %v3454
  %v3456 = vpop.f32.mrb[0].mxu0
  %3457 = vmatprep.mubr.f32.mxu0 0.0
  %3458 = vmatmul.mubr.f32.gmra.mrb[0].mxu0 %v3358
  %v3459 = vpop.f32.mrb[0].mxu0
  %v3460 = vadd.f32 0.0, %v3459
  %v3461 = vpop.f32.mrb[0].mxu0
  %3462 = vmatprep.mubr.f32.mxu0 0.0
  %3463 = vmatmul.mubr.f32.gmra.mrb[0].mxu0 %v3360
  %v3464 = vpop.f32.mrb[0].mxu0
  %v3465 = vadd.f32 0.0, %v3464
  %v3466 = vpop.f32.mrb[0].mxu0
  %3467 = vmatprep.mubr.f32.mxu0 0.0
  %3468 = vmatmul.mubr.f32.gmra.mrb[0].mxu0 %v3362
  %v3469 = vpop.f32.mrb[0].mxu0
  %v3470 = vadd.f32 0.0, %v3469
  %v3471 = vpop.f32.mrb[0].mxu0
  %3472 = vmatprep.mubr.f32.mxu0 0.0
  %3473 = vmatmul.mubr.f32.gmra.mrb[0].mxu0 %v3364
  %v3474 = vpop.f32.mrb[0].mxu0
  %v3475 = vadd.f32 0.0, %v3474
  %v3476 = vpop.f32.mrb[0].mxu0
  %3477 = vmatprep.mubr.f32.mxu0 0.0
  %3478 = vmatmul.mubr.f32.gmra.mrb[0].mxu0 %v3366
  %v3479 = vpop.f32.mrb[0].mxu0
  %v3480 = vadd.f32 0.0, %v3479
  %v3481 = vpop.f32.mrb[0].mxu0
  %3482 = vmatprep.mubr.f32.mxu0 0.0
  %3483 = vmatmul.mubr.f32.gmra.mrb[0].mxu0 %v3368
  %v3484 = vpop.f32.mrb[0].mxu0
  %v3485 = vadd.f32 0.0, %v3484
  %v3486 = vpop.f32.mrb[0].mxu0
  %3487 = vmatprep.mubr.f32.mxu0 0.0
  %3488 = vmatmul.mubr.f32.gmra.mrb[0].mxu0 %v3370
  %v3489 = vpop.f32.mrb[0].mxu0
  %v3490 = vadd.f32 0.0, %v3489
  %v3491 = vpop.f32.mrb[0].mxu0
  %3492 = vdwg.mxu0
  %v3493 = vsel %vm456, %v3455, -inf
  %3494 = vmax.xlane.f32.xlu0 %v3493
  %v3495 = vpop.xlane.xlu0 %3494
  %v3496 = vsel %vm456, %v3460, -inf
  %3497 = vmax.xlane.f32.xlu0 %v3496
  %v3498 = vpop.xlane.xlu0 %3497
  %v3499 = vsel %vm456, %v3465, -inf
  %3500 = vmax.xlane.f32.xlu0 %v3499
  %v3501 = vpop.xlane.xlu0 %3500
  %v3502 = vsel %vm456, %v3470, -inf
  %3503 = vmax.xlane.f32.xlu0 %v3502
  %v3504 = vpop.xlane.xlu0 %3503
  %v3505 = vsel %vm456, %v3475, -inf
  %3506 = vmax.xlane.f32.xlu0 %v3505
  %v3507 = vpop.xlane.xlu0 %3506
  %v3508 = vsel %vm456, %v3480, -inf
  %3509 = vmax.xlane.f32.xlu0 %v3508
  %v3510 = vpop.xlane.xlu0 %3509
  %v3511 = vsel %vm456, %v3485, -inf
  %3512 = vmax.xlane.f32.xlu0 %v3511
  %v3513 = vpop.xlane.xlu0 %3512
  %v3514 = vsel %vm456, %v3490, -inf
  %3515 = vmax.xlane.f32.xlu0 %v3514
  %v3516 = vpop.xlane.xlu0 %3515
  %v3517 = vsub.f32 %v3455, %v3495
  %v3518 = vsub.f32 %v3460, %v3498
  %v3519 = vsub.f32 %v3465, %v3501
  %v3520 = vsub.f32 %v3470, %v3504
  %v3521 = vsub.f32 %v3475, %v3507
  %v3522 = vsub.f32 %v3480, %v3510
  %v3523 = vsub.f32 %v3485, %v3513
  %v3524 = vsub.f32 %v3490, %v3516
  %v3525 = vmul.f32 %v3517, 1.442695
  %v3526 = vpow.pop %v3525
  %v3527 = vmul.f32 %v3518, 1.442695
  %v3528 = vpow.pop %v3527
  %v3529 = vmul.f32 %v3519, 1.442695
  %v3530 = vpow.pop %v3529
  %v3531 = vmul.f32 %v3520, 1.442695
  %v3532 = vpow.pop %v3531
  %v3533 = vmul.f32 %v3521, 1.442695
  %v3534 = vpow.pop %v3533
  %v3535 = vmul.f32 %v3522, 1.442695
  %v3536 = vpow.pop %v3535
  %v3537 = vmul.f32 %v3523, 1.442695
  %v3538 = vpow.pop %v3537
  %v3539 = vmul.f32 %v3524, 1.442695
  %v3540 = vpow.pop %v3539
  %v3541 = vsel %vm456, %v3526, 0.0
  %3542 = vadd.xlane.f32.xlu0 %v3541
  %v3543 = vpop.xlane.xlu0 %3542
  %v3544 = vsel %vm456, %v3528, 0.0
  %3545 = vadd.xlane.f32.xlu0 %v3544
  %v3546 = vpop.xlane.xlu0 %3545
  %v3547 = vsel %vm456, %v3530, 0.0
  %3548 = vadd.xlane.f32.xlu0 %v3547
  %v3549 = vpop.xlane.xlu0 %3548
  %v3550 = vsel %vm456, %v3532, 0.0
  %3551 = vadd.xlane.f32.xlu0 %v3550
  %v3552 = vpop.xlane.xlu0 %3551
  %v3553 = vsel %vm456, %v3534, 0.0
  %3554 = vadd.xlane.f32.xlu0 %v3553
  %v3555 = vpop.xlane.xlu0 %3554
  %v3556 = vsel %vm456, %v3536, 0.0
  %3557 = vadd.xlane.f32.xlu0 %v3556
  %v3558 = vpop.xlane.xlu0 %3557
  %v3559 = vsel %vm456, %v3538, 0.0
  %3560 = vadd.xlane.f32.xlu0 %v3559
  %v3561 = vpop.xlane.xlu0 %3560
  %v3562 = vsel %vm456, %v3540, 0.0
  %3563 = vadd.xlane.f32.xlu0 %v3562
  %v3564 = vpop.xlane.xlu0 %3563
  %v3565 = vrcp.pop %v3543
  %v3566 = vrcp.pop %v3546
  %v3567 = vrcp.pop %v3549
  %v3568 = vrcp.pop %v3552
  %v3569 = vrcp.pop %v3555
  %v3570 = vrcp.pop %v3558
  %v3571 = vrcp.pop %v3561
  %v3572 = vrcp.pop %v3564
  %v3573 = vmul.f32 %v3526, %v3565
  %v3574 = vmul.f32 %v3528, %v3566
  %v3575 = vmul.f32 %v3530, %v3567
  %v3576 = vmul.f32 %v3532, %v3568
  %v3577 = vmul.f32 %v3534, %v3569
  %v3578 = vmul.f32 %v3536, %v3570
  %v3579 = vmul.f32 %v3538, %v3571
  %v3580 = vmul.f32 %v3540, %v3572
  %3581 = vrot.lane.b32.xlu0 %v2426, 48
  %v3582 = vpop.permute.xlu0 %3581
  %3583 = vrot.lane.b32.xlu0 %v2431, 48
  %v3584 = vpop.permute.xlu0 %3583
  %3585 = vrot.lane.b32.xlu0 %v2436, 48
  %v3586 = vpop.permute.xlu0 %3585
  %3587 = vrot.lane.b32.xlu0 %v2441, 48
  %v3588 = vpop.permute.xlu0 %3587
  %3589 = vrot.lane.b32.xlu0 %v2446, 48
  %v3590 = vpop.permute.xlu0 %3589
  %3591 = vrot.lane.b32.xlu0 %v2451, 48
  %v3592 = vpop.permute.xlu0 %3591
  %3593 = vrot.lane.b32.xlu0 %v2456, 48
  %v3594 = vpop.permute.xlu0 %3593
  %3595 = vrot.lane.b32.xlu0 %v2461, 48
  %v3596 = vpop.permute.xlu0 %3595
  %v3606 = vsel %vm456, %v3573, 0
  %v3609 = vsel %vm456, %v3574, 0
  %v3612 = vsel %vm456, %v3575, 0
  %v3615 = vsel %vm456, %v3576, 0
  %v3618 = vsel %vm456, %v3577, 0
  %v3621 = vsel %vm456, %v3578, 0
  %v3624 = vsel %vm456, %v3579, 0
  %v3627 = vsel %vm456, %v3580, 0
  %3629 = vmatprep.subr.mxu0 0.0
  %3630 = vmatpush1.msra.mxu0 %v3582
  %3631 = vmatprep.subr.mxu0 0.0
  %3632 = vmatpush1.msra.mxu0 %v3584
  %3633 = vmatprep.subr.mxu0 0.0
  %3634 = vmatpush1.msra.mxu0 %v3586
  %3635 = vmatprep.subr.mxu0 0.0
  %3636 = vmatpush1.msra.mxu0 %v3588
  %3637 = vmatprep.subr.mxu0 0.0
  %3638 = vmatpush1.msra.mxu0 %v3590
  %3639 = vmatprep.subr.mxu0 0.0
  %3640 = vmatpush1.msra.mxu0 %v3592
  %3641 = vmatprep.subr.mxu0 0.0
  %3642 = vmatpush1.msra.mxu0 %v3594
  %3643 = vmatprep.subr.mxu0 0.0
  %3644 = vmatpush1.msra.mxu0 %v3596
  %3645 = vmatprep.subr.mxu0 0.0
  %3646 = vmatpush1.msra.mxu0 0.0
  %3647 = vmatprep.subr.mxu0 0.0
  %3648 = vmatpush1.msra.mxu0 0.0
  %3649 = vmatprep.subr.mxu0 0.0
  %3650 = vmatpush1.msra.mxu0 0.0
  %3651 = vmatprep.subr.mxu0 0.0
  %3652 = vmatpush1.msra.mxu0 0.0
  %3653 = vmatprep.subr.mxu0 0.0
  %3654 = vmatpush1.msra.mxu0 0.0
  %3655 = vmatprep.subr.mxu0 0.0
  %3656 = vmatpush1.msra.mxu0 0.0
  %3657 = vmatprep.subr.mxu0 0.0
  %3658 = vmatpush1.msra.mxu0 0.0
  %3659 = vmatprep.subr.mxu0 0.0
  %3660 = vmatpush1.msra.mxu0 0.0
  %3661 = vmatprep.subr.mxu0 0.0
  %3662 = vmatpush1.msra.mxu0 0.0
  %3663 = vmatprep.subr.mxu0 0.0
  %3664 = vmatpush1.msra.mxu0 0.0
  %3665 = vmatprep.subr.mxu0 0.0
  %3666 = vmatpush1.msra.mxu0 0.0
  %3667 = vmatprep.subr.mxu0 0.0
  %3668 = vmatpush1.msra.mxu0 0.0
  %3669 = vmatprep.subr.mxu0 0.0
  %3670 = vmatpush1.msra.mxu0 0.0
  %3671 = vmatprep.subr.mxu0 0.0
  %3672 = vmatpush1.msra.mxu0 0.0
  %3673 = vmatprep.subr.mxu0 0.0
  %3674 = vmatpush1.msra.mxu0 0.0
  %3675 = vmatprep.subr.mxu0 0.0
  %3676 = vmatpush1.msra.mxu0 0.0
  %3677 = vmatprep.subr.mxu0 0.0
  %3678 = vmatpush1.msra.mxu0 0.0
  %3679 = vmatprep.subr.mxu0 0.0
  %3680 = vmatpush1.msra.mxu0 0.0
  %3681 = vmatprep.subr.mxu0 0.0
  %3682 = vmatpush1.msra.mxu0 0.0
  %3683 = vmatprep.subr.mxu0 0.0
  %3684 = vmatpush1.msra.mxu0 0.0
  %3685 = vmatprep.subr.mxu0 0.0
  %3686 = vmatpush1.msra.mxu0 0.0
  %3687 = vmatprep.subr.mxu0 0.0
  %3688 = vmatpush1.msra.mxu0 0.0
  %3689 = vmatprep.subr.mxu0 0.0
  %3690 = vmatpush1.msra.mxu0 0.0
  %3691 = vmatprep.subr.mxu0 0.0
  %3692 = vmatpush1.msra.mxu0 0.0
  %3693 = vmatprep.mubr.f32.mxu0 0.0
  %3694 = vmatmul.mubr.f32.gmra.mrb[0].mxu0 %v3606
  %v3695 = vpop.f32.mrb[0].mxu0
  %v3696 = vadd.f32 0.0, %v3695
  %v3697 = vpop.f32.mrb[0].mxu0
  %3698 = vmatprep.mubr.f32.mxu0 0.0
  %3699 = vmatmul.mubr.f32.gmra.mrb[0].mxu0 %v3609
  %v3700 = vpop.f32.mrb[0].mxu0
  %v3701 = vadd.f32 0.0, %v3700
  %v3702 = vpop.f32.mrb[0].mxu0
  %3703 = vmatprep.mubr.f32.mxu0 0.0
  %3704 = vmatmul.mubr.f32.gmra.mrb[0].mxu0 %v3612
  %v3705 = vpop.f32.mrb[0].mxu0
  %v3706 = vadd.f32 0.0, %v3705
  %v3707 = vpop.f32.mrb[0].mxu0
  %3708 = vmatprep.mubr.f32.mxu0 0.0
  %3709 = vmatmul.mubr.f32.gmra.mrb[0].mxu0 %v3615
  %v3710 = vpop.f32.mrb[0].mxu0
  %v3711 = vadd.f32 0.0, %v3710
  %v3712 = vpop.f32.mrb[0].mxu0
  %3713 = vmatprep.mubr.f32.mxu0 0.0
  %3714 = vmatmul.mubr.f32.gmra.mrb[0].mxu0 %v3618
  %v3715 = vpop.f32.mrb[0].mxu0
  %v3716 = vadd.f32 0.0, %v3715
  %v3717 = vpop.f32.mrb[0].mxu0
  %3718 = vmatprep.mubr.f32.mxu0 0.0
  %3719 = vmatmul.mubr.f32.gmra.mrb[0].mxu0 %v3621
  %v3720 = vpop.f32.mrb[0].mxu0
  %v3721 = vadd.f32 0.0, %v3720
  %v3722 = vpop.f32.mrb[0].mxu0
  %3723 = vmatprep.mubr.f32.mxu0 0.0
  %3724 = vmatmul.mubr.f32.gmra.mrb[0].mxu0 %v3624
  %v3725 = vpop.f32.mrb[0].mxu0
  %v3726 = vadd.f32 0.0, %v3725
  %v3727 = vpop.f32.mrb[0].mxu0
  %3728 = vmatprep.mubr.f32.mxu0 0.0
  %3729 = vmatmul.mubr.f32.gmra.mrb[0].mxu0 %v3627
  %v3730 = vpop.f32.mrb[0].mxu0
  %v3731 = vadd.f32 0.0, %v3730
  %v3732 = vpop.f32.mrb[0].mxu0
  %3733 = vdwg.mxu0
  %3742 = vrot.lane.b32.xlu0 %v3696, 16
  %v3743 = vpop.permute.xlu0 %3742
  %3744 = vrot.lane.b32.xlu0 %v3701, 16
  %v3745 = vpop.permute.xlu0 %3744
  %3746 = vrot.lane.b32.xlu0 %v3706, 16
  %v3747 = vpop.permute.xlu0 %3746
  %3748 = vrot.lane.b32.xlu0 %v3711, 16
  %v3749 = vpop.permute.xlu0 %3748
  %3750 = vrot.lane.b32.xlu0 %v3716, 16
  %v3751 = vpop.permute.xlu0 %3750
  %3752 = vrot.lane.b32.xlu0 %v3721, 16
  %v3753 = vpop.permute.xlu0 %3752
  %3754 = vrot.lane.b32.xlu0 %v3726, 16
  %v3755 = vpop.permute.xlu0 %3754
  %3756 = vrot.lane.b32.xlu0 %v3731, 16
  %v3757 = vpop.permute.xlu0 %3756
  %3766 = vst.msk [vmem:[#allocation2] sm:$0xff] %vm1599, %v3743
  %3767 = vst.msk [vmem:[#allocation2 + $0x8] sm:$0xff] %vm1599, %v3745
  %3768 = vst.msk [vmem:[#allocation2 + $0x10] sm:$0xff] %vm1599, %v3747
  %3769 = vst.msk [vmem:[#allocation2 + $0x18] sm:$0xff] %vm1599, %v3749
  %3770 = vst.msk [vmem:[#allocation2 + $0x20] sm:$0xff] %vm1599, %v3751
  %3771 = vst.msk [vmem:[#allocation2 + $0x28] sm:$0xff] %vm1599, %v3753
  %3772 = vst.msk [vmem:[#allocation2 + $0x30] sm:$0xff] %vm1599, %v3755
  %3773 = vst.msk [vmem:[#allocation2 + $0x38] sm:$0xff] %vm1599, %v3757
  %3774 = vrot.lane.b32.xlu0 %v2426, 104
  %v3775 = vpop.permute.xlu0 %3774
  %3776 = vrot.lane.b32.xlu0 %v2431, 104
  %v3777 = vpop.permute.xlu0 %3776
  %3778 = vrot.lane.b32.xlu0 %v2436, 104
  %v3779 = vpop.permute.xlu0 %3778
  %3780 = vrot.lane.b32.xlu0 %v2441, 104
  %v3781 = vpop.permute.xlu0 %3780
  %3782 = vrot.lane.b32.xlu0 %v2446, 104
  %v3783 = vpop.permute.xlu0 %3782
  %3784 = vrot.lane.b32.xlu0 %v2451, 104
  %v3785 = vpop.permute.xlu0 %3784
  %3786 = vrot.lane.b32.xlu0 %v2456, 104
  %v3787 = vpop.permute.xlu0 %3786
  %3788 = vrot.lane.b32.xlu0 %v2461, 104
  %v3789 = vpop.permute.xlu0 %3788
  %3790 = vrot.lane.b32.xlu0 %v2426, 72
  %v3791 = vpop.permute.xlu0 %3790
  %3792 = vrot.lane.b32.xlu0 %v2431, 72
  %v3793 = vpop.permute.xlu0 %3792
  %3794 = vrot.lane.b32.xlu0 %v2436, 72
  %v3795 = vpop.permute.xlu0 %3794
  %3796 = vrot.lane.b32.xlu0 %v2441, 72
  %v3797 = vpop.permute.xlu0 %3796
  %3798 = vrot.lane.b32.xlu0 %v2446, 72
  %v3799 = vpop.permute.xlu0 %3798
  %3800 = vrot.lane.b32.xlu0 %v2451, 72
  %v3801 = vpop.permute.xlu0 %3800
  %3802 = vrot.lane.b32.xlu0 %v2456, 72
  %v3803 = vpop.permute.xlu0 %3802
  %3804 = vrot.lane.b32.xlu0 %v2461, 72
  %v3805 = vpop.permute.xlu0 %3804
  %v3806 = vsel %vm318, %v3775, 0
  %v3808 = vsel %vm318, %v3777, 0
  %v3810 = vsel %vm318, %v3779, 0
  %v3812 = vsel %vm318, %v3781, 0
  %v3814 = vsel %vm318, %v3783, 0
  %v3816 = vsel %vm318, %v3785, 0
  %v3818 = vsel %vm318, %v3787, 0
  %v3820 = vsel %vm318, %v3789, 0
  %v3822 = vsel %vm318, %v3791, 0
  %v3824 = vsel %vm318, %v3793, 0
  %v3826 = vsel %vm318, %v3795, 0
  %v3828 = vsel %vm318, %v3797, 0
  %v3830 = vsel %vm318, %v3799, 0
  %v3832 = vsel %vm318, %v3801, 0
  %v3834 = vsel %vm318, %v3803, 0
  %v3836 = vsel %vm318, %v3805, 0
  %3838 = vmatprep.subr.mxu0 0.0
  %3839 = vmatpush1.xpose.msra.mxu0 %v3822
  %3840 = vmatprep.subr.mxu0 0.0
  %3841 = vmatpush1.xpose.msra.mxu0 %v3824
  %3842 = vmatprep.subr.mxu0 0.0
  %3843 = vmatpush1.xpose.msra.mxu0 %v3826
  %3844 = vmatprep.subr.mxu0 0.0
  %3845 = vmatpush1.xpose.msra.mxu0 %v3828
  %3846 = vmatprep.subr.mxu0 0.0
  %3847 = vmatpush1.xpose.msra.mxu0 %v3830
  %3848 = vmatprep.subr.mxu0 0.0
  %3849 = vmatpush1.xpose.msra.mxu0 %v3832
  %3850 = vmatprep.subr.mxu0 0.0
  %3851 = vmatpush1.xpose.msra.mxu0 %v3834
  %3852 = vmatprep.subr.mxu0 0.0
  %3853 = vmatpush1.xpose.msra.mxu0 %v3836
  %3854 = vmatprep.subr.mxu0 0.0
  %3855 = vmatpush1.xpose.msra.mxu0 0.0
  %3856 = vmatprep.subr.mxu0 0.0
  %3857 = vmatpush1.xpose.msra.mxu0 0.0
  %3858 = vmatprep.subr.mxu0 0.0
  %3859 = vmatpush1.xpose.msra.mxu0 0.0
  %3860 = vmatprep.subr.mxu0 0.0
  %3861 = vmatpush1.xpose.msra.mxu0 0.0
  %3862 = vmatprep.subr.mxu0 0.0
  %3863 = vmatpush1.xpose.msra.mxu0 0.0
  %3864 = vmatprep.subr.mxu0 0.0
  %3865 = vmatpush1.xpose.msra.mxu0 0.0
  %3866 = vmatprep.subr.mxu0 0.0
  %3867 = vmatpush1.xpose.msra.mxu0 0.0
  %3868 = vmatprep.subr.mxu0 0.0
  %3869 = vmatpush1.xpose.msra.mxu0 0.0
  %3870 = vmatprep.subr.mxu0 0.0
  %3871 = vmatpush1.xpose.msra.mxu0 0.0
  %3872 = vmatprep.subr.mxu0 0.0
  %3873 = vmatpush1.xpose.msra.mxu0 0.0
  %3874 = vmatprep.subr.mxu0 0.0
  %3875 = vmatpush1.xpose.msra.mxu0 0.0
  %3876 = vmatprep.subr.mxu0 0.0
  %3877 = vmatpush1.xpose.msra.mxu0 0.0
  %3878 = vmatprep.subr.mxu0 0.0
  %3879 = vmatpush1.xpose.msra.mxu0 0.0
  %3880 = vmatprep.subr.mxu0 0.0
  %3881 = vmatpush1.xpose.msra.mxu0 0.0
  %3882 = vmatprep.subr.mxu0 0.0
  %3883 = vmatpush1.xpose.msra.mxu0 0.0
  %3884 = vmatprep.subr.mxu0 0.0
  %3885 = vmatpush1.xpose.msra.mxu0 0.0
  %3886 = vmatprep.subr.mxu0 0.0
  %3887 = vmatpush1.xpose.msra.mxu0 0.0
  %3888 = vmatprep.subr.mxu0 0.0
  %3889 = vmatpush1.xpose.msra.mxu0 0.0
  %3890 = vmatprep.subr.mxu0 0.0
  %3891 = vmatpush1.xpose.msra.mxu0 0.0
  %3892 = vmatprep.subr.mxu0 0.0
  %3893 = vmatpush1.xpose.msra.mxu0 0.0
  %3894 = vmatprep.subr.mxu0 0.0
  %3895 = vmatpush1.xpose.msra.mxu0 0.0
  %3896 = vmatprep.subr.mxu0 0.0
  %3897 = vmatpush1.xpose.msra.mxu0 0.0
  %3898 = vmatprep.subr.mxu0 0.0
  %3899 = vmatpush1.xpose.msra.mxu0 0.0
  %3900 = vmatprep.subr.mxu0 0.0
  %3901 = vmatpush1.xpose.msra.mxu0 0.0
  %3902 = vmatprep.mubr.f32.mxu0 0.0
  %3903 = vmatmul.mubr.f32.gmra.mrb[0].mxu0 %v3806
  %v3904 = vpop.f32.mrb[0].mxu0
  %v3905 = vadd.f32 0.0, %v3904
  %v3906 = vpop.f32.mrb[0].mxu0
  %3907 = vmatprep.mubr.f32.mxu0 0.0
  %3908 = vmatmul.mubr.f32.gmra.mrb[0].mxu0 %v3808
  %v3909 = vpop.f32.mrb[0].mxu0
  %v3910 = vadd.f32 0.0, %v3909
  %v3911 = vpop.f32.mrb[0].mxu0
  %3912 = vmatprep.mubr.f32.mxu0 0.0
  %3913 = vmatmul.mubr.f32.gmra.mrb[0].mxu0 %v3810
  %v3914 = vpop.f32.mrb[0].mxu0
  %v3915 = vadd.f32 0.0, %v3914
  %v3916 = vpop.f32.mrb[0].mxu0
  %3917 = vmatprep.mubr.f32.mxu0 0.0
  %3918 = vmatmul.mubr.f32.gmra.mrb[0].mxu0 %v3812
  %v3919 = vpop.f32.mrb[0].mxu0
  %v3920 = vadd.f32 0.0, %v3919
  %v3921 = vpop.f32.mrb[0].mxu0
  %3922 = vmatprep.mubr.f32.mxu0 0.0
  %3923 = vmatmul.mubr.f32.gmra.mrb[0].mxu0 %v3814
  %v3924 = vpop.f32.mrb[0].mxu0
  %v3925 = vadd.f32 0.0, %v3924
  %v3926 = vpop.f32.mrb[0].mxu0
  %3927 = vmatprep.mubr.f32.mxu0 0.0
  %3928 = vmatmul.mubr.f32.gmra.mrb[0].mxu0 %v3816
  %v3929 = vpop.f32.mrb[0].mxu0
  %v3930 = vadd.f32 0.0, %v3929
  %v3931 = vpop.f32.mrb[0].mxu0
  %3932 = vmatprep.mubr.f32.mxu0 0.0
  %3933 = vmatmul.mubr.f32.gmra.mrb[0].mxu0 %v3818
  %v3934 = vpop.f32.mrb[0].mxu0
  %v3935 = vadd.f32 0.0, %v3934
  %v3936 = vpop.f32.mrb[0].mxu0
  %3937 = vmatprep.mubr.f32.mxu0 0.0
  %3938 = vmatmul.mubr.f32.gmra.mrb[0].mxu0 %v3820
  %v3939 = vpop.f32.mrb[0].mxu0
  %v3940 = vadd.f32 0.0, %v3939
  %v3941 = vpop.f32.mrb[0].mxu0
  %3942 = vdwg.mxu0
  %v3943 = vsel %vm456, %v3905, -inf
  %3944 = vmax.xlane.f32.xlu0 %v3943
  %v3945 = vpop.xlane.xlu0 %3944
  %v3946 = vsel %vm456, %v3910, -inf
  %3947 = vmax.xlane.f32.xlu0 %v3946
  %v3948 = vpop.xlane.xlu0 %3947
  %v3949 = vsel %vm456, %v3915, -inf
  %3950 = vmax.xlane.f32.xlu0 %v3949
  %v3951 = vpop.xlane.xlu0 %3950
  %v3952 = vsel %vm456, %v3920, -inf
  %3953 = vmax.xlane.f32.xlu0 %v3952
  %v3954 = vpop.xlane.xlu0 %3953
  %v3955 = vsel %vm456, %v3925, -inf
  %3956 = vmax.xlane.f32.xlu0 %v3955
  %v3957 = vpop.xlane.xlu0 %3956
  %v3958 = vsel %vm456, %v3930, -inf
  %3959 = vmax.xlane.f32.xlu0 %v3958
  %v3960 = vpop.xlane.xlu0 %3959
  %v3961 = vsel %vm456, %v3935, -inf
  %3962 = vmax.xlane.f32.xlu0 %v3961
  %v3963 = vpop.xlane.xlu0 %3962
  %v3964 = vsel %vm456, %v3940, -inf
  %3965 = vmax.xlane.f32.xlu0 %v3964
  %v3966 = vpop.xlane.xlu0 %3965
  %v3967 = vsub.f32 %v3905, %v3945
  %v3968 = vsub.f32 %v3910, %v3948
  %v3969 = vsub.f32 %v3915, %v3951
  %v3970 = vsub.f32 %v3920, %v3954
  %v3971 = vsub.f32 %v3925, %v3957
  %v3972 = vsub.f32 %v3930, %v3960
  %v3973 = vsub.f32 %v3935, %v3963
  %v3974 = vsub.f32 %v3940, %v3966
  %v3975 = vmul.f32 %v3967, 1.442695
  %v3976 = vpow.pop %v3975
  %v3977 = vmul.f32 %v3968, 1.442695
  %v3978 = vpow.pop %v3977
  %v3979 = vmul.f32 %v3969, 1.442695
  %v3980 = vpow.pop %v3979
  %v3981 = vmul.f32 %v3970, 1.442695
  %v3982 = vpow.pop %v3981
  %v3983 = vmul.f32 %v3971, 1.442695
  %v3984 = vpow.pop %v3983
  %v3985 = vmul.f32 %v3972, 1.442695
  %v3986 = vpow.pop %v3985
  %v3987 = vmul.f32 %v3973, 1.442695
  %v3988 = vpow.pop %v3987
  %v3989 = vmul.f32 %v3974, 1.442695
  %v3990 = vpow.pop %v3989
  %v3991 = vsel %vm456, %v3976, 0.0
  %3992 = vadd.xlane.f32.xlu0 %v3991
  %v3993 = vpop.xlane.xlu0 %3992
  %v3994 = vsel %vm456, %v3978, 0.0
  %3995 = vadd.xlane.f32.xlu0 %v3994
  %v3996 = vpop.xlane.xlu0 %3995
  %v3997 = vsel %vm456, %v3980, 0.0
  %3998 = vadd.xlane.f32.xlu0 %v3997
  %v3999 = vpop.xlane.xlu0 %3998
  %v4000 = vsel %vm456, %v3982, 0.0
  %4001 = vadd.xlane.f32.xlu0 %v4000
  %v4002 = vpop.xlane.xlu0 %4001
  %v4003 = vsel %vm456, %v3984, 0.0
  %4004 = vadd.xlane.f32.xlu0 %v4003
  %v4005 = vpop.xlane.xlu0 %4004
  %v4006 = vsel %vm456, %v3986, 0.0
  %4007 = vadd.xlane.f32.xlu0 %v4006
  %v4008 = vpop.xlane.xlu0 %4007
  %v4009 = vsel %vm456, %v3988, 0.0
  %4010 = vadd.xlane.f32.xlu0 %v4009
  %v4011 = vpop.xlane.xlu0 %4010
  %v4012 = vsel %vm456, %v3990, 0.0
  %4013 = vadd.xlane.f32.xlu0 %v4012
  %v4014 = vpop.xlane.xlu0 %4013
  %v4015 = vrcp.pop %v3993
  %v4016 = vrcp.pop %v3996
  %v4017 = vrcp.pop %v3999
  %v4018 = vrcp.pop %v4002
  %v4019 = vrcp.pop %v4005
  %v4020 = vrcp.pop %v4008
  %v4021 = vrcp.pop %v4011
  %v4022 = vrcp.pop %v4014
  %v4023 = vmul.f32 %v3976, %v4015
  %v4024 = vmul.f32 %v3978, %v4016
  %v4025 = vmul.f32 %v3980, %v4017
  %v4026 = vmul.f32 %v3982, %v4018
  %v4027 = vmul.f32 %v3984, %v4019
  %v4028 = vmul.f32 %v3986, %v4020
  %v4029 = vmul.f32 %v3988, %v4021
  %v4030 = vmul.f32 %v3990, %v4022
  %4031 = vrot.lane.b32.xlu0 %v2426, 40
  %v4032 = vpop.permute.xlu0 %4031
  %4033 = vrot.lane.b32.xlu0 %v2431, 40
  %v4034 = vpop.permute.xlu0 %4033
  %4035 = vrot.lane.b32.xlu0 %v2436, 40
  %v4036 = vpop.permute.xlu0 %4035
  %4037 = vrot.lane.b32.xlu0 %v2441, 40
  %v4038 = vpop.permute.xlu0 %4037
  %4039 = vrot.lane.b32.xlu0 %v2446, 40
  %v4040 = vpop.permute.xlu0 %4039
  %4041 = vrot.lane.b32.xlu0 %v2451, 40
  %v4042 = vpop.permute.xlu0 %4041
  %4043 = vrot.lane.b32.xlu0 %v2456, 40
  %v4044 = vpop.permute.xlu0 %4043
  %4045 = vrot.lane.b32.xlu0 %v2461, 40
  %v4046 = vpop.permute.xlu0 %4045
  %v4056 = vsel %vm456, %v4023, 0
  %v4059 = vsel %vm456, %v4024, 0
  %v4062 = vsel %vm456, %v4025, 0
  %v4065 = vsel %vm456, %v4026, 0
  %v4068 = vsel %vm456, %v4027, 0
  %v4071 = vsel %vm456, %v4028, 0
  %v4074 = vsel %vm456, %v4029, 0
  %v4077 = vsel %vm456, %v4030, 0
  %4079 = vmatprep.subr.mxu0 0.0
  %4080 = vmatpush1.msra.mxu0 %v4032
  %4081 = vmatprep.subr.mxu0 0.0
  %4082 = vmatpush1.msra.mxu0 %v4034
  %4083 = vmatprep.subr.mxu0 0.0
  %4084 = vmatpush1.msra.mxu0 %v4036
  %4085 = vmatprep.subr.mxu0 0.0
  %4086 = vmatpush1.msra.mxu0 %v4038
  %4087 = vmatprep.subr.mxu0 0.0
  %4088 = vmatpush1.msra.mxu0 %v4040
  %4089 = vmatprep.subr.mxu0 0.0
  %4090 = vmatpush1.msra.mxu0 %v4042
  %4091 = vmatprep.subr.mxu0 0.0
  %4092 = vmatpush1.msra.mxu0 %v4044
  %4093 = vmatprep.subr.mxu0 0.0
  %4094 = vmatpush1.msra.mxu0 %v4046
  %4095 = vmatprep.subr.mxu0 0.0
  %4096 = vmatpush1.msra.mxu0 0.0
  %4097 = vmatprep.subr.mxu0 0.0
  %4098 = vmatpush1.msra.mxu0 0.0
  %4099 = vmatprep.subr.mxu0 0.0
  %4100 = vmatpush1.msra.mxu0 0.0
  %4101 = vmatprep.subr.mxu0 0.0
  %4102 = vmatpush1.msra.mxu0 0.0
  %4103 = vmatprep.subr.mxu0 0.0
  %4104 = vmatpush1.msra.mxu0 0.0
  %4105 = vmatprep.subr.mxu0 0.0
  %4106 = vmatpush1.msra.mxu0 0.0
  %4107 = vmatprep.subr.mxu0 0.0
  %4108 = vmatpush1.msra.mxu0 0.0
  %4109 = vmatprep.subr.mxu0 0.0
  %4110 = vmatpush1.msra.mxu0 0.0
  %4111 = vmatprep.subr.mxu0 0.0
  %4112 = vmatpush1.msra.mxu0 0.0
  %4113 = vmatprep.subr.mxu0 0.0
  %4114 = vmatpush1.msra.mxu0 0.0
  %4115 = vmatprep.subr.mxu0 0.0
  %4116 = vmatpush1.msra.mxu0 0.0
  %4117 = vmatprep.subr.mxu0 0.0
  %4118 = vmatpush1.msra.mxu0 0.0
  %4119 = vmatprep.subr.mxu0 0.0
  %4120 = vmatpush1.msra.mxu0 0.0
  %4121 = vmatprep.subr.mxu0 0.0
  %4122 = vmatpush1.msra.mxu0 0.0
  %4123 = vmatprep.subr.mxu0 0.0
  %4124 = vmatpush1.msra.mxu0 0.0
  %4125 = vmatprep.subr.mxu0 0.0
  %4126 = vmatpush1.msra.mxu0 0.0
  %4127 = vmatprep.subr.mxu0 0.0
  %4128 = vmatpush1.msra.mxu0 0.0
  %4129 = vmatprep.subr.mxu0 0.0
  %4130 = vmatpush1.msra.mxu0 0.0
  %4131 = vmatprep.subr.mxu0 0.0
  %4132 = vmatpush1.msra.mxu0 0.0
  %4133 = vmatprep.subr.mxu0 0.0
  %4134 = vmatpush1.msra.mxu0 0.0
  %4135 = vmatprep.subr.mxu0 0.0
  %4136 = vmatpush1.msra.mxu0 0.0
  %4137 = vmatprep.subr.mxu0 0.0
  %4138 = vmatpush1.msra.mxu0 0.0
  %4139 = vmatprep.subr.mxu0 0.0
  %4140 = vmatpush1.msra.mxu0 0.0
  %4141 = vmatprep.subr.mxu0 0.0
  %4142 = vmatpush1.msra.mxu0 0.0
  %4143 = vmatprep.mubr.f32.mxu0 0.0
  %4144 = vmatmul.mubr.f32.gmra.mrb[0].mxu0 %v4056
  %v4145 = vpop.f32.mrb[0].mxu0
  %v4146 = vadd.f32 0.0, %v4145
  %v4147 = vpop.f32.mrb[0].mxu0
  %4148 = vmatprep.mubr.f32.mxu0 0.0
  %4149 = vmatmul.mubr.f32.gmra.mrb[0].mxu0 %v4059
  %v4150 = vpop.f32.mrb[0].mxu0
  %v4151 = vadd.f32 0.0, %v4150
  %v4152 = vpop.f32.mrb[0].mxu0
  %4153 = vmatprep.mubr.f32.mxu0 0.0
  %4154 = vmatmul.mubr.f32.gmra.mrb[0].mxu0 %v4062
  %v4155 = vpop.f32.mrb[0].mxu0
  %v4156 = vadd.f32 0.0, %v4155
  %v4157 = vpop.f32.mrb[0].mxu0
  %4158 = vmatprep.mubr.f32.mxu0 0.0
  %4159 = vmatmul.mubr.f32.gmra.mrb[0].mxu0 %v4065
  %v4160 = vpop.f32.mrb[0].mxu0
  %v4161 = vadd.f32 0.0, %v4160
  %v4162 = vpop.f32.mrb[0].mxu0
  %4163 = vmatprep.mubr.f32.mxu0 0.0
  %4164 = vmatmul.mubr.f32.gmra.mrb[0].mxu0 %v4068
  %v4165 = vpop.f32.mrb[0].mxu0
  %v4166 = vadd.f32 0.0, %v4165
  %v4167 = vpop.f32.mrb[0].mxu0
  %4168 = vmatprep.mubr.f32.mxu0 0.0
  %4169 = vmatmul.mubr.f32.gmra.mrb[0].mxu0 %v4071
  %v4170 = vpop.f32.mrb[0].mxu0
  %v4171 = vadd.f32 0.0, %v4170
  %v4172 = vpop.f32.mrb[0].mxu0
  %4173 = vmatprep.mubr.f32.mxu0 0.0
  %4174 = vmatmul.mubr.f32.gmra.mrb[0].mxu0 %v4074
  %v4175 = vpop.f32.mrb[0].mxu0
  %v4176 = vadd.f32 0.0, %v4175
  %v4177 = vpop.f32.mrb[0].mxu0
  %4178 = vmatprep.mubr.f32.mxu0 0.0
  %4179 = vmatmul.mubr.f32.gmra.mrb[0].mxu0 %v4077
  %v4180 = vpop.f32.mrb[0].mxu0
  %v4181 = vadd.f32 0.0, %v4180
  %v4182 = vpop.f32.mrb[0].mxu0
  %4183 = vdwg.mxu0
  %4192 = vrot.lane.b32.xlu0 %v4146, 24
  %v4193 = vpop.permute.xlu0 %4192
  %4194 = vrot.lane.b32.xlu0 %v4151, 24
  %v4195 = vpop.permute.xlu0 %4194
  %4196 = vrot.lane.b32.xlu0 %v4156, 24
  %v4197 = vpop.permute.xlu0 %4196
  %4198 = vrot.lane.b32.xlu0 %v4161, 24
  %v4199 = vpop.permute.xlu0 %4198
  %4200 = vrot.lane.b32.xlu0 %v4166, 24
  %v4201 = vpop.permute.xlu0 %4200
  %4202 = vrot.lane.b32.xlu0 %v4171, 24
  %v4203 = vpop.permute.xlu0 %4202
  %4204 = vrot.lane.b32.xlu0 %v4176, 24
  %v4205 = vpop.permute.xlu0 %4204
  %4206 = vrot.lane.b32.xlu0 %v4181, 24
  %v4207 = vpop.permute.xlu0 %4206
  %4216 = vst.msk [vmem:[#allocation2] sm:$0xff] %vm2050, %v4193
  %4217 = vst.msk [vmem:[#allocation2 + $0x8] sm:$0xff] %vm2050, %v4195
  %4218 = vst.msk [vmem:[#allocation2 + $0x10] sm:$0xff] %vm2050, %v4197
  %4219 = vst.msk [vmem:[#allocation2 + $0x18] sm:$0xff] %vm2050, %v4199
  %4220 = vst.msk [vmem:[#allocation2 + $0x20] sm:$0xff] %vm2050, %v4201
  %4221 = vst.msk [vmem:[#allocation2 + $0x28] sm:$0xff] %vm2050, %v4203
  %4222 = vst.msk [vmem:[#allocation2 + $0x30] sm:$0xff] %vm2050, %v4205
  %4223 = vst.msk [vmem:[#allocation2 + $0x38] sm:$0xff] %vm2050, %v4207
  %v4224 = vld [vmem:[#allocation2] sm:$0xff]
  %v4225 = vld [vmem:[#allocation2 + $0x8] sm:$0xff]
  %v4226 = vld [vmem:[#allocation2 + $0x10] sm:$0xff]
  %v4227 = vld [vmem:[#allocation2 + $0x18] sm:$0xff]
  %v4228 = vld [vmem:[#allocation2 + $0x20] sm:$0xff]
  %v4229 = vld [vmem:[#allocation2 + $0x28] sm:$0xff]
  %v4230 = vld [vmem:[#allocation2 + $0x30] sm:$0xff]
  %v4231 = vld [vmem:[#allocation2 + $0x38] sm:$0xff]
  %v4233 = vsel %vm46, %v4224, 0
  %v4236 = vsel %vm46, %v4225, 0
  %v4239 = vsel %vm46, %v4226, 0
  %v4242 = vsel %vm46, %v4227, 0
  %v4245 = vsel %vm46, %v4228, 0
  %v4248 = vsel %vm46, %v4229, 0
  %v4251 = vsel %vm46, %v4230, 0
  %v4254 = vsel %vm46, %v4231, 0
  %4256 = vmatprep.subr.mxu0 0.0
  %4257 = vmatpush1.msra.mxu0 %v33
  %4258 = vmatprep.subr.mxu0 0.0
  %4259 = vmatpush1.msra.mxu0 %v34
  %4260 = vmatprep.subr.mxu0 0.0
  %4261 = vmatpush1.msra.mxu0 %v35
  %4262 = vmatprep.subr.mxu0 0.0
  %4263 = vmatpush1.msra.mxu0 %v36
  %4264 = vmatprep.subr.mxu0 0.0
  %4265 = vmatpush1.msra.mxu0 0.0
  %4266 = vmatprep.subr.mxu0 0.0
  %4267 = vmatpush1.msra.mxu0 0.0
  %4268 = vmatprep.subr.mxu0 0.0
  %4269 = vmatpush1.msra.mxu0 0.0
  %4270 = vmatprep.subr.mxu0 0.0
  %4271 = vmatpush1.msra.mxu0 0.0
  %4272 = vmatprep.subr.mxu0 0.0
  %4273 = vmatpush1.msra.mxu0 0.0
  %4274 = vmatprep.subr.mxu0 0.0
  %4275 = vmatpush1.msra.mxu0 0.0
  %4276 = vmatprep.subr.mxu0 0.0
  %4277 = vmatpush1.msra.mxu0 0.0
  %4278 = vmatprep.subr.mxu0 0.0
  %4279 = vmatpush1.msra.mxu0 0.0
  %4280 = vmatprep.subr.mxu0 0.0
  %4281 = vmatpush1.msra.mxu0 0.0
  %4282 = vmatprep.subr.mxu0 0.0
  %4283 = vmatpush1.msra.mxu0 0.0
  %4284 = vmatprep.subr.mxu0 0.0
  %4285 = vmatpush1.msra.mxu0 0.0
  %4286 = vmatprep.subr.mxu0 0.0
  %4287 = vmatpush1.msra.mxu0 0.0
  %4288 = vmatprep.subr.mxu0 0.0
  %4289 = vmatpush1.msra.mxu0 0.0
  %4290 = vmatprep.subr.mxu0 0.0
  %4291 = vmatpush1.msra.mxu0 0.0
  %4292 = vmatprep.subr.mxu0 0.0
  %4293 = vmatpush1.msra.mxu0 0.0
  %4294 = vmatprep.subr.mxu0 0.0
  %4295 = vmatpush1.msra.mxu0 0.0
  %4296 = vmatprep.subr.mxu0 0.0
  %4297 = vmatpush1.msra.mxu0 0.0
  %4298 = vmatprep.subr.mxu0 0.0
  %4299 = vmatpush1.msra.mxu0 0.0
  %4300 = vmatprep.subr.mxu0 0.0
  %4301 = vmatpush1.msra.mxu0 0.0
  %4302 = vmatprep.subr.mxu0 0.0
  %4303 = vmatpush1.msra.mxu0 0.0
  %4304 = vmatprep.subr.mxu0 0.0
  %4305 = vmatpush1.msra.mxu0 0.0
  %4306 = vmatprep.subr.mxu0 0.0
  %4307 = vmatpush1.msra.mxu0 0.0
  %4308 = vmatprep.subr.mxu0 0.0
  %4309 = vmatpush1.msra.mxu0 0.0
  %4310 = vmatprep.subr.mxu0 0.0
  %4311 = vmatpush1.msra.mxu0 0.0
  %4312 = vmatprep.subr.mxu0 0.0
  %4313 = vmatpush1.msra.mxu0 0.0
  %4314 = vmatprep.subr.mxu0 0.0
  %4315 = vmatpush1.msra.mxu0 0.0
  %4316 = vmatprep.subr.mxu0 0.0
  %4317 = vmatpush1.msra.mxu0 0.0
  %4318 = vmatprep.subr.mxu0 0.0
  %4319 = vmatpush1.msra.mxu0 0.0
  %4320 = vmatprep.mubr.f32.mxu0 0.0
  %4321 = vmatmul.mubr.f32.gmra.mrb[0].mxu0 %v4233
  %v4322 = vpop.f32.mrb[0].mxu0
  %v4323 = vadd.f32 0.0, %v4322
  %v4324 = vpop.f32.mrb[0].mxu0
  %4325 = vmatprep.mubr.f32.mxu0 0.0
  %4326 = vmatmul.mubr.f32.gmra.mrb[0].mxu0 %v4236
  %v4327 = vpop.f32.mrb[0].mxu0
  %v4328 = vadd.f32 0.0, %v4327
  %v4329 = vpop.f32.mrb[0].mxu0
  %4330 = vmatprep.mubr.f32.mxu0 0.0
  %4331 = vmatmul.mubr.f32.gmra.mrb[0].mxu0 %v4239
  %v4332 = vpop.f32.mrb[0].mxu0
  %v4333 = vadd.f32 0.0, %v4332
  %v4334 = vpop.f32.mrb[0].mxu0
  %4335 = vmatprep.mubr.f32.mxu0 0.0
  %4336 = vmatmul.mubr.f32.gmra.mrb[0].mxu0 %v4242
  %v4337 = vpop.f32.mrb[0].mxu0
  %v4338 = vadd.f32 0.0, %v4337
  %v4339 = vpop.f32.mrb[0].mxu0
  %4340 = vmatprep.mubr.f32.mxu0 0.0
  %4341 = vmatmul.mubr.f32.gmra.mrb[0].mxu0 %v4245
  %v4342 = vpop.f32.mrb[0].mxu0
  %v4343 = vadd.f32 0.0, %v4342
  %v4344 = vpop.f32.mrb[0].mxu0
  %4345 = vmatprep.mubr.f32.mxu0 0.0
  %4346 = vmatmul.mubr.f32.gmra.mrb[0].mxu0 %v4248
  %v4347 = vpop.f32.mrb[0].mxu0
  %v4348 = vadd.f32 0.0, %v4347
  %v4349 = vpop.f32.mrb[0].mxu0
  %4350 = vmatprep.mubr.f32.mxu0 0.0
  %4351 = vmatmul.mubr.f32.gmra.mrb[0].mxu0 %v4251
  %v4352 = vpop.f32.mrb[0].mxu0
  %v4353 = vadd.f32 0.0, %v4352
  %v4354 = vpop.f32.mrb[0].mxu0
  %4355 = vmatprep.mubr.f32.mxu0 0.0
  %4356 = vmatmul.mubr.f32.gmra.mrb[0].mxu0 %v4254
  %v4357 = vpop.f32.mrb[0].mxu0
  %v4358 = vadd.f32 0.0, %v4357
  %v4359 = vpop.f32.mrb[0].mxu0
  %4360 = vdwg.mxu0
  %v4361 = vadd.f32 %v2227, %v4323
  %v4362 = vadd.f32 %v2228, %v4328
  %v4363 = vadd.f32 %v2229, %v4333
  %v4364 = vadd.f32 %v2230, %v4338
  %v4365 = vadd.f32 %v2231, %v4343
  %v4366 = vadd.f32 %v2232, %v4348
  %v4367 = vadd.f32 %v2233, %v4353
  %v4368 = vadd.f32 %v2234, %v4358
  %v4369 = vadd.f32 %v4361, %v2208
  %v4370 = vadd.f32 %v4362, %v2208
  %v4371 = vadd.f32 %v4363, %v2208
  %v4372 = vadd.f32 %v4364, %v2208
  %v4373 = vadd.f32 %v4365, %v2208
  %v4374 = vadd.f32 %v4366, %v2208
  %v4375 = vadd.f32 %v4367, %v2208
  %v4376 = vadd.f32 %v4368, %v2208
  %s4377 = scalar_lea.vmem %s7, 64
  %4378 = vst.msk [vmem:[%s4377] sm:$0xff] %vm46, %v4369
  %4379 = vst.msk [vmem:[%s4377 + $0x8] sm:$0xff] %vm46, %v4370
  %4380 = vst.msk [vmem:[%s4377 + $0x10] sm:$0xff] %vm46, %v4371
  %4381 = vst.msk [vmem:[%s4377 + $0x18] sm:$0xff] %vm46, %v4372
  %4382 = vst.msk [vmem:[%s4377 + $0x20] sm:$0xff] %vm46, %v4373
  %4383 = vst.msk [vmem:[%s4377 + $0x28] sm:$0xff] %vm46, %v4374
  %4384 = vst.msk [vmem:[%s4377 + $0x30] sm:$0xff] %vm46, %v4375
  %4385 = vst.msk [vmem:[%s4377 + $0x38] sm:$0xff] %vm46, %v4376
  // Predicated region
  $region30: #{tpu_custom_call.1} parent=0 // pred_check
    _
  $region31: #{tpu_custom_call.1} parent=0 // pred_check_branch
    %4387 = sbr.rel (0) target = $region33
  $region32: #{tpu_custom_call.1} parent=0 // pred_region
    _
  $region33: #{tpu_custom_call.1} parent=0 // pred_fallthru
    _
  // Predicated region
  $region34: #{tpu_custom_call.1} parent=0 // pred_check
    _
  $region35: #{tpu_custom_call.1} parent=0 // pred_check_branch
    %4389 = sbr.rel (0) target = $region37
  $region36: #{tpu_custom_call.1} parent=0 // pred_region
    _
  $region37: #{tpu_custom_call.1} parent=0 // pred_fallthru
    _

</llo_original>
